<compile_context>
chip_gen: v6e
topology: v6e:2x2x1
jax: 0.10.0
libtpu: 0.0.40
codegen_flags: <defaults>
</compile_context>

<pallas_src>
import functools
import math

import jax
import jax.numpy as jnp
from jax import lax
from jax.experimental import pallas as pl
from jax.experimental.pallas import tpu as pltpu

BN_EPS = 1e-5    # PyTorch BatchNorm2d default
LOG_EPS = 1e-6   # braindecode safe_log default


def _create_base_kernel(x_ref, v_ref, bcomb_ref, scale_ref, shift_ref, pool_ref, o_ref):
    # x_ref:     (1, T, C)      one batch element, time-major, channels in lanes
    # v_ref:     (K, C, S)      fused conv_time+conv_spat weights
    # bcomb_ref: (1, S)         conv_time bias pushed through conv_spat
    # scale_ref: (1, S)         gamma / sqrt(running_var + eps)
    # shift_ref: (1, S)         beta - running_mean * scale
    # pool_ref:  (P, Tp)        average-pooling matrix
    # o_ref:     (1, P, S)
    K, _, S = v_ref.shape
    P, Tp = pool_ref.shape

    # Fused conv_time + conv_spat: K accumulated MXU dots over shifted time windows.
    acc = jnp.zeros((Tp, S), jnp.float32)
    for k in range(K):                                   # K is small & static -> unrolled
        xk = x_ref[0, k:k + Tp, :]                       # (Tp, C)
        acc = acc + jnp.dot(xk, v_ref[k], preferred_element_type=jnp.float32)

    y = acc + bcomb_ref[...]                             # conv bias (folded)
    y = y * scale_ref[...] + shift_ref[...]              # eval-mode BatchNorm (folded)
    y = y * y                                            # conv_nonlin = square

    # AvgPool over time as one MXU matmul: (P, Tp) @ (Tp, S).
    pooled = jnp.dot(pool_ref[...], y, preferred_element_type=jnp.float32)

    out = jnp.log(jnp.maximum(pooled, LOG_EPS))          # pool_nonlin = safe_log
    # TODO(synk): nn.Dropout(p=0.75) is identity at inference; training-mode dropout
    #             would need pltpu.prng_seed/prng_random_bits and a scale by 1/(1-p).
    o_ref[0] = out.astype(o_ref.dtype)


def create_base_forward(data, wt, bt, ws, bn_gamma, bn_beta, bn_mean, bn_var,
                        *, pool_len, pool_stride):
    """data: (B, in_chans, T, 1); wt: (F_t, 1, K, 1); bt: (F_t,);
    ws: (F_s, F_t, 1, in_chans); bn_*: (F_s,). Returns (B, F_s, P, 1)."""
    B, C, T, W = data.shape
    assert W == 1
    F_t, _, K, _ = wt.shape
    S = ws.shape[0]
    assert ws.shape == (S, F_t, 1, C)
    Tp = T - K + 1
    P = (Tp - pool_len) // pool_stride + 1
    assert P >= 1

    # _transpose_time_to_spat + channel squeeze: (B, C, T, 1) -> (B, T, C). Layout glue.
    x = jnp.transpose(data[..., 0], (0, 2, 1))

    # Fold the two convolutions into combined weights (done once, in f32):
    #   V[k, c, s] = sum_f Wt[f, k] * Ws[s, f, c]
    #   b_comb[s]  = sum_{f, c} bt[f] * Ws[s, f, c]
    wt2 = wt[:, 0, :, 0]                                  # (F_t, K)
    ws2 = ws[:, :, 0, :]                                  # (S, F_t, C)
    V = jnp.einsum("fk,sfc->kcs", wt2, ws2)               # (K, C, S)
    b_comb = jnp.einsum("f,sfc->s", bt, ws2)[None, :]     # (1, S)

    # Fold eval-mode BatchNorm into per-channel scale/shift.
    scale = (bn_gamma / jnp.sqrt(bn_var + BN_EPS))[None, :]          # (1, S)
    shift = (bn_beta - bn_mean * scale[0])[None, :]                  # (1, S)

    # AvgPool2d((pool_len,1), stride=(pool_stride,1)) as an averaging matrix.
    starts = jnp.arange(P, dtype=jnp.int32)[:, None] * pool_stride
    cols = jnp.arange(Tp, dtype=jnp.int32)[None, :]
    pool_mat = (((cols >= starts) & (cols < starts + pool_len))
                .astype(jnp.float32) / float(pool_len))             # (P, Tp)

    flops = 2 * B * Tp * K * C * S + 2 * B * P * Tp * S
    bytes_accessed = 4 * (B * T * C + K * C * S + 3 * S + P * Tp + B * P * S)

    out = pl.pallas_call(
        _create_base_kernel,
        out_shape=jax.ShapeDtypeStruct((B, P, S), data.dtype),
        grid_spec=pltpu.PrefetchScalarGridSpec(
            num_scalar_prefetch=0,
            grid=(B,),
            in_specs=[
                pl.BlockSpec((1, T, C), lambda b: (b, 0, 0)),
                pl.BlockSpec((K, C, S), lambda b: (0, 0, 0)),
                pl.BlockSpec((1, S), lambda b: (0, 0)),
                pl.BlockSpec((1, S), lambda b: (0, 0)),
                pl.BlockSpec((1, S), lambda b: (0, 0)),
                pl.BlockSpec((P, Tp), lambda b: (0, 0)),
            ],
            out_specs=pl.BlockSpec((1, P, S), lambda b: (b, 0, 0)),
        ),
        compiler_params=pltpu.CompilerParams(
            dimension_semantics=("parallel",)),
        cost_estimate=pl.CostEstimate(
            flops=flops, transcendentals=B * P * S, bytes_accessed=bytes_accessed),
    )(x, V, b_comb, scale, shift, pool_mat)

    # (B, P, S) -> (B, S, P, 1): pure layout glue to match the PyTorch output layout.
    return jnp.transpose(out, (0, 2, 1))[..., None]


def _reference(data, wt, bt, ws, bn_gamma, bn_beta, bn_mean, bn_var,
               pool_len, pool_stride):
    """Faithful (unfused) JAX reference of CreateBase.forward (eval-mode)."""
    x = jnp.transpose(data, (0, 3, 2, 1))                             # (B, 1, T, C)
    y = lax.conv_general_dilated(x, wt, (1, 1), "VALID",
                                 dimension_numbers=("NCHW", "OIHW", "NCHW"))
    y = y + bt[None, :, None, None]                                   # (B, F_t, T', C)
    z = lax.conv_general_dilated(y, ws, (1, 1), "VALID",
                                 dimension_numbers=("NCHW", "OIHW", "NCHW"))
    sc = (bn_gamma / jnp.sqrt(bn_var + BN_EPS))[None, :, None, None]
    z = (z - bn_mean[None, :, None, None]) * sc + bn_beta[None, :, None, None]
    z = z * z
    z = lax.reduce_window(z, 0.0, lax.add, (1, 1, pool_len, 1),
                          (1, 1, pool_stride, 1), "VALID") / float(pool_len)
    return jnp.log(jnp.maximum(z, LOG_EPS))                           # (B, F_s, P, 1)


if __name__ == "__main__":
    # Small shapes consistent with the module defaults.
    B, in_chans, T = 2, 4, 150
    n_filters_time, n_filters_spat = 10, 40
    filter_time_length, pool_time_length, pool_time_stride = 25, 75, 15
    P = (T - filter_time_length + 1 - pool_time_length) // pool_time_stride + 1   # = 4

    key = jax.random.PRNGKey(0)
    kd, kwt, kbt, kws, kg, kb, km, kv = jax.random.split(key, 8)

    data = jax.random.normal(kd, (B, in_chans, T, 1), dtype=jnp.float32)

    # Xavier-uniform-like conv weights (gain=1). conv_time bias is 0 at init in the
    # module; use a small nonzero bias here to exercise the folded-bias path.
    bnd_t = math.sqrt(6.0 / (filter_time_length + n_filters_time * filter_time_length))
    wt = jax.random.uniform(kwt, (n_filters_time, 1, filter_time_length, 1),
                            dtype=jnp.float32, minval=-bnd_t, maxval=bnd_t)
    bt = 0.1 * jax.random.normal(kbt, (n_filters_time,), dtype=jnp.float32)
    bnd_s = math.sqrt(6.0 / (n_filters_time * in_chans + n_filters_spat * in_chans))
    ws = jax.random.uniform(kws, (n_filters_spat, n_filters_time, 1, in_chans),
                            dtype=jnp.float32, minval=-bnd_s, maxval=bnd_s)

    # Eval-mode BatchNorm parameters / running stats (arbitrary, as after training).
    bn_gamma = 1.0 + 0.1 * jax.random.normal(kg, (n_filters_spat,), dtype=jnp.float32)
    bn_beta = 0.1 * jax.random.normal(kb, (n_filters_spat,), dtype=jnp.float32)
    bn_mean = 0.1 * jax.random.normal(km, (n_filters_spat,), dtype=jnp.float32)
    bn_var = jax.random.uniform(kv, (n_filters_spat,), dtype=jnp.float32,
                                minval=0.5, maxval=1.5)

    fwd = jax.jit(create_base_forward, static_argnames=("pool_len", "pool_stride"))
    out = jax.block_until_ready(
        fwd(data, wt, bt, ws, bn_gamma, bn_beta, bn_mean, bn_var,
            pool_len=pool_time_length, pool_stride=pool_time_stride))
    ref = jax.block_until_ready(
        _reference(data, wt, bt, ws, bn_gamma, bn_beta, bn_mean, bn_var,
                   pool_time_length, pool_time_stride))

    assert out.shape == (B, n_filters_spat, P, 1), out.shape
    assert ref.shape == out.shape
    assert jnp.allclose(out, ref, atol=1e-4, rtol=1e-4)
    print("KERNEL_OK")
</pallas_src>

<mosaic_0001>
module attributes {stable_mosaic.version = 11 : i64} {
  func.func @_create_base_kernel(%arg0: i32, %arg1: memref<1x150x4xf32, #tpu.memory_space<vmem>>, %arg2: memref<25x4x40xf32, #tpu.memory_space<vmem>>, %arg3: memref<1x40xf32, #tpu.memory_space<vmem>>, %arg4: memref<1x40xf32, #tpu.memory_space<vmem>>, %arg5: memref<1x40xf32, #tpu.memory_space<vmem>>, %arg6: memref<4x126xf32, #tpu.memory_space<vmem>>, %arg7: memref<1x4x40xf32, #tpu.memory_space<vmem>>) attributes {dimension_semantics = [#tpu.dimension_semantics<parallel>], iteration_bounds = array<i64: 2>, scalar_prefetch = 0 : i64, scratch_operands = 0 : i64, tpu.core_type = #tpu.core_type<tc>, window_params = [{transform_indices = @transform_0, window_bounds = array<i64: 1, 150, 4>}, {pipeline_mode = #tpu.pipeline_mode<synchronous>, transform_indices = @transform_1, window_bounds = array<i64: 25, 4, 40>}, {pipeline_mode = #tpu.pipeline_mode<synchronous>, transform_indices = @transform_2, window_bounds = array<i64: 1, 40>}, {pipeline_mode = #tpu.pipeline_mode<synchronous>, transform_indices = @transform_3, window_bounds = array<i64: 1, 40>}, {pipeline_mode = #tpu.pipeline_mode<synchronous>, transform_indices = @transform_4, window_bounds = array<i64: 1, 40>}, {pipeline_mode = #tpu.pipeline_mode<synchronous>, transform_indices = @transform_5, window_bounds = array<i64: 4, 126>}, {transform_indices = @transform_6, window_bounds = array<i64: 1, 4, 40>}]} {
    %cst = arith.constant 0.000000e+00 : f32
    %0 = vector.broadcast %cst : f32 to vector<126x40xf32>
    %c0 = arith.constant 0 : index
    %c0_0 = arith.constant 0 : index
    %c0_1 = arith.constant 0 : index
    %1 = vector.load %arg1[%c0, %c0_0, %c0_1] : memref<1x150x4xf32, #tpu.memory_space<vmem>>, vector<1x126x4xf32>
    %2 = vector.shape_cast %1 : vector<1x126x4xf32> to vector<126x4xf32>
    %c0_2 = arith.constant 0 : index
    %c0_3 = arith.constant 0 : index
    %c0_4 = arith.constant 0 : index
    %3 = vector.load %arg2[%c0_2, %c0_3, %c0_4] : memref<25x4x40xf32, #tpu.memory_space<vmem>>, vector<1x4x40xf32>
    %4 = vector.shape_cast %3 : vector<1x4x40xf32> to vector<4x40xf32>
    %cst_5 = arith.constant dense<0.000000e+00> : vector<126x40xf32>
    %5 = tpu.matmul %2, %4, %cst_5 {dimension_numbers = #tpu.dot_dimension_numbers<[1], [0], [0], [1], [0, 0, 1, 1], [], []>} : vector<126x4xf32>, vector<4x40xf32>, vector<126x40xf32> -> vector<126x40xf32>
    %6 = arith.addf %0, %5 : vector<126x40xf32>
    %c0_6 = arith.constant 0 : index
    %c1 = arith.constant 1 : index
    %c0_7 = arith.constant 0 : index
    %7 = vector.load %arg1[%c0_6, %c1, %c0_7] : memref<1x150x4xf32, #tpu.memory_space<vmem>>, vector<1x126x4xf32>
    %8 = vector.shape_cast %7 : vector<1x126x4xf32> to vector<126x4xf32>
    %c1_8 = arith.constant 1 : index
    %c0_9 = arith.constant 0 : index
    %c0_10 = arith.constant 0 : index
    %9 = vector.load %arg2[%c1_8, %c0_9, %c0_10] : memref<25x4x40xf32, #tpu.memory_space<vmem>>, vector<1x4x40xf32>
    %10 = vector.shape_cast %9 : vector<1x4x40xf32> to vector<4x40xf32>
    %cst_11 = arith.constant dense<0.000000e+00> : vector<126x40xf32>
    %11 = tpu.matmul %8, %10, %cst_11 {dimension_numbers = #tpu.dot_dimension_numbers<[1], [0], [0], [1], [0, 0, 1, 1], [], []>} : vector<126x4xf32>, vector<4x40xf32>, vector<126x40xf32> -> vector<126x40xf32>
    %12 = arith.addf %6, %11 : vector<126x40xf32>
    %c0_12 = arith.constant 0 : index
    %c2 = arith.constant 2 : index
    %c0_13 = arith.constant 0 : index
    %13 = vector.load %arg1[%c0_12, %c2, %c0_13] : memref<1x150x4xf32, #tpu.memory_space<vmem>>, vector<1x126x4xf32>
    %14 = vector.shape_cast %13 : vector<1x126x4xf32> to vector<126x4xf32>
    %c2_14 = arith.constant 2 : index
    %c0_15 = arith.constant 0 : index
    %c0_16 = arith.constant 0 : index
    %15 = vector.load %arg2[%c2_14, %c0_15, %c0_16] : memref<25x4x40xf32, #tpu.memory_space<vmem>>, vector<1x4x40xf32>
    %16 = vector.shape_cast %15 : vector<1x4x40xf32> to vector<4x40xf32>
    %cst_17 = arith.constant dense<0.000000e+00> : vector<126x40xf32>
    %17 = tpu.matmul %14, %16, %cst_17 {dimension_numbers = #tpu.dot_dimension_numbers<[1], [0], [0], [1], [0, 0, 1, 1], [], []>} : vector<126x4xf32>, vector<4x40xf32>, vector<126x40xf32> -> vector<126x40xf32>
    %18 = arith.addf %12, %17 : vector<126x40xf32>
    %c0_18 = arith.constant 0 : index
    %c3 = arith.constant 3 : index
    %c0_19 = arith.constant 0 : index
    %19 = vector.load %arg1[%c0_18, %c3, %c0_19] : memref<1x150x4xf32, #tpu.memory_space<vmem>>, vector<1x126x4xf32>
    %20 = vector.shape_cast %19 : vector<1x126x4xf32> to vector<126x4xf32>
    %c3_20 = arith.constant 3 : index
    %c0_21 = arith.constant 0 : index
    %c0_22 = arith.constant 0 : index
    %21 = vector.load %arg2[%c3_20, %c0_21, %c0_22] : memref<25x4x40xf32, #tpu.memory_space<vmem>>, vector<1x4x40xf32>
    %22 = vector.shape_cast %21 : vector<1x4x40xf32> to vector<4x40xf32>
    %cst_23 = arith.constant dense<0.000000e+00> : vector<126x40xf32>
    %23 = tpu.matmul %20, %22, %cst_23 {dimension_numbers = #tpu.dot_dimension_numbers<[1], [0], [0], [1], [0, 0, 1, 1], [], []>} : vector<126x4xf32>, vector<4x40xf32>, vector<126x40xf32> -> vector<126x40xf32>
    %24 = arith.addf %18, %23 : vector<126x40xf32>
    %c0_24 = arith.constant 0 : index
    %c4 = arith.constant 4 : index
    %c0_25 = arith.constant 0 : index
    %25 = vector.load %arg1[%c0_24, %c4, %c0_25] : memref<1x150x4xf32, #tpu.memory_space<vmem>>, vector<1x126x4xf32>
    %26 = vector.shape_cast %25 : vector<1x126x4xf32> to vector<126x4xf32>
    %c4_26 = arith.constant 4 : index
    %c0_27 = arith.constant 0 : index
    %c0_28 = arith.constant 0 : index
    %27 = vector.load %arg2[%c4_26, %c0_27, %c0_28] : memref<25x4x40xf32, #tpu.memory_space<vmem>>, vector<1x4x40xf32>
    %28 = vector.shape_cast %27 : vector<1x4x40xf32> to vector<4x40xf32>
    %cst_29 = arith.constant dense<0.000000e+00> : vector<126x40xf32>
    %29 = tpu.matmul %26, %28, %cst_29 {dimension_numbers = #tpu.dot_dimension_numbers<[1], [0], [0], [1], [0, 0, 1, 1], [], []>} : vector<126x4xf32>, vector<4x40xf32>, vector<126x40xf32> -> vector<126x40xf32>
    %30 = arith.addf %24, %29 : vector<126x40xf32>
    %c0_30 = arith.constant 0 : index
    %c5 = arith.constant 5 : index
    %c0_31 = arith.constant 0 : index
    %31 = vector.load %arg1[%c0_30, %c5, %c0_31] : memref<1x150x4xf32, #tpu.memory_space<vmem>>, vector<1x126x4xf32>
    %32 = vector.shape_cast %31 : vector<1x126x4xf32> to vector<126x4xf32>
    %c5_32 = arith.constant 5 : index
    %c0_33 = arith.constant 0 : index
    %c0_34 = arith.constant 0 : index
    %33 = vector.load %arg2[%c5_32, %c0_33, %c0_34] : memref<25x4x40xf32, #tpu.memory_space<vmem>>, vector<1x4x40xf32>
    %34 = vector.shape_cast %33 : vector<1x4x40xf32> to vector<4x40xf32>
    %cst_35 = arith.constant dense<0.000000e+00> : vector<126x40xf32>
    %35 = tpu.matmul %32, %34, %cst_35 {dimension_numbers = #tpu.dot_dimension_numbers<[1], [0], [0], [1], [0, 0, 1, 1], [], []>} : vector<126x4xf32>, vector<4x40xf32>, vector<126x40xf32> -> vector<126x40xf32>
    %36 = arith.addf %30, %35 : vector<126x40xf32>
    %c0_36 = arith.constant 0 : index
    %c6 = arith.constant 6 : index
    %c0_37 = arith.constant 0 : index
    %37 = vector.load %arg1[%c0_36, %c6, %c0_37] : memref<1x150x4xf32, #tpu.memory_space<vmem>>, vector<1x126x4xf32>
    %38 = vector.shape_cast %37 : vector<1x126x4xf32> to vector<126x4xf32>
    %c6_38 = arith.constant 6 : index
    %c0_39 = arith.constant 0 : index
    %c0_40 = arith.constant 0 : index
    %39 = vector.load %arg2[%c6_38, %c0_39, %c0_40] : memref<25x4x40xf32, #tpu.memory_space<vmem>>, vector<1x4x40xf32>
    %40 = vector.shape_cast %39 : vector<1x4x40xf32> to vector<4x40xf32>
    %cst_41 = arith.constant dense<0.000000e+00> : vector<126x40xf32>
    %41 = tpu.matmul %38, %40, %cst_41 {dimension_numbers = #tpu.dot_dimension_numbers<[1], [0], [0], [1], [0, 0, 1, 1], [], []>} : vector<126x4xf32>, vector<4x40xf32>, vector<126x40xf32> -> vector<126x40xf32>
    %42 = arith.addf %36, %41 : vector<126x40xf32>
    %c0_42 = arith.constant 0 : index
    %c7 = arith.constant 7 : index
    %c0_43 = arith.constant 0 : index
    %43 = vector.load %arg1[%c0_42, %c7, %c0_43] : memref<1x150x4xf32, #tpu.memory_space<vmem>>, vector<1x126x4xf32>
    %44 = vector.shape_cast %43 : vector<1x126x4xf32> to vector<126x4xf32>
    %c7_44 = arith.constant 7 : index
    %c0_45 = arith.constant 0 : index
    %c0_46 = arith.constant 0 : index
    %45 = vector.load %arg2[%c7_44, %c0_45, %c0_46] : memref<25x4x40xf32, #tpu.memory_space<vmem>>, vector<1x4x40xf32>
    %46 = vector.shape_cast %45 : vector<1x4x40xf32> to vector<4x40xf32>
    %cst_47 = arith.constant dense<0.000000e+00> : vector<126x40xf32>
    %47 = tpu.matmul %44, %46, %cst_47 {dimension_numbers = #tpu.dot_dimension_numbers<[1], [0], [0], [1], [0, 0, 1, 1], [], []>} : vector<126x4xf32>, vector<4x40xf32>, vector<126x40xf32> -> vector<126x40xf32>
    %48 = arith.addf %42, %47 : vector<126x40xf32>
    %c0_48 = arith.constant 0 : index
    %c8 = arith.constant 8 : index
    %c0_49 = arith.constant 0 : index
    %49 = vector.load %arg1[%c0_48, %c8, %c0_49] : memref<1x150x4xf32, #tpu.memory_space<vmem>>, vector<1x126x4xf32>
    %50 = vector.shape_cast %49 : vector<1x126x4xf32> to vector<126x4xf32>
    %c8_50 = arith.constant 8 : index
    %c0_51 = arith.constant 0 : index
    %c0_52 = arith.constant 0 : index
    %51 = vector.load %arg2[%c8_50, %c0_51, %c0_52] : memref<25x4x40xf32, #tpu.memory_space<vmem>>, vector<1x4x40xf32>
    %52 = vector.shape_cast %51 : vector<1x4x40xf32> to vector<4x40xf32>
    %cst_53 = arith.constant dense<0.000000e+00> : vector<126x40xf32>
    %53 = tpu.matmul %50, %52, %cst_53 {dimension_numbers = #tpu.dot_dimension_numbers<[1], [0], [0], [1], [0, 0, 1, 1], [], []>} : vector<126x4xf32>, vector<4x40xf32>, vector<126x40xf32> -> vector<126x40xf32>
    %54 = arith.addf %48, %53 : vector<126x40xf32>
    %c0_54 = arith.constant 0 : index
    %c9 = arith.constant 9 : index
    %c0_55 = arith.constant 0 : index
    %55 = vector.load %arg1[%c0_54, %c9, %c0_55] : memref<1x150x4xf32, #tpu.memory_space<vmem>>, vector<1x126x4xf32>
    %56 = vector.shape_cast %55 : vector<1x126x4xf32> to vector<126x4xf32>
    %c9_56 = arith.constant 9 : index
    %c0_57 = arith.constant 0 : index
    %c0_58 = arith.constant 0 : index
    %57 = vector.load %arg2[%c9_56, %c0_57, %c0_58] : memref<25x4x40xf32, #tpu.memory_space<vmem>>, vector<1x4x40xf32>
    %58 = vector.shape_cast %57 : vector<1x4x40xf32> to vector<4x40xf32>
    %cst_59 = arith.constant dense<0.000000e+00> : vector<126x40xf32>
    %59 = tpu.matmul %56, %58, %cst_59 {dimension_numbers = #tpu.dot_dimension_numbers<[1], [0], [0], [1], [0, 0, 1, 1], [], []>} : vector<126x4xf32>, vector<4x40xf32>, vector<126x40xf32> -> vector<126x40xf32>
    %60 = arith.addf %54, %59 : vector<126x40xf32>
    %c0_60 = arith.constant 0 : index
    %c10 = arith.constant 10 : index
    %c0_61 = arith.constant 0 : index
    %61 = vector.load %arg1[%c0_60, %c10, %c0_61] : memref<1x150x4xf32, #tpu.memory_space<vmem>>, vector<1x126x4xf32>
    %62 = vector.shape_cast %61 : vector<1x126x4xf32> to vector<126x4xf32>
    %c10_62 = arith.constant 10 : index
    %c0_63 = arith.constant 0 : index
    %c0_64 = arith.constant 0 : index
    %63 = vector.load %arg2[%c10_62, %c0_63, %c0_64] : memref<25x4x40xf32, #tpu.memory_space<vmem>>, vector<1x4x40xf32>
    %64 = vector.shape_cast %63 : vector<1x4x40xf32> to vector<4x40xf32>
    %cst_65 = arith.constant dense<0.000000e+00> : vector<126x40xf32>
    %65 = tpu.matmul %62, %64, %cst_65 {dimension_numbers = #tpu.dot_dimension_numbers<[1], [0], [0], [1], [0, 0, 1, 1], [], []>} : vector<126x4xf32>, vector<4x40xf32>, vector<126x40xf32> -> vector<126x40xf32>
    %66 = arith.addf %60, %65 : vector<126x40xf32>
    %c0_66 = arith.constant 0 : index
    %c11 = arith.constant 11 : index
    %c0_67 = arith.constant 0 : index
    %67 = vector.load %arg1[%c0_66, %c11, %c0_67] : memref<1x150x4xf32, #tpu.memory_space<vmem>>, vector<1x126x4xf32>
    %68 = vector.shape_cast %67 : vector<1x126x4xf32> to vector<126x4xf32>
    %c11_68 = arith.constant 11 : index
    %c0_69 = arith.constant 0 : index
    %c0_70 = arith.constant 0 : index
    %69 = vector.load %arg2[%c11_68, %c0_69, %c0_70] : memref<25x4x40xf32, #tpu.memory_space<vmem>>, vector<1x4x40xf32>
    %70 = vector.shape_cast %69 : vector<1x4x40xf32> to vector<4x40xf32>
    %cst_71 = arith.constant dense<0.000000e+00> : vector<126x40xf32>
    %71 = tpu.matmul %68, %70, %cst_71 {dimension_numbers = #tpu.dot_dimension_numbers<[1], [0], [0], [1], [0, 0, 1, 1], [], []>} : vector<126x4xf32>, vector<4x40xf32>, vector<126x40xf32> -> vector<126x40xf32>
    %72 = arith.addf %66, %71 : vector<126x40xf32>
    %c0_72 = arith.constant 0 : index
    %c12 = arith.constant 12 : index
    %c0_73 = arith.constant 0 : index
    %73 = vector.load %arg1[%c0_72, %c12, %c0_73] : memref<1x150x4xf32, #tpu.memory_space<vmem>>, vector<1x126x4xf32>
    %74 = vector.shape_cast %73 : vector<1x126x4xf32> to vector<126x4xf32>
    %c12_74 = arith.constant 12 : index
    %c0_75 = arith.constant 0 : index
    %c0_76 = arith.constant 0 : index
    %75 = vector.load %arg2[%c12_74, %c0_75, %c0_76] : memref<25x4x40xf32, #tpu.memory_space<vmem>>, vector<1x4x40xf32>
    %76 = vector.shape_cast %75 : vector<1x4x40xf32> to vector<4x40xf32>
    %cst_77 = arith.constant dense<0.000000e+00> : vector<126x40xf32>
    %77 = tpu.matmul %74, %76, %cst_77 {dimension_numbers = #tpu.dot_dimension_numbers<[1], [0], [0], [1], [0, 0, 1, 1], [], []>} : vector<126x4xf32>, vector<4x40xf32>, vector<126x40xf32> -> vector<126x40xf32>
    %78 = arith.addf %72, %77 : vector<126x40xf32>
    %c0_78 = arith.constant 0 : index
    %c13 = arith.constant 13 : index
    %c0_79 = arith.constant 0 : index
    %79 = vector.load %arg1[%c0_78, %c13, %c0_79] : memref<1x150x4xf32, #tpu.memory_space<vmem>>, vector<1x126x4xf32>
    %80 = vector.shape_cast %79 : vector<1x126x4xf32> to vector<126x4xf32>
    %c13_80 = arith.constant 13 : index
    %c0_81 = arith.constant 0 : index
    %c0_82 = arith.constant 0 : index
    %81 = vector.load %arg2[%c13_80, %c0_81, %c0_82] : memref<25x4x40xf32, #tpu.memory_space<vmem>>, vector<1x4x40xf32>
    %82 = vector.shape_cast %81 : vector<1x4x40xf32> to vector<4x40xf32>
    %cst_83 = arith.constant dense<0.000000e+00> : vector<126x40xf32>
    %83 = tpu.matmul %80, %82, %cst_83 {dimension_numbers = #tpu.dot_dimension_numbers<[1], [0], [0], [1], [0, 0, 1, 1], [], []>} : vector<126x4xf32>, vector<4x40xf32>, vector<126x40xf32> -> vector<126x40xf32>
    %84 = arith.addf %78, %83 : vector<126x40xf32>
    %c0_84 = arith.constant 0 : index
    %c14 = arith.constant 14 : index
    %c0_85 = arith.constant 0 : index
    %85 = vector.load %arg1[%c0_84, %c14, %c0_85] : memref<1x150x4xf32, #tpu.memory_space<vmem>>, vector<1x126x4xf32>
    %86 = vector.shape_cast %85 : vector<1x126x4xf32> to vector<126x4xf32>
    %c14_86 = arith.constant 14 : index
    %c0_87 = arith.constant 0 : index
    %c0_88 = arith.constant 0 : index
    %87 = vector.load %arg2[%c14_86, %c0_87, %c0_88] : memref<25x4x40xf32, #tpu.memory_space<vmem>>, vector<1x4x40xf32>
    %88 = vector.shape_cast %87 : vector<1x4x40xf32> to vector<4x40xf32>
    %cst_89 = arith.constant dense<0.000000e+00> : vector<126x40xf32>
    %89 = tpu.matmul %86, %88, %cst_89 {dimension_numbers = #tpu.dot_dimension_numbers<[1], [0], [0], [1], [0, 0, 1, 1], [], []>} : vector<126x4xf32>, vector<4x40xf32>, vector<126x40xf32> -> vector<126x40xf32>
    %90 = arith.addf %84, %89 : vector<126x40xf32>
    %c0_90 = arith.constant 0 : index
    %c15 = arith.constant 15 : index
    %c0_91 = arith.constant 0 : index
    %91 = vector.load %arg1[%c0_90, %c15, %c0_91] : memref<1x150x4xf32, #tpu.memory_space<vmem>>, vector<1x126x4xf32>
    %92 = vector.shape_cast %91 : vector<1x126x4xf32> to vector<126x4xf32>
    %c15_92 = arith.constant 15 : index
    %c0_93 = arith.constant 0 : index
    %c0_94 = arith.constant 0 : index
    %93 = vector.load %arg2[%c15_92, %c0_93, %c0_94] : memref<25x4x40xf32, #tpu.memory_space<vmem>>, vector<1x4x40xf32>
    %94 = vector.shape_cast %93 : vector<1x4x40xf32> to vector<4x40xf32>
    %cst_95 = arith.constant dense<0.000000e+00> : vector<126x40xf32>
    %95 = tpu.matmul %92, %94, %cst_95 {dimension_numbers = #tpu.dot_dimension_numbers<[1], [0], [0], [1], [0, 0, 1, 1], [], []>} : vector<126x4xf32>, vector<4x40xf32>, vector<126x40xf32> -> vector<126x40xf32>
    %96 = arith.addf %90, %95 : vector<126x40xf32>
    %c0_96 = arith.constant 0 : index
    %c16 = arith.constant 16 : index
    %c0_97 = arith.constant 0 : index
    %97 = vector.load %arg1[%c0_96, %c16, %c0_97] : memref<1x150x4xf32, #tpu.memory_space<vmem>>, vector<1x126x4xf32>
    %98 = vector.shape_cast %97 : vector<1x126x4xf32> to vector<126x4xf32>
    %c16_98 = arith.constant 16 : index
    %c0_99 = arith.constant 0 : index
    %c0_100 = arith.constant 0 : index
    %99 = vector.load %arg2[%c16_98, %c0_99, %c0_100] : memref<25x4x40xf32, #tpu.memory_space<vmem>>, vector<1x4x40xf32>
    %100 = vector.shape_cast %99 : vector<1x4x40xf32> to vector<4x40xf32>
    %cst_101 = arith.constant dense<0.000000e+00> : vector<126x40xf32>
    %101 = tpu.matmul %98, %100, %cst_101 {dimension_numbers = #tpu.dot_dimension_numbers<[1], [0], [0], [1], [0, 0, 1, 1], [], []>} : vector<126x4xf32>, vector<4x40xf32>, vector<126x40xf32> -> vector<126x40xf32>
    %102 = arith.addf %96, %101 : vector<126x40xf32>
    %c0_102 = arith.constant 0 : index
    %c17 = arith.constant 17 : index
    %c0_103 = arith.constant 0 : index
    %103 = vector.load %arg1[%c0_102, %c17, %c0_103] : memref<1x150x4xf32, #tpu.memory_space<vmem>>, vector<1x126x4xf32>
    %104 = vector.shape_cast %103 : vector<1x126x4xf32> to vector<126x4xf32>
    %c17_104 = arith.constant 17 : index
    %c0_105 = arith.constant 0 : index
    %c0_106 = arith.constant 0 : index
    %105 = vector.load %arg2[%c17_104, %c0_105, %c0_106] : memref<25x4x40xf32, #tpu.memory_space<vmem>>, vector<1x4x40xf32>
    %106 = vector.shape_cast %105 : vector<1x4x40xf32> to vector<4x40xf32>
    %cst_107 = arith.constant dense<0.000000e+00> : vector<126x40xf32>
    %107 = tpu.matmul %104, %106, %cst_107 {dimension_numbers = #tpu.dot_dimension_numbers<[1], [0], [0], [1], [0, 0, 1, 1], [], []>} : vector<126x4xf32>, vector<4x40xf32>, vector<126x40xf32> -> vector<126x40xf32>
    %108 = arith.addf %102, %107 : vector<126x40xf32>
    %c0_108 = arith.constant 0 : index
    %c18 = arith.constant 18 : index
    %c0_109 = arith.constant 0 : index
    %109 = vector.load %arg1[%c0_108, %c18, %c0_109] : memref<1x150x4xf32, #tpu.memory_space<vmem>>, vector<1x126x4xf32>
    %110 = vector.shape_cast %109 : vector<1x126x4xf32> to vector<126x4xf32>
    %c18_110 = arith.constant 18 : index
    %c0_111 = arith.constant 0 : index
    %c0_112 = arith.constant 0 : index
    %111 = vector.load %arg2[%c18_110, %c0_111, %c0_112] : memref<25x4x40xf32, #tpu.memory_space<vmem>>, vector<1x4x40xf32>
    %112 = vector.shape_cast %111 : vector<1x4x40xf32> to vector<4x40xf32>
    %cst_113 = arith.constant dense<0.000000e+00> : vector<126x40xf32>
    %113 = tpu.matmul %110, %112, %cst_113 {dimension_numbers = #tpu.dot_dimension_numbers<[1], [0], [0], [1], [0, 0, 1, 1], [], []>} : vector<126x4xf32>, vector<4x40xf32>, vector<126x40xf32> -> vector<126x40xf32>
    %114 = arith.addf %108, %113 : vector<126x40xf32>
    %c0_114 = arith.constant 0 : index
    %c19 = arith.constant 19 : index
    %c0_115 = arith.constant 0 : index
    %115 = vector.load %arg1[%c0_114, %c19, %c0_115] : memref<1x150x4xf32, #tpu.memory_space<vmem>>, vector<1x126x4xf32>
    %116 = vector.shape_cast %115 : vector<1x126x4xf32> to vector<126x4xf32>
    %c19_116 = arith.constant 19 : index
    %c0_117 = arith.constant 0 : index
    %c0_118 = arith.constant 0 : index
    %117 = vector.load %arg2[%c19_116, %c0_117, %c0_118] : memref<25x4x40xf32, #tpu.memory_space<vmem>>, vector<1x4x40xf32>
    %118 = vector.shape_cast %117 : vector<1x4x40xf32> to vector<4x40xf32>
    %cst_119 = arith.constant dense<0.000000e+00> : vector<126x40xf32>
    %119 = tpu.matmul %116, %118, %cst_119 {dimension_numbers = #tpu.dot_dimension_numbers<[1], [0], [0], [1], [0, 0, 1, 1], [], []>} : vector<126x4xf32>, vector<4x40xf32>, vector<126x40xf32> -> vector<126x40xf32>
    %120 = arith.addf %114, %119 : vector<126x40xf32>
    %c0_120 = arith.constant 0 : index
    %c20 = arith.constant 20 : index
    %c0_121 = arith.constant 0 : index
    %121 = vector.load %arg1[%c0_120, %c20, %c0_121] : memref<1x150x4xf32, #tpu.memory_space<vmem>>, vector<1x126x4xf32>
    %122 = vector.shape_cast %121 : vector<1x126x4xf32> to vector<126x4xf32>
    %c20_122 = arith.constant 20 : index
    %c0_123 = arith.constant 0 : index
    %c0_124 = arith.constant 0 : index
    %123 = vector.load %arg2[%c20_122, %c0_123, %c0_124] : memref<25x4x40xf32, #tpu.memory_space<vmem>>, vector<1x4x40xf32>
    %124 = vector.shape_cast %123 : vector<1x4x40xf32> to vector<4x40xf32>
    %cst_125 = arith.constant dense<0.000000e+00> : vector<126x40xf32>
    %125 = tpu.matmul %122, %124, %cst_125 {dimension_numbers = #tpu.dot_dimension_numbers<[1], [0], [0], [1], [0, 0, 1, 1], [], []>} : vector<126x4xf32>, vector<4x40xf32>, vector<126x40xf32> -> vector<126x40xf32>
    %126 = arith.addf %120, %125 : vector<126x40xf32>
    %c0_126 = arith.constant 0 : index
    %c21 = arith.constant 21 : index
    %c0_127 = arith.constant 0 : index
    %127 = vector.load %arg1[%c0_126, %c21, %c0_127] : memref<1x150x4xf32, #tpu.memory_space<vmem>>, vector<1x126x4xf32>
    %128 = vector.shape_cast %127 : vector<1x126x4xf32> to vector<126x4xf32>
    %c21_128 = arith.constant 21 : index
    %c0_129 = arith.constant 0 : index
    %c0_130 = arith.constant 0 : index
    %129 = vector.load %arg2[%c21_128, %c0_129, %c0_130] : memref<25x4x40xf32, #tpu.memory_space<vmem>>, vector<1x4x40xf32>
    %130 = vector.shape_cast %129 : vector<1x4x40xf32> to vector<4x40xf32>
    %cst_131 = arith.constant dense<0.000000e+00> : vector<126x40xf32>
    %131 = tpu.matmul %128, %130, %cst_131 {dimension_numbers = #tpu.dot_dimension_numbers<[1], [0], [0], [1], [0, 0, 1, 1], [], []>} : vector<126x4xf32>, vector<4x40xf32>, vector<126x40xf32> -> vector<126x40xf32>
    %132 = arith.addf %126, %131 : vector<126x40xf32>
    %c0_132 = arith.constant 0 : index
    %c22 = arith.constant 22 : index
    %c0_133 = arith.constant 0 : index
    %133 = vector.load %arg1[%c0_132, %c22, %c0_133] : memref<1x150x4xf32, #tpu.memory_space<vmem>>, vector<1x126x4xf32>
    %134 = vector.shape_cast %133 : vector<1x126x4xf32> to vector<126x4xf32>
    %c22_134 = arith.constant 22 : index
    %c0_135 = arith.constant 0 : index
    %c0_136 = arith.constant 0 : index
    %135 = vector.load %arg2[%c22_134, %c0_135, %c0_136] : memref<25x4x40xf32, #tpu.memory_space<vmem>>, vector<1x4x40xf32>
    %136 = vector.shape_cast %135 : vector<1x4x40xf32> to vector<4x40xf32>
    %cst_137 = arith.constant dense<0.000000e+00> : vector<126x40xf32>
    %137 = tpu.matmul %134, %136, %cst_137 {dimension_numbers = #tpu.dot_dimension_numbers<[1], [0], [0], [1], [0, 0, 1, 1], [], []>} : vector<126x4xf32>, vector<4x40xf32>, vector<126x40xf32> -> vector<126x40xf32>
    %138 = arith.addf %132, %137 : vector<126x40xf32>
    %c0_138 = arith.constant 0 : index
    %c23 = arith.constant 23 : index
    %c0_139 = arith.constant 0 : index
    %139 = vector.load %arg1[%c0_138, %c23, %c0_139] : memref<1x150x4xf32, #tpu.memory_space<vmem>>, vector<1x126x4xf32>
    %140 = vector.shape_cast %139 : vector<1x126x4xf32> to vector<126x4xf32>
    %c23_140 = arith.constant 23 : index
    %c0_141 = arith.constant 0 : index
    %c0_142 = arith.constant 0 : index
    %141 = vector.load %arg2[%c23_140, %c0_141, %c0_142] : memref<25x4x40xf32, #tpu.memory_space<vmem>>, vector<1x4x40xf32>
    %142 = vector.shape_cast %141 : vector<1x4x40xf32> to vector<4x40xf32>
    %cst_143 = arith.constant dense<0.000000e+00> : vector<126x40xf32>
    %143 = tpu.matmul %140, %142, %cst_143 {dimension_numbers = #tpu.dot_dimension_numbers<[1], [0], [0], [1], [0, 0, 1, 1], [], []>} : vector<126x4xf32>, vector<4x40xf32>, vector<126x40xf32> -> vector<126x40xf32>
    %144 = arith.addf %138, %143 : vector<126x40xf32>
    %c0_144 = arith.constant 0 : index
    %c24 = arith.constant 24 : index
    %c0_145 = arith.constant 0 : index
    %145 = vector.load %arg1[%c0_144, %c24, %c0_145] : memref<1x150x4xf32, #tpu.memory_space<vmem>>, vector<1x126x4xf32>
    %146 = vector.shape_cast %145 : vector<1x126x4xf32> to vector<126x4xf32>
    %c24_146 = arith.constant 24 : index
    %c0_147 = arith.constant 0 : index
    %c0_148 = arith.constant 0 : index
    %147 = vector.load %arg2[%c24_146, %c0_147, %c0_148] : memref<25x4x40xf32, #tpu.memory_space<vmem>>, vector<1x4x40xf32>
    %148 = vector.shape_cast %147 : vector<1x4x40xf32> to vector<4x40xf32>
    %cst_149 = arith.constant dense<0.000000e+00> : vector<126x40xf32>
    %149 = tpu.matmul %146, %148, %cst_149 {dimension_numbers = #tpu.dot_dimension_numbers<[1], [0], [0], [1], [0, 0, 1, 1], [], []>} : vector<126x4xf32>, vector<4x40xf32>, vector<126x40xf32> -> vector<126x40xf32>
    %150 = arith.addf %144, %149 : vector<126x40xf32>
    %c0_150 = arith.constant 0 : index
    %c0_151 = arith.constant 0 : index
    %151 = vector.load %arg3[%c0_150, %c0_151] : memref<1x40xf32, #tpu.memory_space<vmem>>, vector<1x40xf32>
    %152 = vector.broadcast %151 : vector<1x40xf32> to vector<126x40xf32>
    %153 = arith.addf %150, %152 : vector<126x40xf32>
    %c0_152 = arith.constant 0 : index
    %c0_153 = arith.constant 0 : index
    %154 = vector.load %arg4[%c0_152, %c0_153] : memref<1x40xf32, #tpu.memory_space<vmem>>, vector<1x40xf32>
    %155 = vector.broadcast %154 : vector<1x40xf32> to vector<126x40xf32>
    %156 = arith.mulf %153, %155 : vector<126x40xf32>
    %c0_154 = arith.constant 0 : index
    %c0_155 = arith.constant 0 : index
    %157 = vector.load %arg5[%c0_154, %c0_155] : memref<1x40xf32, #tpu.memory_space<vmem>>, vector<1x40xf32>
    %158 = vector.broadcast %157 : vector<1x40xf32> to vector<126x40xf32>
    %159 = arith.addf %156, %158 : vector<126x40xf32>
    %160 = arith.mulf %159, %159 : vector<126x40xf32>
    %c0_156 = arith.constant 0 : index
    %c0_157 = arith.constant 0 : index
    %161 = vector.load %arg6[%c0_156, %c0_157] : memref<4x126xf32, #tpu.memory_space<vmem>>, vector<4x126xf32>
    %cst_158 = arith.constant dense<0.000000e+00> : vector<4x40xf32>
    %162 = tpu.matmul %161, %160, %cst_158 {dimension_numbers = #tpu.dot_dimension_numbers<[1], [0], [0], [1], [0, 0, 1, 1], [], []>} : vector<4x126xf32>, vector<126x40xf32>, vector<4x40xf32> -> vector<4x40xf32>
    %cst_159 = arith.constant 9.99999997E-7 : f32
    %163 = vector.broadcast %cst_159 : f32 to vector<4x40xf32>
    %164 = arith.maximumf %162, %163 : vector<4x40xf32>
    %165 = math.log %164 : vector<4x40xf32>
    %c0_160 = arith.constant 0 : index
    %c0_161 = arith.constant 0 : index
    %c0_162 = arith.constant 0 : index
    %166 = vector.load %arg7[%c0_160, %c0_161, %c0_162] : memref<1x4x40xf32, #tpu.memory_space<vmem>>, vector<1x4x40xf32>
    %167 = vector.shape_cast %166 : vector<1x4x40xf32> to vector<4x40xf32>
    %168 = vector.shape_cast %165 : vector<4x40xf32> to vector<1x4x40xf32>
    tpu.vector_store %arg7[%c0_160, %c0_161, %c0_162], %168 {strides = array<i32>} : memref<1x4x40xf32, #tpu.memory_space<vmem>>, vector<1x4x40xf32>,
    return
  }
  func.func @transform_0(%arg0: i32) -> (i32, i32, i32) {
    %c0_i32 = arith.constant 0 : i32
    %c0_i32_0 = arith.constant 0 : i32
    %c0_i32_1 = arith.constant 0 : i32
    return %arg0, %c0_i32, %c0_i32_0 : i32, i32, i32
  }
  func.func @transform_1(%arg0: i32) -> (i32, i32, i32) {
    %c0_i32 = arith.constant 0 : i32
    %c0_i32_0 = arith.constant 0 : i32
    %c0_i32_1 = arith.constant 0 : i32
    %c0_i32_2 = arith.constant 0 : i32
    return %c0_i32, %c0_i32_0, %c0_i32_1 : i32, i32, i32
  }
  func.func @transform_2(%arg0: i32) -> (i32, i32) {
    %c0_i32 = arith.constant 0 : i32
    %c0_i32_0 = arith.constant 0 : i32
    %c0_i32_1 = arith.constant 0 : i32
    return %c0_i32, %c0_i32_0 : i32, i32
  }
  func.func @transform_3(%arg0: i32) -> (i32, i32) {
    %c0_i32 = arith.constant 0 : i32
    %c0_i32_0 = arith.constant 0 : i32
    %c0_i32_1 = arith.constant 0 : i32
    return %c0_i32, %c0_i32_0 : i32, i32
  }
  func.func @transform_4(%arg0: i32) -> (i32, i32) {
    %c0_i32 = arith.constant 0 : i32
    %c0_i32_0 = arith.constant 0 : i32
    %c0_i32_1 = arith.constant 0 : i32
    return %c0_i32, %c0_i32_0 : i32, i32
  }
  func.func @transform_5(%arg0: i32) -> (i32, i32) {
    %c0_i32 = arith.constant 0 : i32
    %c0_i32_0 = arith.constant 0 : i32
    %c0_i32_1 = arith.constant 0 : i32
    return %c0_i32, %c0_i32_0 : i32, i32
  }
  func.func @transform_6(%arg0: i32) -> (i32, i32, i32) {
    %c0_i32 = arith.constant 0 : i32
    %c0_i32_0 = arith.constant 0 : i32
    %c0_i32_1 = arith.constant 0 : i32
    return %arg0, %c0_i32, %c0_i32_0 : i32, i32, i32
  }
}

</mosaic_0001>

<llo_original>
// kernel: create_base_forward.1
$region0: #{create_base_forward.1}
  #allocation0 [shape = 'u32[]', space=smem, size = 0x4, offset = 0x4, fixed_abs, tag = 'smem constant byte address 0x4 - core index']
  #allocation1 [shape = 'u32[144,128]{1,0:T(1,128)}', space=vmem, size = 0x12000, scoped, tag = 'internal scratch']
  %s0 = inlined_call_operand.vmem [shape: f32[2,150,4], index: 0, kind: input, shape index: {}]
  %s1 = inlined_call_operand.vmem [shape: f32[25,4,40], index: 1, kind: input, shape index: {}]
  %s2 = inlined_call_operand.vmem [shape: f32[1,40], index: 2, kind: input, shape index: {}]
  %s3 = inlined_call_operand.vmem [shape: f32[1,40], index: 3, kind: input, shape index: {}]
  %s4 = inlined_call_operand.vmem [shape: f32[1,40], index: 4, kind: input, shape index: {}]
  %s5 = inlined_call_operand.vmem [shape: f32[4,126], index: 5, kind: input, shape index: {}]
  %s6 = inlined_call_operand.hbm [shape: f32[2,4,40], index: 6, kind: output, shape index: {}]
  %s7 = sld [smem:[#allocation0]]
  $region57: #{create_base_forward.1} parent=0
    _
  %s9 = ssub.s32 1, %s7
  %s10 = scalar_select 0, %s9, %s7
  $region1: #{create_base_forward.1} parent=0
    #allocation2 [shape = 'u8[4096]{0}', space=vmem, size = 0x1000, scoped, tag = 'output window, operand 0']
    #allocation3 [shape = 's32[2]{0}', space=sflag, size = 0x8, scoped, tag = 'scoped memory for create_base_forward.1']
    %11 = vsyncpa [#allocation3], 0
    %s12 = scalar_lea.sflag [#allocation3], 1
    %13 = vsyncpa %s12, 0
    loop: start=0, step=1, limit=4
    $region2: #{create_base_forward.1} parent=1 // loop_pre_header
      _
    $region3: #{create_base_forward.1} parent=1 // loop_header
      %s15 = sphi 0, %s19
      %p16 = scmp.ge.s32.totalorder %s15, 4
      %s25 = sphi 0, %s27
      %s28 = sphi 0, %s25
      %s29 = sphi 0, %s28
      %s45 = sphi 0, %s29
      %s49 = sphi 0, %s49
      %s51 = sphi 0, %s49
      %s52 = sphi 0, %s51
      %s66 = sphi 0, %s52
      %s70 = sphi 0, %s70
      %s72 = sphi 0, %s70
      %s73 = sphi 0, %s72
      %s87 = sphi 0, %s73
      %s91 = sphi 0, %s91
      %s93 = sphi 0, %s91
      %s94 = sphi 0, %s93
      %s108 = sphi 0, %s94
      %s112 = sphi 0, %s112
      %s114 = sphi 0, %s112
      %s115 = sphi 0, %s114
      %s129 = sphi 0, %s115
      %s133 = sphi 0, %s133
      %s135 = sphi 0, %s133
      %s136 = sphi 0, %s135
      %s150 = sphi 0, %s136
      %s156 = sphi 0, %s158
      %s159 = sphi 0, %s156
      %s160 = sphi 0, %s159
      %s176 = sphi 0, %s160
    $region4: #{create_base_forward.1} parent=1 // loop_header_branch
      %18 = sbr.rel (%p16) target = $region8
    $region5: #{create_base_forward.1} parent=1 // loop_body
      %s20 = ssub.s32 %s15, 1
      %s21 = ssub.s32 %s15, 2
      %s22 = sadd.s32 %s15, 1
      %s23 = ssub.s32 %s15, %s22
      %p24 = scmp.eq.s32.totalorder %s23, 0
      %s26 = sadd.s32 %s25, 1
      %s27 = scalar_select %p24, %s25, %s26
      %p30 = pneg %p24
      %p31 = scmp.eq.s32.totalorder %s15, 1
      %p32 = por %p30, %p31
      %p33 = scmp.ne.s32.totalorder %s25, %s28
      %p34 = scmp.eq.s32.totalorder %s15, 0
      %p35 = por %p33, %p34
      %p36 = scmp.ne.s32.totalorder %s25, %s28
      %p37 = scmp.eq.s32.totalorder %s20, 1
      %p38 = por %p36, %p37
      %p39 = scmp.ne.s32.totalorder %s28, %s29
      %p40 = scmp.eq.s32.totalorder %s20, 0
      %p41 = por %p39, %p40
      %p42 = scmp.ne.s32.totalorder %s28, %s29
      %p43 = scmp.eq.s32.totalorder %s21, 1
      %p44 = por %p42, %p43
      %p46 = scmp.ne.s32.totalorder %s29, %s45
      %p47 = scmp.eq.s32.totalorder %s21, 0
      %p48 = por %p46, %p47
      %s50 = sadd.s32 %s49, 1
      %p53 = scmp.eq.s32.totalorder %s15, 1
      %p54 = scmp.ne.s32.totalorder %s49, %s51
      %p55 = scmp.eq.s32.totalorder %s15, 0
      %p56 = por %p54, %p55
      %p57 = scmp.ne.s32.totalorder %s49, %s51
      %p58 = scmp.eq.s32.totalorder %s20, 1
      %p59 = por %p57, %p58
      %p60 = scmp.ne.s32.totalorder %s51, %s52
      %p61 = scmp.eq.s32.totalorder %s20, 0
      %p62 = por %p60, %p61
      %p63 = scmp.ne.s32.totalorder %s51, %s52
      %p64 = scmp.eq.s32.totalorder %s21, 1
      %p65 = por %p63, %p64
      %p67 = scmp.ne.s32.totalorder %s52, %s66
      %p68 = scmp.eq.s32.totalorder %s21, 0
      %p69 = por %p67, %p68
      %s71 = sadd.s32 %s70, 1
      %p74 = scmp.eq.s32.totalorder %s15, 1
      %p75 = scmp.ne.s32.totalorder %s70, %s72
      %p76 = scmp.eq.s32.totalorder %s15, 0
      %p77 = por %p75, %p76
      %p78 = scmp.ne.s32.totalorder %s70, %s72
      %p79 = scmp.eq.s32.totalorder %s20, 1
      %p80 = por %p78, %p79
      %p81 = scmp.ne.s32.totalorder %s72, %s73
      %p82 = scmp.eq.s32.totalorder %s20, 0
      %p83 = por %p81, %p82
      %p84 = scmp.ne.s32.totalorder %s72, %s73
      %p85 = scmp.eq.s32.totalorder %s21, 1
      %p86 = por %p84, %p85
      %p88 = scmp.ne.s32.totalorder %s73, %s87
      %p89 = scmp.eq.s32.totalorder %s21, 0
      %p90 = por %p88, %p89
      %s92 = sadd.s32 %s91, 1
      %p95 = scmp.eq.s32.totalorder %s15, 1
      %p96 = scmp.ne.s32.totalorder %s91, %s93
      %p97 = scmp.eq.s32.totalorder %s15, 0
      %p98 = por %p96, %p97
      %p99 = scmp.ne.s32.totalorder %s91, %s93
      %p100 = scmp.eq.s32.totalorder %s20, 1
      %p101 = por %p99, %p100
      %p102 = scmp.ne.s32.totalorder %s93, %s94
      %p103 = scmp.eq.s32.totalorder %s20, 0
      %p104 = por %p102, %p103
      %p105 = scmp.ne.s32.totalorder %s93, %s94
      %p106 = scmp.eq.s32.totalorder %s21, 1
      %p107 = por %p105, %p106
      %p109 = scmp.ne.s32.totalorder %s94, %s108
      %p110 = scmp.eq.s32.totalorder %s21, 0
      %p111 = por %p109, %p110
      %s113 = sadd.s32 %s112, 1
      %p116 = scmp.eq.s32.totalorder %s15, 1
      %p117 = scmp.ne.s32.totalorder %s112, %s114
      %p118 = scmp.eq.s32.totalorder %s15, 0
      %p119 = por %p117, %p118
      %p120 = scmp.ne.s32.totalorder %s112, %s114
      %p121 = scmp.eq.s32.totalorder %s20, 1
      %p122 = por %p120, %p121
      %p123 = scmp.ne.s32.totalorder %s114, %s115
      %p124 = scmp.eq.s32.totalorder %s20, 0
      %p125 = por %p123, %p124
      %p126 = scmp.ne.s32.totalorder %s114, %s115
      %p127 = scmp.eq.s32.totalorder %s21, 1
      %p128 = por %p126, %p127
      %p130 = scmp.ne.s32.totalorder %s115, %s129
      %p131 = scmp.eq.s32.totalorder %s21, 0
      %p132 = por %p130, %p131
      %s134 = sadd.s32 %s133, 1
      %p137 = scmp.eq.s32.totalorder %s15, 1
      %p138 = scmp.ne.s32.totalorder %s133, %s135
      %p139 = scmp.eq.s32.totalorder %s15, 0
      %p140 = por %p138, %p139
      %p141 = scmp.ne.s32.totalorder %s133, %s135
      %p142 = scmp.eq.s32.totalorder %s20, 1
      %p143 = por %p141, %p142
      %p144 = scmp.ne.s32.totalorder %s135, %s136
      %p145 = scmp.eq.s32.totalorder %s20, 0
      %p146 = por %p144, %p145
      %p147 = scmp.ne.s32.totalorder %s135, %s136
      %p148 = scmp.eq.s32.totalorder %s21, 1
      %p149 = por %p147, %p148
      %p151 = scmp.ne.s32.totalorder %s136, %s150
      %p152 = scmp.eq.s32.totalorder %s21, 0
      %p153 = por %p151, %p152
      %s154 = ssub.s32 %s15, %s22
      %p155 = scmp.eq.s32.totalorder %s154, 0
      %s157 = sadd.s32 %s156, 1
      %s158 = scalar_select %p155, %s156, %s157
      %p161 = pneg %p155
      %p162 = scmp.eq.s32.totalorder %s15, 1
      %p163 = por %p161, %p162
      %p164 = scmp.ne.s32.totalorder %s156, %s159
      %p165 = scmp.eq.s32.totalorder %s15, 0
      %p166 = por %p164, %p165
      %p167 = scmp.ne.s32.totalorder %s156, %s159
      %p168 = scmp.eq.s32.totalorder %s20, 1
      %p169 = por %p167, %p168
      %p170 = scmp.ne.s32.totalorder %s159, %s160
      %p171 = scmp.eq.s32.totalorder %s20, 0
      %p172 = por %p170, %p171
      %p173 = scmp.ne.s32.totalorder %s159, %s160
      %p174 = scmp.eq.s32.totalorder %s21, 1
      %p175 = por %p173, %p174
      %p177 = scmp.ne.s32.totalorder %s160, %s176
      %p178 = scmp.eq.s32.totalorder %s21, 0
      %p179 = por %p177, %p178
      %p180 = scmp.le.s32.totalorder 1, %s15
      %p181 = scmp.lt.s32.totalorder %s15, 3
      %p182 = pnand %p180, %p181
      %p183 = pneg %p182
      // Predicated region
      $region9: #{create_base_forward.1} parent=5 // pred_check
        _
      $region10: #{create_base_forward.1} parent=5 // pred_check_branch
        %185 = sbr.rel (%p182) target = $region12
      $region11: #{create_base_forward.1} parent=5 // pred_region
        %s186 = ssub.s32 %s15, 1
        // Predicated region
        $region13: #{create_base_forward.1} parent=11 // pred_check
          %p187 = pneg %p62
        $region14: #{create_base_forward.1} parent=11 // pred_check_branch
          %189 = sbr.rel (%p187) target = $region16
        $region15: #{create_base_forward.1} parent=11 // pred_region
          _
        $region16: #{create_base_forward.1} parent=11 // pred_fallthru
          _
        // Predicated region
        $region17: #{create_base_forward.1} parent=11 // pred_check
          %p190 = pneg %p83
        $region18: #{create_base_forward.1} parent=11 // pred_check_branch
          %192 = sbr.rel (%p190) target = $region20
        $region19: #{create_base_forward.1} parent=11 // pred_region
          _
        $region20: #{create_base_forward.1} parent=11 // pred_fallthru
          _
        // Predicated region
        $region21: #{create_base_forward.1} parent=11 // pred_check
          %p193 = pneg %p104
        $region22: #{create_base_forward.1} parent=11 // pred_check_branch
          %195 = sbr.rel (%p193) target = $region24
        $region23: #{create_base_forward.1} parent=11 // pred_region
          _
        $region24: #{create_base_forward.1} parent=11 // pred_fallthru
          _
        // Predicated region
        $region25: #{create_base_forward.1} parent=11 // pred_check
          %p196 = pneg %p125
        $region26: #{create_base_forward.1} parent=11 // pred_check_branch
          %198 = sbr.rel (%p196) target = $region28
        $region27: #{create_base_forward.1} parent=11 // pred_region
          _
        $region28: #{create_base_forward.1} parent=11 // pred_fallthru
          _
        // Predicated region
        $region29: #{create_base_forward.1} parent=11 // pred_check
          %p199 = pneg %p146
        $region30: #{create_base_forward.1} parent=11 // pred_check_branch
          %201 = sbr.rel (%p199) target = $region32
        $region31: #{create_base_forward.1} parent=11 // pred_region
          _
        $region32: #{create_base_forward.1} parent=11 // pred_fallthru
          _
      $region12: #{create_base_forward.1} parent=5 // pred_fallthru
        _
      %p202 = scmp.lt.s32.totalorder %s15, 2
      // Predicated region
      $region33: #{create_base_forward.1} parent=5 // pred_check
        %p203 = pneg %p202
      $region34: #{create_base_forward.1} parent=5 // pred_check_branch
        %205 = sbr.rel (%p203) target = $region36
      $region35: #{create_base_forward.1} parent=5 // pred_region
        // Predicated region
        $region37: #{create_base_forward.1} parent=35 // pred_check
          %p206 = pneg %p35
        $region38: #{create_base_forward.1} parent=35 // pred_check_branch
          %208 = sbr.rel (%p206) target = $region40
        $region39: #{create_base_forward.1} parent=35 // pred_region
          %p209 = scmp.lt.s32.totalorder %s15, 1
          %s210 = scalar_select %p209, %s15, 1
          %s211 = smul.addr %s210, 19
          %s212 = smul.addr %s211, 8
          %s213 = scalar_lea.vmem %s0, %s212
        $region40: #{create_base_forward.1} parent=35 // pred_fallthru
          _
      $region36: #{create_base_forward.1} parent=5 // pred_fallthru
        _
      %p214 = scmp.le.s32.totalorder 1, %s15
      %p215 = scmp.lt.s32.totalorder %s15, 3
      %p216 = pnand %p214, %p215
      %p217 = pneg %p216
      // Predicated region
      $region41: #{create_base_forward.1} parent=5 // pred_check
        _
      $region42: #{create_base_forward.1} parent=5 // pred_check_branch
        %219 = sbr.rel (%p216) target = $region44
      $region43: #{create_base_forward.1} parent=5 // pred_region
        %s220 = ssub.s32 %s15, 1
        %p221 = scmp.lt.s32.totalorder %s20, 1
        %s222 = scalar_select %p221, %s20, 1
        %s223 = smul.addr %s222, 19
        %s224 = smul.addr %s223, 8
        %s225 = scalar_lea.vmem %s0, %s224
        %p226 = pneg %p41
        %p227 = pneg %p38
        %p228 = pneg %p62
        %p229 = pneg %p59
        %p230 = pneg %p83
        %p231 = pneg %p80
        %p232 = pneg %p104
        %p233 = pneg %p101
        %p234 = pneg %p125
        %p235 = pneg %p122
        %p236 = pneg %p146
        %p237 = pneg %p143
        %p238 = pneg %p172
        %p239 = pneg %p169
        %s240 = sand.u32 %s159, 1
        %s241 = scalar_lea.sflag [#allocation3], %s240
        %s242 = sand.u32 %s159, 1
        %s243 = smul.addr %s242, 4
        %s244 = scalar_lea.vmem [#allocation2], %s243
        %p245 = scmp.lt.s32.totalorder %s20, 1
        %s246 = scalar_select %p245, %s20, 1
        %s247 = smul.addr %s246, 19
        %s248 = smul.addr %s247, 8
        %s249 = scalar_lea.vmem %s0, %s248
        %v250 = vld [vmem:[%s249] sm:$0xff]
        %v251 = vld [vmem:[%s249 + $0x8] sm:$0xff]
        %v252 = vld [vmem:[%s249 + $0x10] sm:$0xff]
        %v253 = vld [vmem:[%s249 + $0x18] sm:$0xff]
        %v254 = vld [vmem:[%s249 + $0x20] sm:$0xff]
        %v255 = vld [vmem:[%s249 + $0x28] sm:$0xff]
        %v256 = vld [vmem:[%s249 + $0x30] sm:$0xff]
        %v257 = vld [vmem:[%s249 + $0x38] sm:$0xff]
        %v258 = vld [vmem:[%s249 + $0x40] sm:$0xff]
        %v259 = vld [vmem:[%s249 + $0x48] sm:$0xff]
        %v260 = vld [vmem:[%s249 + $0x50] sm:$0xff]
        %v261 = vld [vmem:[%s249 + $0x58] sm:$0xff]
        %v262 = vld [vmem:[%s249 + $0x60] sm:$0xff]
        %v263 = vld [vmem:[%s249 + $0x68] sm:$0xff]
        %v264 = vld [vmem:[%s249 + $0x70] sm:$0xff]
        %v265 = vld [vmem:[%s249 + $0x78] sm:$0x3f]
        %v266 = vld [vmem:[%s1] sm:$0xf]
        %v267 = vld [vmem:[%s249 + $0x1] sm:$0xff]
        %v268 = vld [vmem:[%s249 + $0x9] sm:$0xff]
        %v269 = vld [vmem:[%s249 + $0x11] sm:$0xff]
        %v270 = vld [vmem:[%s249 + $0x19] sm:$0xff]
        %v271 = vld [vmem:[%s249 + $0x21] sm:$0xff]
        %v272 = vld [vmem:[%s249 + $0x29] sm:$0xff]
        %v273 = vld [vmem:[%s249 + $0x31] sm:$0xff]
        %v274 = vld [vmem:[%s249 + $0x39] sm:$0xff]
        %v275 = vld [vmem:[%s249 + $0x41] sm:$0xff]
        %v276 = vld [vmem:[%s249 + $0x49] sm:$0xff]
        %v277 = vld [vmem:[%s249 + $0x51] sm:$0xff]
        %v278 = vld [vmem:[%s249 + $0x59] sm:$0xff]
        %v279 = vld [vmem:[%s249 + $0x61] sm:$0xff]
        %v280 = vld [vmem:[%s249 + $0x69] sm:$0xff]
        %v281 = vld [vmem:[%s249 + $0x71] sm:$0xff]
        %v282 = vld [vmem:[%s249 + $0x79] sm:$0x3f]
        %s283 = scalar_lea.vmem %s1, 4
        %v284 = vld [vmem:[%s283] sm:$0xf]
        %vm285 = vcmask 31744
        %v287 = vsel %vm285, %v267, 0
        %v290 = vsel %vm285, %v268, 0
        %v293 = vsel %vm285, %v269, 0
        %v296 = vsel %vm285, %v270, 0
        %v299 = vsel %vm285, %v271, 0
        %v302 = vsel %vm285, %v272, 0
        %v305 = vsel %vm285, %v273, 0
        %v308 = vsel %vm285, %v274, 0
        %v311 = vsel %vm285, %v275, 0
        %v314 = vsel %vm285, %v276, 0
        %v317 = vsel %vm285, %v277, 0
        %v320 = vsel %vm285, %v278, 0
        %v323 = vsel %vm285, %v279, 0
        %v326 = vsel %vm285, %v280, 0
        %v329 = vsel %vm285, %v281, 0
        %v332 = vsel %vm285, %v282, 0
        %vm334 = vcmask 1043456
        %v336 = vsel %vm334, %v284, 0
        %338 = vmatprep.subr.mxu0 0.0
        %339 = vmatpush1.msra.mxu0 0.0
        %340 = vmatprep.subr.mxu0 0.0
        %341 = vmatpush1.msra.mxu0 0.0
        %342 = vmatprep.subr.mxu0 0.0
        %343 = vmatpush1.msra.mxu0 0.0
        %344 = vmatprep.subr.mxu0 0.0
        %345 = vmatpush1.msra.mxu0 0.0
        %346 = vmatprep.subr.mxu0 0.0
        %347 = vmatpush1.msra.mxu0 0.0
        %348 = vmatprep.subr.mxu0 0.0
        %349 = vmatpush1.msra.mxu0 0.0
        %350 = vmatprep.subr.mxu0 0.0
        %351 = vmatpush1.msra.mxu0 0.0
        %352 = vmatprep.subr.mxu0 0.0
        %353 = vmatpush1.msra.mxu0 0.0
        %354 = vmatprep.subr.mxu0 0.0
        %355 = vmatpush1.msra.mxu0 0.0
        %356 = vmatprep.subr.mxu0 0.0
        %357 = vmatpush1.msra.mxu0 0.0
        %358 = vmatprep.subr.mxu0 0.0
        %359 = vmatpush1.msra.mxu0 0.0
        %360 = vmatprep.subr.mxu0 0.0
        %361 = vmatpush1.msra.mxu0 0.0
        %362 = vmatprep.subr.mxu0 0.0
        %363 = vmatpush1.msra.mxu0 0.0
        %364 = vmatprep.subr.mxu0 0.0
        %365 = vmatpush1.msra.mxu0 0.0
        %366 = vmatprep.subr.mxu0 0.0
        %367 = vmatpush1.msra.mxu0 0.0
        %368 = vmatprep.subr.mxu0 0.0
        %369 = vmatpush1.msra.mxu0 %v336
        %370 = vmatprep.subr.mxu0 0.0
        %371 = vmatpush2.msra.mxu0 0.0
        %372 = vmatprep.subr.mxu0 0.0
        %373 = vmatpush2.msra.mxu0 0.0
        %374 = vmatprep.subr.mxu0 0.0
        %375 = vmatpush2.msra.mxu0 0.0
        %376 = vmatprep.subr.mxu0 0.0
        %377 = vmatpush2.msra.mxu0 0.0
        %378 = vmatprep.subr.mxu0 0.0
        %379 = vmatpush2.msra.mxu0 0.0
        %380 = vmatprep.subr.mxu0 0.0
        %381 = vmatpush2.msra.mxu0 0.0
        %382 = vmatprep.subr.mxu0 0.0
        %383 = vmatpush2.msra.mxu0 0.0
        %384 = vmatprep.subr.mxu0 0.0
        %385 = vmatpush2.msra.mxu0 0.0
        %386 = vmatprep.subr.mxu0 0.0
        %387 = vmatpush2.msra.mxu0 0.0
        %388 = vmatprep.subr.mxu0 0.0
        %389 = vmatpush2.msra.mxu0 0.0
        %390 = vmatprep.subr.mxu0 0.0
        %391 = vmatpush2.msra.mxu0 0.0
        %392 = vmatprep.subr.mxu0 0.0
        %393 = vmatpush2.msra.mxu0 0.0
        %394 = vmatprep.subr.mxu0 0.0
        %395 = vmatpush2.msra.mxu0 0.0
        %396 = vmatprep.subr.mxu0 0.0
        %397 = vmatpush2.msra.mxu0 0.0
        %398 = vmatprep.subr.mxu0 0.0
        %399 = vmatpush2.msra.mxu0 0.0
        %400 = vmatprep.subr.mxu0 0.0
        %401 = vmatpush2.msra.mxu0 0.0
        %402 = vmatprep.mubr.f32.mxu0 0.0
        %403 = vmatmul.mubr.f32.gmra.mxu0 %v287
        %v404 = vpop.f32.mrf.mxu0
        %v405 = vadd.f32 0.0, %v404
        %v406 = vpop.f32.mrf.mxu0
        %407 = vmatprep.mubr.f32.mxu0 0.0
        %408 = vmatmul.mubr.f32.gmra.mxu0 %v290
        %v409 = vpop.f32.mrf.mxu0
        %v410 = vadd.f32 0.0, %v409
        %v411 = vpop.f32.mrf.mxu0
        %412 = vmatprep.mubr.f32.mxu0 0.0
        %413 = vmatmul.mubr.f32.gmra.mxu0 %v293
        %v414 = vpop.f32.mrf.mxu0
        %v415 = vadd.f32 0.0, %v414
        %v416 = vpop.f32.mrf.mxu0
        %417 = vmatprep.mubr.f32.mxu0 0.0
        %418 = vmatmul.mubr.f32.gmra.mxu0 %v296
        %v419 = vpop.f32.mrf.mxu0
        %v420 = vadd.f32 0.0, %v419
        %v421 = vpop.f32.mrf.mxu0
        %422 = vmatprep.mubr.f32.mxu0 0.0
        %423 = vmatmul.mubr.f32.gmra.mxu0 %v299
        %v424 = vpop.f32.mrf.mxu0
        %v425 = vadd.f32 0.0, %v424
        %v426 = vpop.f32.mrf.mxu0
        %427 = vmatprep.mubr.f32.mxu0 0.0
        %428 = vmatmul.mubr.f32.gmra.mxu0 %v302
        %v429 = vpop.f32.mrf.mxu0
        %v430 = vadd.f32 0.0, %v429
        %v431 = vpop.f32.mrf.mxu0
        %432 = vmatprep.mubr.f32.mxu0 0.0
        %433 = vmatmul.mubr.f32.gmra.mxu0 %v305
        %v434 = vpop.f32.mrf.mxu0
        %v435 = vadd.f32 0.0, %v434
        %v436 = vpop.f32.mrf.mxu0
        %437 = vmatprep.mubr.f32.mxu0 0.0
        %438 = vmatmul.mubr.f32.gmra.mxu0 %v308
        %v439 = vpop.f32.mrf.mxu0
        %v440 = vadd.f32 0.0, %v439
        %v441 = vpop.f32.mrf.mxu0
        %442 = vmatprep.mubr.f32.mxu0 0.0
        %443 = vmatmul.mubr.f32.gmra.mxu0 %v311
        %v444 = vpop.f32.mrf.mxu0
        %v445 = vadd.f32 0.0, %v444
        %v446 = vpop.f32.mrf.mxu0
        %447 = vmatprep.mubr.f32.mxu0 0.0
        %448 = vmatmul.mubr.f32.gmra.mxu0 %v314
        %v449 = vpop.f32.mrf.mxu0
        %v450 = vadd.f32 0.0, %v449
        %v451 = vpop.f32.mrf.mxu0
        %452 = vmatprep.mubr.f32.mxu0 0.0
        %453 = vmatmul.mubr.f32.gmra.mxu0 %v317
        %v454 = vpop.f32.mrf.mxu0
        %v455 = vadd.f32 0.0, %v454
        %v456 = vpop.f32.mrf.mxu0
        %457 = vmatprep.mubr.f32.mxu0 0.0
        %458 = vmatmul.mubr.f32.gmra.mxu0 %v320
        %v459 = vpop.f32.mrf.mxu0
        %v460 = vadd.f32 0.0, %v459
        %v461 = vpop.f32.mrf.mxu0
        %462 = vmatprep.mubr.f32.mxu0 0.0
        %463 = vmatmul.mubr.f32.gmra.mxu0 %v323
        %v464 = vpop.f32.mrf.mxu0
        %v465 = vadd.f32 0.0, %v464
        %v466 = vpop.f32.mrf.mxu0
        %467 = vmatprep.mubr.f32.mxu0 0.0
        %468 = vmatmul.mubr.f32.gmra.mxu0 %v326
        %v469 = vpop.f32.mrf.mxu0
        %v470 = vadd.f32 0.0, %v469
        %v471 = vpop.f32.mrf.mxu0
        %472 = vmatprep.mubr.f32.mxu0 0.0
        %473 = vmatmul.mubr.f32.gmra.mxu0 %v329
        %v474 = vpop.f32.mrf.mxu0
        %v475 = vadd.f32 0.0, %v474
        %v476 = vpop.f32.mrf.mxu0
        %477 = vmatprep.mubr.f32.mxu0 0.0
        %478 = vmatmul.mubr.f32.gmra.mxu0 %v332
        %v479 = vpop.f32.mrf.mxu0
        %v480 = vadd.f32 0.0, %v479
        %v481 = vpop.f32.mrf.mxu0
        %482 = vdwg.mxu0
        %v484 = vsel %vm285, %v250, 0
        %v487 = vsel %vm285, %v251, 0
        %v490 = vsel %vm285, %v252, 0
        %v493 = vsel %vm285, %v253, 0
        %v496 = vsel %vm285, %v254, 0
        %v499 = vsel %vm285, %v255, 0
        %v502 = vsel %vm285, %v256, 0
        %v505 = vsel %vm285, %v257, 0
        %v508 = vsel %vm285, %v258, 0
        %v511 = vsel %vm285, %v259, 0
        %v514 = vsel %vm285, %v260, 0
        %v517 = vsel %vm285, %v261, 0
        %v520 = vsel %vm285, %v262, 0
        %v523 = vsel %vm285, %v263, 0
        %v526 = vsel %vm285, %v264, 0
        %v529 = vsel %vm285, %v265, 0
        %v532 = vsel %vm334, %v266, 0
        %534 = vmatprep.subr.mxu0 0.0
        %535 = vmatpush1.msra.mxu0 0.0
        %536 = vmatprep.subr.mxu0 0.0
        %537 = vmatpush1.msra.mxu0 0.0
        %538 = vmatprep.subr.mxu0 0.0
        %539 = vmatpush1.msra.mxu0 0.0
        %540 = vmatprep.subr.mxu0 0.0
        %541 = vmatpush1.msra.mxu0 0.0
        %542 = vmatprep.subr.mxu0 0.0
        %543 = vmatpush1.msra.mxu0 0.0
        %544 = vmatprep.subr.mxu0 0.0
        %545 = vmatpush1.msra.mxu0 0.0
        %546 = vmatprep.subr.mxu0 0.0
        %547 = vmatpush1.msra.mxu0 0.0
        %548 = vmatprep.subr.mxu0 0.0
        %549 = vmatpush1.msra.mxu0 0.0
        %550 = vmatprep.subr.mxu0 0.0
        %551 = vmatpush1.msra.mxu0 0.0
        %552 = vmatprep.subr.mxu0 0.0
        %553 = vmatpush1.msra.mxu0 0.0
        %554 = vmatprep.subr.mxu0 0.0
        %555 = vmatpush1.msra.mxu0 0.0
        %556 = vmatprep.subr.mxu0 0.0
        %557 = vmatpush1.msra.mxu0 0.0
        %558 = vmatprep.subr.mxu0 0.0
        %559 = vmatpush1.msra.mxu0 0.0
        %560 = vmatprep.subr.mxu0 0.0
        %561 = vmatpush1.msra.mxu0 0.0
        %562 = vmatprep.subr.mxu0 0.0
        %563 = vmatpush1.msra.mxu0 0.0
        %564 = vmatprep.subr.mxu0 0.0
        %565 = vmatpush1.msra.mxu0 %v532
        %566 = vmatprep.subr.mxu0 0.0
        %567 = vmatpush2.msra.mxu0 0.0
        %568 = vmatprep.subr.mxu0 0.0
        %569 = vmatpush2.msra.mxu0 0.0
        %570 = vmatprep.subr.mxu0 0.0
        %571 = vmatpush2.msra.mxu0 0.0
        %572 = vmatprep.subr.mxu0 0.0
        %573 = vmatpush2.msra.mxu0 0.0
        %574 = vmatprep.subr.mxu0 0.0
        %575 = vmatpush2.msra.mxu0 0.0
        %576 = vmatprep.subr.mxu0 0.0
        %577 = vmatpush2.msra.mxu0 0.0
        %578 = vmatprep.subr.mxu0 0.0
        %579 = vmatpush2.msra.mxu0 0.0
        %580 = vmatprep.subr.mxu0 0.0
        %581 = vmatpush2.msra.mxu0 0.0
        %582 = vmatprep.subr.mxu0 0.0
        %583 = vmatpush2.msra.mxu0 0.0
        %584 = vmatprep.subr.mxu0 0.0
        %585 = vmatpush2.msra.mxu0 0.0
        %586 = vmatprep.subr.mxu0 0.0
        %587 = vmatpush2.msra.mxu0 0.0
        %588 = vmatprep.subr.mxu0 0.0
        %589 = vmatpush2.msra.mxu0 0.0
        %590 = vmatprep.subr.mxu0 0.0
        %591 = vmatpush2.msra.mxu0 0.0
        %592 = vmatprep.subr.mxu0 0.0
        %593 = vmatpush2.msra.mxu0 0.0
        %594 = vmatprep.subr.mxu0 0.0
        %595 = vmatpush2.msra.mxu0 0.0
        %596 = vmatprep.subr.mxu0 0.0
        %597 = vmatpush2.msra.mxu0 0.0
        %598 = vmatprep.mubr.f32.mxu0 0.0
        %599 = vmatmul.mubr.f32.gmra.mxu0 %v484
        %v600 = vpop.f32.mrf.mxu0
        %v601 = vadd.f32 %v405, %v600
        %v602 = vpop.f32.mrf.mxu0
        %603 = vmatprep.mubr.f32.mxu0 0.0
        %604 = vmatmul.mubr.f32.gmra.mxu0 %v487
        %v605 = vpop.f32.mrf.mxu0
        %v606 = vadd.f32 %v410, %v605
        %v607 = vpop.f32.mrf.mxu0
        %608 = vmatprep.mubr.f32.mxu0 0.0
        %609 = vmatmul.mubr.f32.gmra.mxu0 %v490
        %v610 = vpop.f32.mrf.mxu0
        %v611 = vadd.f32 %v415, %v610
        %v612 = vpop.f32.mrf.mxu0
        %613 = vmatprep.mubr.f32.mxu0 0.0
        %614 = vmatmul.mubr.f32.gmra.mxu0 %v493
        %v615 = vpop.f32.mrf.mxu0
        %v616 = vadd.f32 %v420, %v615
        %v617 = vpop.f32.mrf.mxu0
        %618 = vmatprep.mubr.f32.mxu0 0.0
        %619 = vmatmul.mubr.f32.gmra.mxu0 %v496
        %v620 = vpop.f32.mrf.mxu0
        %v621 = vadd.f32 %v425, %v620
        %v622 = vpop.f32.mrf.mxu0
        %623 = vmatprep.mubr.f32.mxu0 0.0
        %624 = vmatmul.mubr.f32.gmra.mxu0 %v499
        %v625 = vpop.f32.mrf.mxu0
        %v626 = vadd.f32 %v430, %v625
        %v627 = vpop.f32.mrf.mxu0
        %628 = vmatprep.mubr.f32.mxu0 0.0
        %629 = vmatmul.mubr.f32.gmra.mxu0 %v502
        %v630 = vpop.f32.mrf.mxu0
        %v631 = vadd.f32 %v435, %v630
        %v632 = vpop.f32.mrf.mxu0
        %633 = vmatprep.mubr.f32.mxu0 0.0
        %634 = vmatmul.mubr.f32.gmra.mxu0 %v505
        %v635 = vpop.f32.mrf.mxu0
        %v636 = vadd.f32 %v440, %v635
        %v637 = vpop.f32.mrf.mxu0
        %638 = vmatprep.mubr.f32.mxu0 0.0
        %639 = vmatmul.mubr.f32.gmra.mxu0 %v508
        %v640 = vpop.f32.mrf.mxu0
        %v641 = vadd.f32 %v445, %v640
        %v642 = vpop.f32.mrf.mxu0
        %643 = vmatprep.mubr.f32.mxu0 0.0
        %644 = vmatmul.mubr.f32.gmra.mxu0 %v511
        %v645 = vpop.f32.mrf.mxu0
        %v646 = vadd.f32 %v450, %v645
        %v647 = vpop.f32.mrf.mxu0
        %648 = vmatprep.mubr.f32.mxu0 0.0
        %649 = vmatmul.mubr.f32.gmra.mxu0 %v514
        %v650 = vpop.f32.mrf.mxu0
        %v651 = vadd.f32 %v455, %v650
        %v652 = vpop.f32.mrf.mxu0
        %653 = vmatprep.mubr.f32.mxu0 0.0
        %654 = vmatmul.mubr.f32.gmra.mxu0 %v517
        %v655 = vpop.f32.mrf.mxu0
        %v656 = vadd.f32 %v460, %v655
        %v657 = vpop.f32.mrf.mxu0
        %658 = vmatprep.mubr.f32.mxu0 0.0
        %659 = vmatmul.mubr.f32.gmra.mxu0 %v520
        %v660 = vpop.f32.mrf.mxu0
        %v661 = vadd.f32 %v465, %v660
        %v662 = vpop.f32.mrf.mxu0
        %663 = vmatprep.mubr.f32.mxu0 0.0
        %664 = vmatmul.mubr.f32.gmra.mxu0 %v523
        %v665 = vpop.f32.mrf.mxu0
        %v666 = vadd.f32 %v470, %v665
        %v667 = vpop.f32.mrf.mxu0
        %668 = vmatprep.mubr.f32.mxu0 0.0
        %669 = vmatmul.mubr.f32.gmra.mxu0 %v526
        %v670 = vpop.f32.mrf.mxu0
        %v671 = vadd.f32 %v475, %v670
        %v672 = vpop.f32.mrf.mxu0
        %673 = vmatprep.mubr.f32.mxu0 0.0
        %674 = vmatmul.mubr.f32.gmra.mxu0 %v529
        %v675 = vpop.f32.mrf.mxu0
        %v676 = vadd.f32 %v480, %v675
        %v677 = vpop.f32.mrf.mxu0
        %678 = vdwg.mxu0
        %v679 = vld [vmem:[%s249 + $0x2] sm:$0xff]
        %v680 = vld [vmem:[%s249 + $0xa] sm:$0xff]
        %v681 = vld [vmem:[%s249 + $0x12] sm:$0xff]
        %v682 = vld [vmem:[%s249 + $0x1a] sm:$0xff]
        %v683 = vld [vmem:[%s249 + $0x22] sm:$0xff]
        %v684 = vld [vmem:[%s249 + $0x2a] sm:$0xff]
        %v685 = vld [vmem:[%s249 + $0x32] sm:$0xff]
        %v686 = vld [vmem:[%s249 + $0x3a] sm:$0xff]
        %v687 = vld [vmem:[%s249 + $0x42] sm:$0xff]
        %v688 = vld [vmem:[%s249 + $0x4a] sm:$0xff]
        %v689 = vld [vmem:[%s249 + $0x52] sm:$0xff]
        %v690 = vld [vmem:[%s249 + $0x5a] sm:$0xff]
        %v691 = vld [vmem:[%s249 + $0x62] sm:$0xff]
        %v692 = vld [vmem:[%s249 + $0x6a] sm:$0xff]
        %v693 = vld [vmem:[%s249 + $0x72] sm:$0xff]
        %v694 = vld [vmem:[%s249 + $0x7a] sm:$0x3f]
        %s695 = scalar_lea.vmem %s1, 8
        %v696 = vld [vmem:[%s695] sm:$0xf]
        %v698 = vsel %vm285, %v679, 0
        %v701 = vsel %vm285, %v680, 0
        %v704 = vsel %vm285, %v681, 0
        %v707 = vsel %vm285, %v682, 0
        %v710 = vsel %vm285, %v683, 0
        %v713 = vsel %vm285, %v684, 0
        %v716 = vsel %vm285, %v685, 0
        %v719 = vsel %vm285, %v686, 0
        %v722 = vsel %vm285, %v687, 0
        %v725 = vsel %vm285, %v688, 0
        %v728 = vsel %vm285, %v689, 0
        %v731 = vsel %vm285, %v690, 0
        %v734 = vsel %vm285, %v691, 0
        %v737 = vsel %vm285, %v692, 0
        %v740 = vsel %vm285, %v693, 0
        %v743 = vsel %vm285, %v694, 0
        %v746 = vsel %vm334, %v696, 0
        %748 = vmatprep.subr.mxu0 0.0
        %749 = vmatpush1.msra.mxu0 0.0
        %750 = vmatprep.subr.mxu0 0.0
        %751 = vmatpush1.msra.mxu0 0.0
        %752 = vmatprep.subr.mxu0 0.0
        %753 = vmatpush1.msra.mxu0 0.0
        %754 = vmatprep.subr.mxu0 0.0
        %755 = vmatpush1.msra.mxu0 0.0
        %756 = vmatprep.subr.mxu0 0.0
        %757 = vmatpush1.msra.mxu0 0.0
        %758 = vmatprep.subr.mxu0 0.0
        %759 = vmatpush1.msra.mxu0 0.0
        %760 = vmatprep.subr.mxu0 0.0
        %761 = vmatpush1.msra.mxu0 0.0
        %762 = vmatprep.subr.mxu0 0.0
        %763 = vmatpush1.msra.mxu0 0.0
        %764 = vmatprep.subr.mxu0 0.0
        %765 = vmatpush1.msra.mxu0 0.0
        %766 = vmatprep.subr.mxu0 0.0
        %767 = vmatpush1.msra.mxu0 0.0
        %768 = vmatprep.subr.mxu0 0.0
        %769 = vmatpush1.msra.mxu0 0.0
        %770 = vmatprep.subr.mxu0 0.0
        %771 = vmatpush1.msra.mxu0 0.0
        %772 = vmatprep.subr.mxu0 0.0
        %773 = vmatpush1.msra.mxu0 0.0
        %774 = vmatprep.subr.mxu0 0.0
        %775 = vmatpush1.msra.mxu0 0.0
        %776 = vmatprep.subr.mxu0 0.0
        %777 = vmatpush1.msra.mxu0 0.0
        %778 = vmatprep.subr.mxu0 0.0
        %779 = vmatpush1.msra.mxu0 %v746
        %780 = vmatprep.subr.mxu0 0.0
        %781 = vmatpush2.msra.mxu0 0.0
        %782 = vmatprep.subr.mxu0 0.0
        %783 = vmatpush2.msra.mxu0 0.0
        %784 = vmatprep.subr.mxu0 0.0
        %785 = vmatpush2.msra.mxu0 0.0
        %786 = vmatprep.subr.mxu0 0.0
        %787 = vmatpush2.msra.mxu0 0.0
        %788 = vmatprep.subr.mxu0 0.0
        %789 = vmatpush2.msra.mxu0 0.0
        %790 = vmatprep.subr.mxu0 0.0
        %791 = vmatpush2.msra.mxu0 0.0
        %792 = vmatprep.subr.mxu0 0.0
        %793 = vmatpush2.msra.mxu0 0.0
        %794 = vmatprep.subr.mxu0 0.0
        %795 = vmatpush2.msra.mxu0 0.0
        %796 = vmatprep.subr.mxu0 0.0
        %797 = vmatpush2.msra.mxu0 0.0
        %798 = vmatprep.subr.mxu0 0.0
        %799 = vmatpush2.msra.mxu0 0.0
        %800 = vmatprep.subr.mxu0 0.0
        %801 = vmatpush2.msra.mxu0 0.0
        %802 = vmatprep.subr.mxu0 0.0
        %803 = vmatpush2.msra.mxu0 0.0
        %804 = vmatprep.subr.mxu0 0.0
        %805 = vmatpush2.msra.mxu0 0.0
        %806 = vmatprep.subr.mxu0 0.0
        %807 = vmatpush2.msra.mxu0 0.0
        %808 = vmatprep.subr.mxu0 0.0
        %809 = vmatpush2.msra.mxu0 0.0
        %810 = vmatprep.subr.mxu0 0.0
        %811 = vmatpush2.msra.mxu0 0.0
        %812 = vmatprep.mubr.f32.mxu0 0.0
        %813 = vmatmul.mubr.f32.gmra.mxu0 %v698
        %v814 = vpop.f32.mrf.mxu0
        %v815 = vadd.f32 0.0, %v814
        %v816 = vpop.f32.mrf.mxu0
        %817 = vmatprep.mubr.f32.mxu0 0.0
        %818 = vmatmul.mubr.f32.gmra.mxu0 %v701
        %v819 = vpop.f32.mrf.mxu0
        %v820 = vadd.f32 0.0, %v819
        %v821 = vpop.f32.mrf.mxu0
        %822 = vmatprep.mubr.f32.mxu0 0.0
        %823 = vmatmul.mubr.f32.gmra.mxu0 %v704
        %v824 = vpop.f32.mrf.mxu0
        %v825 = vadd.f32 0.0, %v824
        %v826 = vpop.f32.mrf.mxu0
        %827 = vmatprep.mubr.f32.mxu0 0.0
        %828 = vmatmul.mubr.f32.gmra.mxu0 %v707
        %v829 = vpop.f32.mrf.mxu0
        %v830 = vadd.f32 0.0, %v829
        %v831 = vpop.f32.mrf.mxu0
        %832 = vmatprep.mubr.f32.mxu0 0.0
        %833 = vmatmul.mubr.f32.gmra.mxu0 %v710
        %v834 = vpop.f32.mrf.mxu0
        %v835 = vadd.f32 0.0, %v834
        %v836 = vpop.f32.mrf.mxu0
        %837 = vmatprep.mubr.f32.mxu0 0.0
        %838 = vmatmul.mubr.f32.gmra.mxu0 %v713
        %v839 = vpop.f32.mrf.mxu0
        %v840 = vadd.f32 0.0, %v839
        %v841 = vpop.f32.mrf.mxu0
        %842 = vmatprep.mubr.f32.mxu0 0.0
        %843 = vmatmul.mubr.f32.gmra.mxu0 %v716
        %v844 = vpop.f32.mrf.mxu0
        %v845 = vadd.f32 0.0, %v844
        %v846 = vpop.f32.mrf.mxu0
        %847 = vmatprep.mubr.f32.mxu0 0.0
        %848 = vmatmul.mubr.f32.gmra.mxu0 %v719
        %v849 = vpop.f32.mrf.mxu0
        %v850 = vadd.f32 0.0, %v849
        %v851 = vpop.f32.mrf.mxu0
        %852 = vmatprep.mubr.f32.mxu0 0.0
        %853 = vmatmul.mubr.f32.gmra.mxu0 %v722
        %v854 = vpop.f32.mrf.mxu0
        %v855 = vadd.f32 0.0, %v854
        %v856 = vpop.f32.mrf.mxu0
        %857 = vmatprep.mubr.f32.mxu0 0.0
        %858 = vmatmul.mubr.f32.gmra.mxu0 %v725
        %v859 = vpop.f32.mrf.mxu0
        %v860 = vadd.f32 0.0, %v859
        %v861 = vpop.f32.mrf.mxu0
        %862 = vmatprep.mubr.f32.mxu0 0.0
        %863 = vmatmul.mubr.f32.gmra.mxu0 %v728
        %v864 = vpop.f32.mrf.mxu0
        %v865 = vadd.f32 0.0, %v864
        %v866 = vpop.f32.mrf.mxu0
        %867 = vmatprep.mubr.f32.mxu0 0.0
        %868 = vmatmul.mubr.f32.gmra.mxu0 %v731
        %v869 = vpop.f32.mrf.mxu0
        %v870 = vadd.f32 0.0, %v869
        %v871 = vpop.f32.mrf.mxu0
        %872 = vmatprep.mubr.f32.mxu0 0.0
        %873 = vmatmul.mubr.f32.gmra.mxu0 %v734
        %v874 = vpop.f32.mrf.mxu0
        %v875 = vadd.f32 0.0, %v874
        %v876 = vpop.f32.mrf.mxu0
        %877 = vmatprep.mubr.f32.mxu0 0.0
        %878 = vmatmul.mubr.f32.gmra.mxu0 %v737
        %v879 = vpop.f32.mrf.mxu0
        %v880 = vadd.f32 0.0, %v879
        %v881 = vpop.f32.mrf.mxu0
        %882 = vmatprep.mubr.f32.mxu0 0.0
        %883 = vmatmul.mubr.f32.gmra.mxu0 %v740
        %v884 = vpop.f32.mrf.mxu0
        %v885 = vadd.f32 0.0, %v884
        %v886 = vpop.f32.mrf.mxu0
        %887 = vmatprep.mubr.f32.mxu0 0.0
        %888 = vmatmul.mubr.f32.gmra.mxu0 %v743
        %v889 = vpop.f32.mrf.mxu0
        %v890 = vadd.f32 0.0, %v889
        %v891 = vpop.f32.mrf.mxu0
        %892 = vdwg.mxu0
        %v893 = vadd.f32 %v601, %v815
        %v894 = vadd.f32 %v606, %v820
        %v895 = vadd.f32 %v611, %v825
        %v896 = vadd.f32 %v616, %v830
        %v897 = vadd.f32 %v621, %v835
        %v898 = vadd.f32 %v626, %v840
        %v899 = vadd.f32 %v631, %v845
        %v900 = vadd.f32 %v636, %v850
        %v901 = vadd.f32 %v641, %v855
        %v902 = vadd.f32 %v646, %v860
        %v903 = vadd.f32 %v651, %v865
        %v904 = vadd.f32 %v656, %v870
        %v905 = vadd.f32 %v661, %v875
        %v906 = vadd.f32 %v666, %v880
        %v907 = vadd.f32 %v671, %v885
        %v908 = vadd.f32 %v676, %v890
        %v909 = vld [vmem:[%s249 + $0x3] sm:$0xff]
        %v910 = vld [vmem:[%s249 + $0xb] sm:$0xff]
        %v911 = vld [vmem:[%s249 + $0x13] sm:$0xff]
        %v912 = vld [vmem:[%s249 + $0x1b] sm:$0xff]
        %v913 = vld [vmem:[%s249 + $0x23] sm:$0xff]
        %v914 = vld [vmem:[%s249 + $0x2b] sm:$0xff]
        %v915 = vld [vmem:[%s249 + $0x33] sm:$0xff]
        %v916 = vld [vmem:[%s249 + $0x3b] sm:$0xff]
        %v917 = vld [vmem:[%s249 + $0x43] sm:$0xff]
        %v918 = vld [vmem:[%s249 + $0x4b] sm:$0xff]
        %v919 = vld [vmem:[%s249 + $0x53] sm:$0xff]
        %v920 = vld [vmem:[%s249 + $0x5b] sm:$0xff]
        %v921 = vld [vmem:[%s249 + $0x63] sm:$0xff]
        %v922 = vld [vmem:[%s249 + $0x6b] sm:$0xff]
        %v923 = vld [vmem:[%s249 + $0x73] sm:$0xff]
        %v924 = vld [vmem:[%s249 + $0x7b] sm:$0x3f]
        %s925 = scalar_lea.vmem %s1, 12
        %v926 = vld [vmem:[%s925] sm:$0xf]
        %v928 = vsel %vm285, %v909, 0
        %v931 = vsel %vm285, %v910, 0
        %v934 = vsel %vm285, %v911, 0
        %v937 = vsel %vm285, %v912, 0
        %v940 = vsel %vm285, %v913, 0
        %v943 = vsel %vm285, %v914, 0
        %v946 = vsel %vm285, %v915, 0
        %v949 = vsel %vm285, %v916, 0
        %v952 = vsel %vm285, %v917, 0
        %v955 = vsel %vm285, %v918, 0
        %v958 = vsel %vm285, %v919, 0
        %v961 = vsel %vm285, %v920, 0
        %v964 = vsel %vm285, %v921, 0
        %v967 = vsel %vm285, %v922, 0
        %v970 = vsel %vm285, %v923, 0
        %v973 = vsel %vm285, %v924, 0
        %v976 = vsel %vm334, %v926, 0
        %978 = vmatprep.subr.mxu0 0.0
        %979 = vmatpush1.msra.mxu0 0.0
        %980 = vmatprep.subr.mxu0 0.0
        %981 = vmatpush1.msra.mxu0 0.0
        %982 = vmatprep.subr.mxu0 0.0
        %983 = vmatpush1.msra.mxu0 0.0
        %984 = vmatprep.subr.mxu0 0.0
        %985 = vmatpush1.msra.mxu0 0.0
        %986 = vmatprep.subr.mxu0 0.0
        %987 = vmatpush1.msra.mxu0 0.0
        %988 = vmatprep.subr.mxu0 0.0
        %989 = vmatpush1.msra.mxu0 0.0
        %990 = vmatprep.subr.mxu0 0.0
        %991 = vmatpush1.msra.mxu0 0.0
        %992 = vmatprep.subr.mxu0 0.0
        %993 = vmatpush1.msra.mxu0 0.0
        %994 = vmatprep.subr.mxu0 0.0
        %995 = vmatpush1.msra.mxu0 0.0
        %996 = vmatprep.subr.mxu0 0.0
        %997 = vmatpush1.msra.mxu0 0.0
        %998 = vmatprep.subr.mxu0 0.0
        %999 = vmatpush1.msra.mxu0 0.0
        %1000 = vmatprep.subr.mxu0 0.0
        %1001 = vmatpush1.msra.mxu0 0.0
        %1002 = vmatprep.subr.mxu0 0.0
        %1003 = vmatpush1.msra.mxu0 0.0
        %1004 = vmatprep.subr.mxu0 0.0
        %1005 = vmatpush1.msra.mxu0 0.0
        %1006 = vmatprep.subr.mxu0 0.0
        %1007 = vmatpush1.msra.mxu0 0.0
        %1008 = vmatprep.subr.mxu0 0.0
        %1009 = vmatpush1.msra.mxu0 %v976
        %1010 = vmatprep.subr.mxu0 0.0
        %1011 = vmatpush2.msra.mxu0 0.0
        %1012 = vmatprep.subr.mxu0 0.0
        %1013 = vmatpush2.msra.mxu0 0.0
        %1014 = vmatprep.subr.mxu0 0.0
        %1015 = vmatpush2.msra.mxu0 0.0
        %1016 = vmatprep.subr.mxu0 0.0
        %1017 = vmatpush2.msra.mxu0 0.0
        %1018 = vmatprep.subr.mxu0 0.0
        %1019 = vmatpush2.msra.mxu0 0.0
        %1020 = vmatprep.subr.mxu0 0.0
        %1021 = vmatpush2.msra.mxu0 0.0
        %1022 = vmatprep.subr.mxu0 0.0
        %1023 = vmatpush2.msra.mxu0 0.0
        %1024 = vmatprep.subr.mxu0 0.0
        %1025 = vmatpush2.msra.mxu0 0.0
        %1026 = vmatprep.subr.mxu0 0.0
        %1027 = vmatpush2.msra.mxu0 0.0
        %1028 = vmatprep.subr.mxu0 0.0
        %1029 = vmatpush2.msra.mxu0 0.0
        %1030 = vmatprep.subr.mxu0 0.0
        %1031 = vmatpush2.msra.mxu0 0.0
        %1032 = vmatprep.subr.mxu0 0.0
        %1033 = vmatpush2.msra.mxu0 0.0
        %1034 = vmatprep.subr.mxu0 0.0
        %1035 = vmatpush2.msra.mxu0 0.0
        %1036 = vmatprep.subr.mxu0 0.0
        %1037 = vmatpush2.msra.mxu0 0.0
        %1038 = vmatprep.subr.mxu0 0.0
        %1039 = vmatpush2.msra.mxu0 0.0
        %1040 = vmatprep.subr.mxu0 0.0
        %1041 = vmatpush2.msra.mxu0 0.0
        %1042 = vmatprep.mubr.f32.mxu0 0.0
        %1043 = vmatmul.mubr.f32.gmra.mxu0 %v928
        %v1044 = vpop.f32.mrf.mxu0
        %v1045 = vadd.f32 0.0, %v1044
        %v1046 = vpop.f32.mrf.mxu0
        %1047 = vmatprep.mubr.f32.mxu0 0.0
        %1048 = vmatmul.mubr.f32.gmra.mxu0 %v931
        %v1049 = vpop.f32.mrf.mxu0
        %v1050 = vadd.f32 0.0, %v1049
        %v1051 = vpop.f32.mrf.mxu0
        %1052 = vmatprep.mubr.f32.mxu0 0.0
        %1053 = vmatmul.mubr.f32.gmra.mxu0 %v934
        %v1054 = vpop.f32.mrf.mxu0
        %v1055 = vadd.f32 0.0, %v1054
        %v1056 = vpop.f32.mrf.mxu0
        %1057 = vmatprep.mubr.f32.mxu0 0.0
        %1058 = vmatmul.mubr.f32.gmra.mxu0 %v937
        %v1059 = vpop.f32.mrf.mxu0
        %v1060 = vadd.f32 0.0, %v1059
        %v1061 = vpop.f32.mrf.mxu0
        %1062 = vmatprep.mubr.f32.mxu0 0.0
        %1063 = vmatmul.mubr.f32.gmra.mxu0 %v940
        %v1064 = vpop.f32.mrf.mxu0
        %v1065 = vadd.f32 0.0, %v1064
        %v1066 = vpop.f32.mrf.mxu0
        %1067 = vmatprep.mubr.f32.mxu0 0.0
        %1068 = vmatmul.mubr.f32.gmra.mxu0 %v943
        %v1069 = vpop.f32.mrf.mxu0
        %v1070 = vadd.f32 0.0, %v1069
        %v1071 = vpop.f32.mrf.mxu0
        %1072 = vmatprep.mubr.f32.mxu0 0.0
        %1073 = vmatmul.mubr.f32.gmra.mxu0 %v946
        %v1074 = vpop.f32.mrf.mxu0
        %v1075 = vadd.f32 0.0, %v1074
        %v1076 = vpop.f32.mrf.mxu0
        %1077 = vmatprep.mubr.f32.mxu0 0.0
        %1078 = vmatmul.mubr.f32.gmra.mxu0 %v949
        %v1079 = vpop.f32.mrf.mxu0
        %v1080 = vadd.f32 0.0, %v1079
        %v1081 = vpop.f32.mrf.mxu0
        %1082 = vmatprep.mubr.f32.mxu0 0.0
        %1083 = vmatmul.mubr.f32.gmra.mxu0 %v952
        %v1084 = vpop.f32.mrf.mxu0
        %v1085 = vadd.f32 0.0, %v1084
        %v1086 = vpop.f32.mrf.mxu0
        %1087 = vmatprep.mubr.f32.mxu0 0.0
        %1088 = vmatmul.mubr.f32.gmra.mxu0 %v955
        %v1089 = vpop.f32.mrf.mxu0
        %v1090 = vadd.f32 0.0, %v1089
        %v1091 = vpop.f32.mrf.mxu0
        %1092 = vmatprep.mubr.f32.mxu0 0.0
        %1093 = vmatmul.mubr.f32.gmra.mxu0 %v958
        %v1094 = vpop.f32.mrf.mxu0
        %v1095 = vadd.f32 0.0, %v1094
        %v1096 = vpop.f32.mrf.mxu0
        %1097 = vmatprep.mubr.f32.mxu0 0.0
        %1098 = vmatmul.mubr.f32.gmra.mxu0 %v961
        %v1099 = vpop.f32.mrf.mxu0
        %v1100 = vadd.f32 0.0, %v1099
        %v1101 = vpop.f32.mrf.mxu0
        %1102 = vmatprep.mubr.f32.mxu0 0.0
        %1103 = vmatmul.mubr.f32.gmra.mxu0 %v964
        %v1104 = vpop.f32.mrf.mxu0
        %v1105 = vadd.f32 0.0, %v1104
        %v1106 = vpop.f32.mrf.mxu0
        %1107 = vmatprep.mubr.f32.mxu0 0.0
        %1108 = vmatmul.mubr.f32.gmra.mxu0 %v967
        %v1109 = vpop.f32.mrf.mxu0
        %v1110 = vadd.f32 0.0, %v1109
        %v1111 = vpop.f32.mrf.mxu0
        %1112 = vmatprep.mubr.f32.mxu0 0.0
        %1113 = vmatmul.mubr.f32.gmra.mxu0 %v970
        %v1114 = vpop.f32.mrf.mxu0
        %v1115 = vadd.f32 0.0, %v1114
        %v1116 = vpop.f32.mrf.mxu0
        %1117 = vmatprep.mubr.f32.mxu0 0.0
        %1118 = vmatmul.mubr.f32.gmra.mxu0 %v973
        %v1119 = vpop.f32.mrf.mxu0
        %v1120 = vadd.f32 0.0, %v1119
        %v1121 = vpop.f32.mrf.mxu0
        %1122 = vdwg.mxu0
        %v1123 = vadd.f32 %v893, %v1045
        %v1124 = vadd.f32 %v894, %v1050
        %v1125 = vadd.f32 %v895, %v1055
        %v1126 = vadd.f32 %v896, %v1060
        %v1127 = vadd.f32 %v897, %v1065
        %v1128 = vadd.f32 %v898, %v1070
        %v1129 = vadd.f32 %v899, %v1075
        %v1130 = vadd.f32 %v900, %v1080
        %v1131 = vadd.f32 %v901, %v1085
        %v1132 = vadd.f32 %v902, %v1090
        %v1133 = vadd.f32 %v903, %v1095
        %v1134 = vadd.f32 %v904, %v1100
        %v1135 = vadd.f32 %v905, %v1105
        %v1136 = vadd.f32 %v906, %v1110
        %v1137 = vadd.f32 %v907, %v1115
        %v1138 = vadd.f32 %v908, %v1120
        %v1139 = vld [vmem:[%s249 + $0x4] sm:$0xff]
        %v1140 = vld [vmem:[%s249 + $0xc] sm:$0xff]
        %v1141 = vld [vmem:[%s249 + $0x14] sm:$0xff]
        %v1142 = vld [vmem:[%s249 + $0x1c] sm:$0xff]
        %v1143 = vld [vmem:[%s249 + $0x24] sm:$0xff]
        %v1144 = vld [vmem:[%s249 + $0x2c] sm:$0xff]
        %v1145 = vld [vmem:[%s249 + $0x34] sm:$0xff]
        %v1146 = vld [vmem:[%s249 + $0x3c] sm:$0xff]
        %v1147 = vld [vmem:[%s249 + $0x44] sm:$0xff]
        %v1148 = vld [vmem:[%s249 + $0x4c] sm:$0xff]
        %v1149 = vld [vmem:[%s249 + $0x54] sm:$0xff]
        %v1150 = vld [vmem:[%s249 + $0x5c] sm:$0xff]
        %v1151 = vld [vmem:[%s249 + $0x64] sm:$0xff]
        %v1152 = vld [vmem:[%s249 + $0x6c] sm:$0xff]
        %v1153 = vld [vmem:[%s249 + $0x74] sm:$0xff]
        %v1154 = vld [vmem:[%s249 + $0x7c] sm:$0x3f]
        %s1155 = scalar_lea.vmem %s1, 16
        %v1156 = vld [vmem:[%s1155] sm:$0xf]
        %v1158 = vsel %vm285, %v1139, 0
        %v1161 = vsel %vm285, %v1140, 0
        %v1164 = vsel %vm285, %v1141, 0
        %v1167 = vsel %vm285, %v1142, 0
        %v1170 = vsel %vm285, %v1143, 0
        %v1173 = vsel %vm285, %v1144, 0
        %v1176 = vsel %vm285, %v1145, 0
        %v1179 = vsel %vm285, %v1146, 0
        %v1182 = vsel %vm285, %v1147, 0
        %v1185 = vsel %vm285, %v1148, 0
        %v1188 = vsel %vm285, %v1149, 0
        %v1191 = vsel %vm285, %v1150, 0
        %v1194 = vsel %vm285, %v1151, 0
        %v1197 = vsel %vm285, %v1152, 0
        %v1200 = vsel %vm285, %v1153, 0
        %v1203 = vsel %vm285, %v1154, 0
        %v1206 = vsel %vm334, %v1156, 0
        %1208 = vmatprep.subr.mxu0 0.0
        %1209 = vmatpush1.msra.mxu0 0.0
        %1210 = vmatprep.subr.mxu0 0.0
        %1211 = vmatpush1.msra.mxu0 0.0
        %1212 = vmatprep.subr.mxu0 0.0
        %1213 = vmatpush1.msra.mxu0 0.0
        %1214 = vmatprep.subr.mxu0 0.0
        %1215 = vmatpush1.msra.mxu0 0.0
        %1216 = vmatprep.subr.mxu0 0.0
        %1217 = vmatpush1.msra.mxu0 0.0
        %1218 = vmatprep.subr.mxu0 0.0
        %1219 = vmatpush1.msra.mxu0 0.0
        %1220 = vmatprep.subr.mxu0 0.0
        %1221 = vmatpush1.msra.mxu0 0.0
        %1222 = vmatprep.subr.mxu0 0.0
        %1223 = vmatpush1.msra.mxu0 0.0
        %1224 = vmatprep.subr.mxu0 0.0
        %1225 = vmatpush1.msra.mxu0 0.0
        %1226 = vmatprep.subr.mxu0 0.0
        %1227 = vmatpush1.msra.mxu0 0.0
        %1228 = vmatprep.subr.mxu0 0.0
        %1229 = vmatpush1.msra.mxu0 0.0
        %1230 = vmatprep.subr.mxu0 0.0
        %1231 = vmatpush1.msra.mxu0 0.0
        %1232 = vmatprep.subr.mxu0 0.0
        %1233 = vmatpush1.msra.mxu0 0.0
        %1234 = vmatprep.subr.mxu0 0.0
        %1235 = vmatpush1.msra.mxu0 0.0
        %1236 = vmatprep.subr.mxu0 0.0
        %1237 = vmatpush1.msra.mxu0 0.0
        %1238 = vmatprep.subr.mxu0 0.0
        %1239 = vmatpush1.msra.mxu0 %v1206
        %1240 = vmatprep.subr.mxu0 0.0
        %1241 = vmatpush2.msra.mxu0 0.0
        %1242 = vmatprep.subr.mxu0 0.0
        %1243 = vmatpush2.msra.mxu0 0.0
        %1244 = vmatprep.subr.mxu0 0.0
        %1245 = vmatpush2.msra.mxu0 0.0
        %1246 = vmatprep.subr.mxu0 0.0
        %1247 = vmatpush2.msra.mxu0 0.0
        %1248 = vmatprep.subr.mxu0 0.0
        %1249 = vmatpush2.msra.mxu0 0.0
        %1250 = vmatprep.subr.mxu0 0.0
        %1251 = vmatpush2.msra.mxu0 0.0
        %1252 = vmatprep.subr.mxu0 0.0
        %1253 = vmatpush2.msra.mxu0 0.0
        %1254 = vmatprep.subr.mxu0 0.0
        %1255 = vmatpush2.msra.mxu0 0.0
        %1256 = vmatprep.subr.mxu0 0.0
        %1257 = vmatpush2.msra.mxu0 0.0
        %1258 = vmatprep.subr.mxu0 0.0
        %1259 = vmatpush2.msra.mxu0 0.0
        %1260 = vmatprep.subr.mxu0 0.0
        %1261 = vmatpush2.msra.mxu0 0.0
        %1262 = vmatprep.subr.mxu0 0.0
        %1263 = vmatpush2.msra.mxu0 0.0
        %1264 = vmatprep.subr.mxu0 0.0
        %1265 = vmatpush2.msra.mxu0 0.0
        %1266 = vmatprep.subr.mxu0 0.0
        %1267 = vmatpush2.msra.mxu0 0.0
        %1268 = vmatprep.subr.mxu0 0.0
        %1269 = vmatpush2.msra.mxu0 0.0
        %1270 = vmatprep.subr.mxu0 0.0
        %1271 = vmatpush2.msra.mxu0 0.0
        %1272 = vmatprep.mubr.f32.mxu0 0.0
        %1273 = vmatmul.mubr.f32.gmra.mxu0 %v1158
        %v1274 = vpop.f32.mrf.mxu0
        %v1275 = vadd.f32 0.0, %v1274
        %v1276 = vpop.f32.mrf.mxu0
        %1277 = vmatprep.mubr.f32.mxu0 0.0
        %1278 = vmatmul.mubr.f32.gmra.mxu0 %v1161
        %v1279 = vpop.f32.mrf.mxu0
        %v1280 = vadd.f32 0.0, %v1279
        %v1281 = vpop.f32.mrf.mxu0
        %1282 = vmatprep.mubr.f32.mxu0 0.0
        %1283 = vmatmul.mubr.f32.gmra.mxu0 %v1164
        %v1284 = vpop.f32.mrf.mxu0
        %v1285 = vadd.f32 0.0, %v1284
        %v1286 = vpop.f32.mrf.mxu0
        %1287 = vmatprep.mubr.f32.mxu0 0.0
        %1288 = vmatmul.mubr.f32.gmra.mxu0 %v1167
        %v1289 = vpop.f32.mrf.mxu0
        %v1290 = vadd.f32 0.0, %v1289
        %v1291 = vpop.f32.mrf.mxu0
        %1292 = vmatprep.mubr.f32.mxu0 0.0
        %1293 = vmatmul.mubr.f32.gmra.mxu0 %v1170
        %v1294 = vpop.f32.mrf.mxu0
        %v1295 = vadd.f32 0.0, %v1294
        %v1296 = vpop.f32.mrf.mxu0
        %1297 = vmatprep.mubr.f32.mxu0 0.0
        %1298 = vmatmul.mubr.f32.gmra.mxu0 %v1173
        %v1299 = vpop.f32.mrf.mxu0
        %v1300 = vadd.f32 0.0, %v1299
        %v1301 = vpop.f32.mrf.mxu0
        %1302 = vmatprep.mubr.f32.mxu0 0.0
        %1303 = vmatmul.mubr.f32.gmra.mxu0 %v1176
        %v1304 = vpop.f32.mrf.mxu0
        %v1305 = vadd.f32 0.0, %v1304
        %v1306 = vpop.f32.mrf.mxu0
        %1307 = vmatprep.mubr.f32.mxu0 0.0
        %1308 = vmatmul.mubr.f32.gmra.mxu0 %v1179
        %v1309 = vpop.f32.mrf.mxu0
        %v1310 = vadd.f32 0.0, %v1309
        %v1311 = vpop.f32.mrf.mxu0
        %1312 = vmatprep.mubr.f32.mxu0 0.0
        %1313 = vmatmul.mubr.f32.gmra.mxu0 %v1182
        %v1314 = vpop.f32.mrf.mxu0
        %v1315 = vadd.f32 0.0, %v1314
        %v1316 = vpop.f32.mrf.mxu0
        %1317 = vmatprep.mubr.f32.mxu0 0.0
        %1318 = vmatmul.mubr.f32.gmra.mxu0 %v1185
        %v1319 = vpop.f32.mrf.mxu0
        %v1320 = vadd.f32 0.0, %v1319
        %v1321 = vpop.f32.mrf.mxu0
        %1322 = vmatprep.mubr.f32.mxu0 0.0
        %1323 = vmatmul.mubr.f32.gmra.mxu0 %v1188
        %v1324 = vpop.f32.mrf.mxu0
        %v1325 = vadd.f32 0.0, %v1324
        %v1326 = vpop.f32.mrf.mxu0
        %1327 = vmatprep.mubr.f32.mxu0 0.0
        %1328 = vmatmul.mubr.f32.gmra.mxu0 %v1191
        %v1329 = vpop.f32.mrf.mxu0
        %v1330 = vadd.f32 0.0, %v1329
        %v1331 = vpop.f32.mrf.mxu0
        %1332 = vmatprep.mubr.f32.mxu0 0.0
        %1333 = vmatmul.mubr.f32.gmra.mxu0 %v1194
        %v1334 = vpop.f32.mrf.mxu0
        %v1335 = vadd.f32 0.0, %v1334
        %v1336 = vpop.f32.mrf.mxu0
        %1337 = vmatprep.mubr.f32.mxu0 0.0
        %1338 = vmatmul.mubr.f32.gmra.mxu0 %v1197
        %v1339 = vpop.f32.mrf.mxu0
        %v1340 = vadd.f32 0.0, %v1339
        %v1341 = vpop.f32.mrf.mxu0
        %1342 = vmatprep.mubr.f32.mxu0 0.0
        %1343 = vmatmul.mubr.f32.gmra.mxu0 %v1200
        %v1344 = vpop.f32.mrf.mxu0
        %v1345 = vadd.f32 0.0, %v1344
        %v1346 = vpop.f32.mrf.mxu0
        %1347 = vmatprep.mubr.f32.mxu0 0.0
        %1348 = vmatmul.mubr.f32.gmra.mxu0 %v1203
        %v1349 = vpop.f32.mrf.mxu0
        %v1350 = vadd.f32 0.0, %v1349
        %v1351 = vpop.f32.mrf.mxu0
        %1352 = vdwg.mxu0
        %v1353 = vadd.f32 %v1123, %v1275
        %v1354 = vadd.f32 %v1124, %v1280
        %v1355 = vadd.f32 %v1125, %v1285
        %v1356 = vadd.f32 %v1126, %v1290
        %v1357 = vadd.f32 %v1127, %v1295
        %v1358 = vadd.f32 %v1128, %v1300
        %v1359 = vadd.f32 %v1129, %v1305
        %v1360 = vadd.f32 %v1130, %v1310
        %v1361 = vadd.f32 %v1131, %v1315
        %v1362 = vadd.f32 %v1132, %v1320
        %v1363 = vadd.f32 %v1133, %v1325
        %v1364 = vadd.f32 %v1134, %v1330
        %v1365 = vadd.f32 %v1135, %v1335
        %v1366 = vadd.f32 %v1136, %v1340
        %v1367 = vadd.f32 %v1137, %v1345
        %v1368 = vadd.f32 %v1138, %v1350
        %v1369 = vld [vmem:[%s249 + $0x5] sm:$0xff]
        %v1370 = vld [vmem:[%s249 + $0xd] sm:$0xff]
        %v1371 = vld [vmem:[%s249 + $0x15] sm:$0xff]
        %v1372 = vld [vmem:[%s249 + $0x1d] sm:$0xff]
        %v1373 = vld [vmem:[%s249 + $0x25] sm:$0xff]
        %v1374 = vld [vmem:[%s249 + $0x2d] sm:$0xff]
        %v1375 = vld [vmem:[%s249 + $0x35] sm:$0xff]
        %v1376 = vld [vmem:[%s249 + $0x3d] sm:$0xff]
        %v1377 = vld [vmem:[%s249 + $0x45] sm:$0xff]
        %v1378 = vld [vmem:[%s249 + $0x4d] sm:$0xff]
        %v1379 = vld [vmem:[%s249 + $0x55] sm:$0xff]
        %v1380 = vld [vmem:[%s249 + $0x5d] sm:$0xff]
        %v1381 = vld [vmem:[%s249 + $0x65] sm:$0xff]
        %v1382 = vld [vmem:[%s249 + $0x6d] sm:$0xff]
        %v1383 = vld [vmem:[%s249 + $0x75] sm:$0xff]
        %v1384 = vld [vmem:[%s249 + $0x7d] sm:$0x3f]
        %s1385 = scalar_lea.vmem %s1, 20
        %v1386 = vld [vmem:[%s1385] sm:$0xf]
        %v1388 = vsel %vm285, %v1369, 0
        %v1391 = vsel %vm285, %v1370, 0
        %v1394 = vsel %vm285, %v1371, 0
        %v1397 = vsel %vm285, %v1372, 0
        %v1400 = vsel %vm285, %v1373, 0
        %v1403 = vsel %vm285, %v1374, 0
        %v1406 = vsel %vm285, %v1375, 0
        %v1409 = vsel %vm285, %v1376, 0
        %v1412 = vsel %vm285, %v1377, 0
        %v1415 = vsel %vm285, %v1378, 0
        %v1418 = vsel %vm285, %v1379, 0
        %v1421 = vsel %vm285, %v1380, 0
        %v1424 = vsel %vm285, %v1381, 0
        %v1427 = vsel %vm285, %v1382, 0
        %v1430 = vsel %vm285, %v1383, 0
        %v1433 = vsel %vm285, %v1384, 0
        %v1436 = vsel %vm334, %v1386, 0
        %1438 = vmatprep.subr.mxu0 0.0
        %1439 = vmatpush1.msra.mxu0 0.0
        %1440 = vmatprep.subr.mxu0 0.0
        %1441 = vmatpush1.msra.mxu0 0.0
        %1442 = vmatprep.subr.mxu0 0.0
        %1443 = vmatpush1.msra.mxu0 0.0
        %1444 = vmatprep.subr.mxu0 0.0
        %1445 = vmatpush1.msra.mxu0 0.0
        %1446 = vmatprep.subr.mxu0 0.0
        %1447 = vmatpush1.msra.mxu0 0.0
        %1448 = vmatprep.subr.mxu0 0.0
        %1449 = vmatpush1.msra.mxu0 0.0
        %1450 = vmatprep.subr.mxu0 0.0
        %1451 = vmatpush1.msra.mxu0 0.0
        %1452 = vmatprep.subr.mxu0 0.0
        %1453 = vmatpush1.msra.mxu0 0.0
        %1454 = vmatprep.subr.mxu0 0.0
        %1455 = vmatpush1.msra.mxu0 0.0
        %1456 = vmatprep.subr.mxu0 0.0
        %1457 = vmatpush1.msra.mxu0 0.0
        %1458 = vmatprep.subr.mxu0 0.0
        %1459 = vmatpush1.msra.mxu0 0.0
        %1460 = vmatprep.subr.mxu0 0.0
        %1461 = vmatpush1.msra.mxu0 0.0
        %1462 = vmatprep.subr.mxu0 0.0
        %1463 = vmatpush1.msra.mxu0 0.0
        %1464 = vmatprep.subr.mxu0 0.0
        %1465 = vmatpush1.msra.mxu0 0.0
        %1466 = vmatprep.subr.mxu0 0.0
        %1467 = vmatpush1.msra.mxu0 0.0
        %1468 = vmatprep.subr.mxu0 0.0
        %1469 = vmatpush1.msra.mxu0 %v1436
        %1470 = vmatprep.subr.mxu0 0.0
        %1471 = vmatpush2.msra.mxu0 0.0
        %1472 = vmatprep.subr.mxu0 0.0
        %1473 = vmatpush2.msra.mxu0 0.0
        %1474 = vmatprep.subr.mxu0 0.0
        %1475 = vmatpush2.msra.mxu0 0.0
        %1476 = vmatprep.subr.mxu0 0.0
        %1477 = vmatpush2.msra.mxu0 0.0
        %1478 = vmatprep.subr.mxu0 0.0
        %1479 = vmatpush2.msra.mxu0 0.0
        %1480 = vmatprep.subr.mxu0 0.0
        %1481 = vmatpush2.msra.mxu0 0.0
        %1482 = vmatprep.subr.mxu0 0.0
        %1483 = vmatpush2.msra.mxu0 0.0
        %1484 = vmatprep.subr.mxu0 0.0
        %1485 = vmatpush2.msra.mxu0 0.0
        %1486 = vmatprep.subr.mxu0 0.0
        %1487 = vmatpush2.msra.mxu0 0.0
        %1488 = vmatprep.subr.mxu0 0.0
        %1489 = vmatpush2.msra.mxu0 0.0
        %1490 = vmatprep.subr.mxu0 0.0
        %1491 = vmatpush2.msra.mxu0 0.0
        %1492 = vmatprep.subr.mxu0 0.0
        %1493 = vmatpush2.msra.mxu0 0.0
        %1494 = vmatprep.subr.mxu0 0.0
        %1495 = vmatpush2.msra.mxu0 0.0
        %1496 = vmatprep.subr.mxu0 0.0
        %1497 = vmatpush2.msra.mxu0 0.0
        %1498 = vmatprep.subr.mxu0 0.0
        %1499 = vmatpush2.msra.mxu0 0.0
        %1500 = vmatprep.subr.mxu0 0.0
        %1501 = vmatpush2.msra.mxu0 0.0
        %1502 = vmatprep.mubr.f32.mxu0 0.0
        %1503 = vmatmul.mubr.f32.gmra.mxu0 %v1388
        %v1504 = vpop.f32.mrf.mxu0
        %v1505 = vadd.f32 0.0, %v1504
        %v1506 = vpop.f32.mrf.mxu0
        %1507 = vmatprep.mubr.f32.mxu0 0.0
        %1508 = vmatmul.mubr.f32.gmra.mxu0 %v1391
        %v1509 = vpop.f32.mrf.mxu0
        %v1510 = vadd.f32 0.0, %v1509
        %v1511 = vpop.f32.mrf.mxu0
        %1512 = vmatprep.mubr.f32.mxu0 0.0
        %1513 = vmatmul.mubr.f32.gmra.mxu0 %v1394
        %v1514 = vpop.f32.mrf.mxu0
        %v1515 = vadd.f32 0.0, %v1514
        %v1516 = vpop.f32.mrf.mxu0
        %1517 = vmatprep.mubr.f32.mxu0 0.0
        %1518 = vmatmul.mubr.f32.gmra.mxu0 %v1397
        %v1519 = vpop.f32.mrf.mxu0
        %v1520 = vadd.f32 0.0, %v1519
        %v1521 = vpop.f32.mrf.mxu0
        %1522 = vmatprep.mubr.f32.mxu0 0.0
        %1523 = vmatmul.mubr.f32.gmra.mxu0 %v1400
        %v1524 = vpop.f32.mrf.mxu0
        %v1525 = vadd.f32 0.0, %v1524
        %v1526 = vpop.f32.mrf.mxu0
        %1527 = vmatprep.mubr.f32.mxu0 0.0
        %1528 = vmatmul.mubr.f32.gmra.mxu0 %v1403
        %v1529 = vpop.f32.mrf.mxu0
        %v1530 = vadd.f32 0.0, %v1529
        %v1531 = vpop.f32.mrf.mxu0
        %1532 = vmatprep.mubr.f32.mxu0 0.0
        %1533 = vmatmul.mubr.f32.gmra.mxu0 %v1406
        %v1534 = vpop.f32.mrf.mxu0
        %v1535 = vadd.f32 0.0, %v1534
        %v1536 = vpop.f32.mrf.mxu0
        %1537 = vmatprep.mubr.f32.mxu0 0.0
        %1538 = vmatmul.mubr.f32.gmra.mxu0 %v1409
        %v1539 = vpop.f32.mrf.mxu0
        %v1540 = vadd.f32 0.0, %v1539
        %v1541 = vpop.f32.mrf.mxu0
        %1542 = vmatprep.mubr.f32.mxu0 0.0
        %1543 = vmatmul.mubr.f32.gmra.mxu0 %v1412
        %v1544 = vpop.f32.mrf.mxu0
        %v1545 = vadd.f32 0.0, %v1544
        %v1546 = vpop.f32.mrf.mxu0
        %1547 = vmatprep.mubr.f32.mxu0 0.0
        %1548 = vmatmul.mubr.f32.gmra.mxu0 %v1415
        %v1549 = vpop.f32.mrf.mxu0
        %v1550 = vadd.f32 0.0, %v1549
        %v1551 = vpop.f32.mrf.mxu0
        %1552 = vmatprep.mubr.f32.mxu0 0.0
        %1553 = vmatmul.mubr.f32.gmra.mxu0 %v1418
        %v1554 = vpop.f32.mrf.mxu0
        %v1555 = vadd.f32 0.0, %v1554
        %v1556 = vpop.f32.mrf.mxu0
        %1557 = vmatprep.mubr.f32.mxu0 0.0
        %1558 = vmatmul.mubr.f32.gmra.mxu0 %v1421
        %v1559 = vpop.f32.mrf.mxu0
        %v1560 = vadd.f32 0.0, %v1559
        %v1561 = vpop.f32.mrf.mxu0
        %1562 = vmatprep.mubr.f32.mxu0 0.0
        %1563 = vmatmul.mubr.f32.gmra.mxu0 %v1424
        %v1564 = vpop.f32.mrf.mxu0
        %v1565 = vadd.f32 0.0, %v1564
        %v1566 = vpop.f32.mrf.mxu0
        %1567 = vmatprep.mubr.f32.mxu0 0.0
        %1568 = vmatmul.mubr.f32.gmra.mxu0 %v1427
        %v1569 = vpop.f32.mrf.mxu0
        %v1570 = vadd.f32 0.0, %v1569
        %v1571 = vpop.f32.mrf.mxu0
        %1572 = vmatprep.mubr.f32.mxu0 0.0
        %1573 = vmatmul.mubr.f32.gmra.mxu0 %v1430
        %v1574 = vpop.f32.mrf.mxu0
        %v1575 = vadd.f32 0.0, %v1574
        %v1576 = vpop.f32.mrf.mxu0
        %1577 = vmatprep.mubr.f32.mxu0 0.0
        %1578 = vmatmul.mubr.f32.gmra.mxu0 %v1433
        %v1579 = vpop.f32.mrf.mxu0
        %v1580 = vadd.f32 0.0, %v1579
        %v1581 = vpop.f32.mrf.mxu0
        %1582 = vdwg.mxu0
        %v1583 = vadd.f32 %v1353, %v1505
        %v1584 = vadd.f32 %v1354, %v1510
        %v1585 = vadd.f32 %v1355, %v1515
        %v1586 = vadd.f32 %v1356, %v1520
        %v1587 = vadd.f32 %v1357, %v1525
        %v1588 = vadd.f32 %v1358, %v1530
        %v1589 = vadd.f32 %v1359, %v1535
        %v1590 = vadd.f32 %v1360, %v1540
        %v1591 = vadd.f32 %v1361, %v1545
        %v1592 = vadd.f32 %v1362, %v1550
        %v1593 = vadd.f32 %v1363, %v1555
        %v1594 = vadd.f32 %v1364, %v1560
        %v1595 = vadd.f32 %v1365, %v1565
        %v1596 = vadd.f32 %v1366, %v1570
        %v1597 = vadd.f32 %v1367, %v1575
        %v1598 = vadd.f32 %v1368, %v1580
        %v1599 = vld [vmem:[%s249 + $0x6] sm:$0xff]
        %v1600 = vld [vmem:[%s249 + $0xe] sm:$0xff]
        %v1601 = vld [vmem:[%s249 + $0x16] sm:$0xff]
        %v1602 = vld [vmem:[%s249 + $0x1e] sm:$0xff]
        %v1603 = vld [vmem:[%s249 + $0x26] sm:$0xff]
        %v1604 = vld [vmem:[%s249 + $0x2e] sm:$0xff]
        %v1605 = vld [vmem:[%s249 + $0x36] sm:$0xff]
        %v1606 = vld [vmem:[%s249 + $0x3e] sm:$0xff]
        %v1607 = vld [vmem:[%s249 + $0x46] sm:$0xff]
        %v1608 = vld [vmem:[%s249 + $0x4e] sm:$0xff]
        %v1609 = vld [vmem:[%s249 + $0x56] sm:$0xff]
        %v1610 = vld [vmem:[%s249 + $0x5e] sm:$0xff]
        %v1611 = vld [vmem:[%s249 + $0x66] sm:$0xff]
        %v1612 = vld [vmem:[%s249 + $0x6e] sm:$0xff]
        %v1613 = vld [vmem:[%s249 + $0x76] sm:$0xff]
        %v1614 = vld [vmem:[%s249 + $0x7e] sm:$0x3f]
        %s1615 = scalar_lea.vmem %s1, 24
        %v1616 = vld [vmem:[%s1615] sm:$0xf]
        %v1618 = vsel %vm285, %v1599, 0
        %v1621 = vsel %vm285, %v1600, 0
        %v1624 = vsel %vm285, %v1601, 0
        %v1627 = vsel %vm285, %v1602, 0
        %v1630 = vsel %vm285, %v1603, 0
        %v1633 = vsel %vm285, %v1604, 0
        %v1636 = vsel %vm285, %v1605, 0
        %v1639 = vsel %vm285, %v1606, 0
        %v1642 = vsel %vm285, %v1607, 0
        %v1645 = vsel %vm285, %v1608, 0
        %v1648 = vsel %vm285, %v1609, 0
        %v1651 = vsel %vm285, %v1610, 0
        %v1654 = vsel %vm285, %v1611, 0
        %v1657 = vsel %vm285, %v1612, 0
        %v1660 = vsel %vm285, %v1613, 0
        %v1663 = vsel %vm285, %v1614, 0
        %v1666 = vsel %vm334, %v1616, 0
        %1668 = vmatprep.subr.mxu0 0.0
        %1669 = vmatpush1.msra.mxu0 0.0
        %1670 = vmatprep.subr.mxu0 0.0
        %1671 = vmatpush1.msra.mxu0 0.0
        %1672 = vmatprep.subr.mxu0 0.0
        %1673 = vmatpush1.msra.mxu0 0.0
        %1674 = vmatprep.subr.mxu0 0.0
        %1675 = vmatpush1.msra.mxu0 0.0
        %1676 = vmatprep.subr.mxu0 0.0
        %1677 = vmatpush1.msra.mxu0 0.0
        %1678 = vmatprep.subr.mxu0 0.0
        %1679 = vmatpush1.msra.mxu0 0.0
        %1680 = vmatprep.subr.mxu0 0.0
        %1681 = vmatpush1.msra.mxu0 0.0
        %1682 = vmatprep.subr.mxu0 0.0
        %1683 = vmatpush1.msra.mxu0 0.0
        %1684 = vmatprep.subr.mxu0 0.0
        %1685 = vmatpush1.msra.mxu0 0.0
        %1686 = vmatprep.subr.mxu0 0.0
        %1687 = vmatpush1.msra.mxu0 0.0
        %1688 = vmatprep.subr.mxu0 0.0
        %1689 = vmatpush1.msra.mxu0 0.0
        %1690 = vmatprep.subr.mxu0 0.0
        %1691 = vmatpush1.msra.mxu0 0.0
        %1692 = vmatprep.subr.mxu0 0.0
        %1693 = vmatpush1.msra.mxu0 0.0
        %1694 = vmatprep.subr.mxu0 0.0
        %1695 = vmatpush1.msra.mxu0 0.0
        %1696 = vmatprep.subr.mxu0 0.0
        %1697 = vmatpush1.msra.mxu0 0.0
        %1698 = vmatprep.subr.mxu0 0.0
        %1699 = vmatpush1.msra.mxu0 %v1666
        %1700 = vmatprep.subr.mxu0 0.0
        %1701 = vmatpush2.msra.mxu0 0.0
        %1702 = vmatprep.subr.mxu0 0.0
        %1703 = vmatpush2.msra.mxu0 0.0
        %1704 = vmatprep.subr.mxu0 0.0
        %1705 = vmatpush2.msra.mxu0 0.0
        %1706 = vmatprep.subr.mxu0 0.0
        %1707 = vmatpush2.msra.mxu0 0.0
        %1708 = vmatprep.subr.mxu0 0.0
        %1709 = vmatpush2.msra.mxu0 0.0
        %1710 = vmatprep.subr.mxu0 0.0
        %1711 = vmatpush2.msra.mxu0 0.0
        %1712 = vmatprep.subr.mxu0 0.0
        %1713 = vmatpush2.msra.mxu0 0.0
        %1714 = vmatprep.subr.mxu0 0.0
        %1715 = vmatpush2.msra.mxu0 0.0
        %1716 = vmatprep.subr.mxu0 0.0
        %1717 = vmatpush2.msra.mxu0 0.0
        %1718 = vmatprep.subr.mxu0 0.0
        %1719 = vmatpush2.msra.mxu0 0.0
        %1720 = vmatprep.subr.mxu0 0.0
        %1721 = vmatpush2.msra.mxu0 0.0
        %1722 = vmatprep.subr.mxu0 0.0
        %1723 = vmatpush2.msra.mxu0 0.0
        %1724 = vmatprep.subr.mxu0 0.0
        %1725 = vmatpush2.msra.mxu0 0.0
        %1726 = vmatprep.subr.mxu0 0.0
        %1727 = vmatpush2.msra.mxu0 0.0
        %1728 = vmatprep.subr.mxu0 0.0
        %1729 = vmatpush2.msra.mxu0 0.0
        %1730 = vmatprep.subr.mxu0 0.0
        %1731 = vmatpush2.msra.mxu0 0.0
        %1732 = vmatprep.mubr.f32.mxu0 0.0
        %1733 = vmatmul.mubr.f32.gmra.mxu0 %v1618
        %v1734 = vpop.f32.mrf.mxu0
        %v1735 = vadd.f32 0.0, %v1734
        %v1736 = vpop.f32.mrf.mxu0
        %1737 = vmatprep.mubr.f32.mxu0 0.0
        %1738 = vmatmul.mubr.f32.gmra.mxu0 %v1621
        %v1739 = vpop.f32.mrf.mxu0
        %v1740 = vadd.f32 0.0, %v1739
        %v1741 = vpop.f32.mrf.mxu0
        %1742 = vmatprep.mubr.f32.mxu0 0.0
        %1743 = vmatmul.mubr.f32.gmra.mxu0 %v1624
        %v1744 = vpop.f32.mrf.mxu0
        %v1745 = vadd.f32 0.0, %v1744
        %v1746 = vpop.f32.mrf.mxu0
        %1747 = vmatprep.mubr.f32.mxu0 0.0
        %1748 = vmatmul.mubr.f32.gmra.mxu0 %v1627
        %v1749 = vpop.f32.mrf.mxu0
        %v1750 = vadd.f32 0.0, %v1749
        %v1751 = vpop.f32.mrf.mxu0
        %1752 = vmatprep.mubr.f32.mxu0 0.0
        %1753 = vmatmul.mubr.f32.gmra.mxu0 %v1630
        %v1754 = vpop.f32.mrf.mxu0
        %v1755 = vadd.f32 0.0, %v1754
        %v1756 = vpop.f32.mrf.mxu0
        %1757 = vmatprep.mubr.f32.mxu0 0.0
        %1758 = vmatmul.mubr.f32.gmra.mxu0 %v1633
        %v1759 = vpop.f32.mrf.mxu0
        %v1760 = vadd.f32 0.0, %v1759
        %v1761 = vpop.f32.mrf.mxu0
        %1762 = vmatprep.mubr.f32.mxu0 0.0
        %1763 = vmatmul.mubr.f32.gmra.mxu0 %v1636
        %v1764 = vpop.f32.mrf.mxu0
        %v1765 = vadd.f32 0.0, %v1764
        %v1766 = vpop.f32.mrf.mxu0
        %1767 = vmatprep.mubr.f32.mxu0 0.0
        %1768 = vmatmul.mubr.f32.gmra.mxu0 %v1639
        %v1769 = vpop.f32.mrf.mxu0
        %v1770 = vadd.f32 0.0, %v1769
        %v1771 = vpop.f32.mrf.mxu0
        %1772 = vmatprep.mubr.f32.mxu0 0.0
        %1773 = vmatmul.mubr.f32.gmra.mxu0 %v1642
        %v1774 = vpop.f32.mrf.mxu0
        %v1775 = vadd.f32 0.0, %v1774
        %v1776 = vpop.f32.mrf.mxu0
        %1777 = vmatprep.mubr.f32.mxu0 0.0
        %1778 = vmatmul.mubr.f32.gmra.mxu0 %v1645
        %v1779 = vpop.f32.mrf.mxu0
        %v1780 = vadd.f32 0.0, %v1779
        %v1781 = vpop.f32.mrf.mxu0
        %1782 = vmatprep.mubr.f32.mxu0 0.0
        %1783 = vmatmul.mubr.f32.gmra.mxu0 %v1648
        %v1784 = vpop.f32.mrf.mxu0
        %v1785 = vadd.f32 0.0, %v1784
        %v1786 = vpop.f32.mrf.mxu0
        %1787 = vmatprep.mubr.f32.mxu0 0.0
        %1788 = vmatmul.mubr.f32.gmra.mxu0 %v1651
        %v1789 = vpop.f32.mrf.mxu0
        %v1790 = vadd.f32 0.0, %v1789
        %v1791 = vpop.f32.mrf.mxu0
        %1792 = vmatprep.mubr.f32.mxu0 0.0
        %1793 = vmatmul.mubr.f32.gmra.mxu0 %v1654
        %v1794 = vpop.f32.mrf.mxu0
        %v1795 = vadd.f32 0.0, %v1794
        %v1796 = vpop.f32.mrf.mxu0
        %1797 = vmatprep.mubr.f32.mxu0 0.0
        %1798 = vmatmul.mubr.f32.gmra.mxu0 %v1657
        %v1799 = vpop.f32.mrf.mxu0
        %v1800 = vadd.f32 0.0, %v1799
        %v1801 = vpop.f32.mrf.mxu0
        %1802 = vmatprep.mubr.f32.mxu0 0.0
        %1803 = vmatmul.mubr.f32.gmra.mxu0 %v1660
        %v1804 = vpop.f32.mrf.mxu0
        %v1805 = vadd.f32 0.0, %v1804
        %v1806 = vpop.f32.mrf.mxu0
        %1807 = vmatprep.mubr.f32.mxu0 0.0
        %1808 = vmatmul.mubr.f32.gmra.mxu0 %v1663
        %v1809 = vpop.f32.mrf.mxu0
        %v1810 = vadd.f32 0.0, %v1809
        %v1811 = vpop.f32.mrf.mxu0
        %1812 = vdwg.mxu0
        %v1813 = vadd.f32 %v1583, %v1735
        %v1814 = vadd.f32 %v1584, %v1740
        %v1815 = vadd.f32 %v1585, %v1745
        %v1816 = vadd.f32 %v1586, %v1750
        %v1817 = vadd.f32 %v1587, %v1755
        %v1818 = vadd.f32 %v1588, %v1760
        %v1819 = vadd.f32 %v1589, %v1765
        %v1820 = vadd.f32 %v1590, %v1770
        %v1821 = vadd.f32 %v1591, %v1775
        %v1822 = vadd.f32 %v1592, %v1780
        %v1823 = vadd.f32 %v1593, %v1785
        %v1824 = vadd.f32 %v1594, %v1790
        %v1825 = vadd.f32 %v1595, %v1795
        %v1826 = vadd.f32 %v1596, %v1800
        %v1827 = vadd.f32 %v1597, %v1805
        %v1828 = vadd.f32 %v1598, %v1810
        %v1829 = vld [vmem:[%s249 + $0x7] sm:$0xff]
        %v1830 = vld [vmem:[%s249 + $0xf] sm:$0xff]
        %v1831 = vld [vmem:[%s249 + $0x17] sm:$0xff]
        %v1832 = vld [vmem:[%s249 + $0x1f] sm:$0xff]
        %v1833 = vld [vmem:[%s249 + $0x27] sm:$0xff]
        %v1834 = vld [vmem:[%s249 + $0x2f] sm:$0xff]
        %v1835 = vld [vmem:[%s249 + $0x37] sm:$0xff]
        %v1836 = vld [vmem:[%s249 + $0x3f] sm:$0xff]
        %v1837 = vld [vmem:[%s249 + $0x47] sm:$0xff]
        %v1838 = vld [vmem:[%s249 + $0x4f] sm:$0xff]
        %v1839 = vld [vmem:[%s249 + $0x57] sm:$0xff]
        %v1840 = vld [vmem:[%s249 + $0x5f] sm:$0xff]
        %v1841 = vld [vmem:[%s249 + $0x67] sm:$0xff]
        %v1842 = vld [vmem:[%s249 + $0x6f] sm:$0xff]
        %v1843 = vld [vmem:[%s249 + $0x77] sm:$0xff]
        %v1844 = vld [vmem:[%s249 + $0x7f] sm:$0x3f]
        %s1845 = scalar_lea.vmem %s1, 28
        %v1846 = vld [vmem:[%s1845] sm:$0xf]
        %v1848 = vsel %vm285, %v1829, 0
        %v1851 = vsel %vm285, %v1830, 0
        %v1854 = vsel %vm285, %v1831, 0
        %v1857 = vsel %vm285, %v1832, 0
        %v1860 = vsel %vm285, %v1833, 0
        %v1863 = vsel %vm285, %v1834, 0
        %v1866 = vsel %vm285, %v1835, 0
        %v1869 = vsel %vm285, %v1836, 0
        %v1872 = vsel %vm285, %v1837, 0
        %v1875 = vsel %vm285, %v1838, 0
        %v1878 = vsel %vm285, %v1839, 0
        %v1881 = vsel %vm285, %v1840, 0
        %v1884 = vsel %vm285, %v1841, 0
        %v1887 = vsel %vm285, %v1842, 0
        %v1890 = vsel %vm285, %v1843, 0
        %v1893 = vsel %vm285, %v1844, 0
        %v1896 = vsel %vm334, %v1846, 0
        %1898 = vmatprep.subr.mxu0 0.0
        %1899 = vmatpush1.msra.mxu0 0.0
        %1900 = vmatprep.subr.mxu0 0.0
        %1901 = vmatpush1.msra.mxu0 0.0
        %1902 = vmatprep.subr.mxu0 0.0
        %1903 = vmatpush1.msra.mxu0 0.0
        %1904 = vmatprep.subr.mxu0 0.0
        %1905 = vmatpush1.msra.mxu0 0.0
        %1906 = vmatprep.subr.mxu0 0.0
        %1907 = vmatpush1.msra.mxu0 0.0
        %1908 = vmatprep.subr.mxu0 0.0
        %1909 = vmatpush1.msra.mxu0 0.0
        %1910 = vmatprep.subr.mxu0 0.0
        %1911 = vmatpush1.msra.mxu0 0.0
        %1912 = vmatprep.subr.mxu0 0.0
        %1913 = vmatpush1.msra.mxu0 0.0
        %1914 = vmatprep.subr.mxu0 0.0
        %1915 = vmatpush1.msra.mxu0 0.0
        %1916 = vmatprep.subr.mxu0 0.0
        %1917 = vmatpush1.msra.mxu0 0.0
        %1918 = vmatprep.subr.mxu0 0.0
        %1919 = vmatpush1.msra.mxu0 0.0
        %1920 = vmatprep.subr.mxu0 0.0
        %1921 = vmatpush1.msra.mxu0 0.0
        %1922 = vmatprep.subr.mxu0 0.0
        %1923 = vmatpush1.msra.mxu0 0.0
        %1924 = vmatprep.subr.mxu0 0.0
        %1925 = vmatpush1.msra.mxu0 0.0
        %1926 = vmatprep.subr.mxu0 0.0
        %1927 = vmatpush1.msra.mxu0 0.0
        %1928 = vmatprep.subr.mxu0 0.0
        %1929 = vmatpush1.msra.mxu0 %v1896
        %1930 = vmatprep.subr.mxu0 0.0
        %1931 = vmatpush2.msra.mxu0 0.0
        %1932 = vmatprep.subr.mxu0 0.0
        %1933 = vmatpush2.msra.mxu0 0.0
        %1934 = vmatprep.subr.mxu0 0.0
        %1935 = vmatpush2.msra.mxu0 0.0
        %1936 = vmatprep.subr.mxu0 0.0
        %1937 = vmatpush2.msra.mxu0 0.0
        %1938 = vmatprep.subr.mxu0 0.0
        %1939 = vmatpush2.msra.mxu0 0.0
        %1940 = vmatprep.subr.mxu0 0.0
        %1941 = vmatpush2.msra.mxu0 0.0
        %1942 = vmatprep.subr.mxu0 0.0
        %1943 = vmatpush2.msra.mxu0 0.0
        %1944 = vmatprep.subr.mxu0 0.0
        %1945 = vmatpush2.msra.mxu0 0.0
        %1946 = vmatprep.subr.mxu0 0.0
        %1947 = vmatpush2.msra.mxu0 0.0
        %1948 = vmatprep.subr.mxu0 0.0
        %1949 = vmatpush2.msra.mxu0 0.0
        %1950 = vmatprep.subr.mxu0 0.0
        %1951 = vmatpush2.msra.mxu0 0.0
        %1952 = vmatprep.subr.mxu0 0.0
        %1953 = vmatpush2.msra.mxu0 0.0
        %1954 = vmatprep.subr.mxu0 0.0
        %1955 = vmatpush2.msra.mxu0 0.0
        %1956 = vmatprep.subr.mxu0 0.0
        %1957 = vmatpush2.msra.mxu0 0.0
        %1958 = vmatprep.subr.mxu0 0.0
        %1959 = vmatpush2.msra.mxu0 0.0
        %1960 = vmatprep.subr.mxu0 0.0
        %1961 = vmatpush2.msra.mxu0 0.0
        %1962 = vmatprep.mubr.f32.mxu0 0.0
        %1963 = vmatmul.mubr.f32.gmra.mxu0 %v1848
        %v1964 = vpop.f32.mrf.mxu0
        %v1965 = vadd.f32 0.0, %v1964
        %v1966 = vpop.f32.mrf.mxu0
        %1967 = vmatprep.mubr.f32.mxu0 0.0
        %1968 = vmatmul.mubr.f32.gmra.mxu0 %v1851
        %v1969 = vpop.f32.mrf.mxu0
        %v1970 = vadd.f32 0.0, %v1969
        %v1971 = vpop.f32.mrf.mxu0
        %1972 = vmatprep.mubr.f32.mxu0 0.0
        %1973 = vmatmul.mubr.f32.gmra.mxu0 %v1854
        %v1974 = vpop.f32.mrf.mxu0
        %v1975 = vadd.f32 0.0, %v1974
        %v1976 = vpop.f32.mrf.mxu0
        %1977 = vmatprep.mubr.f32.mxu0 0.0
        %1978 = vmatmul.mubr.f32.gmra.mxu0 %v1857
        %v1979 = vpop.f32.mrf.mxu0
        %v1980 = vadd.f32 0.0, %v1979
        %v1981 = vpop.f32.mrf.mxu0
        %1982 = vmatprep.mubr.f32.mxu0 0.0
        %1983 = vmatmul.mubr.f32.gmra.mxu0 %v1860
        %v1984 = vpop.f32.mrf.mxu0
        %v1985 = vadd.f32 0.0, %v1984
        %v1986 = vpop.f32.mrf.mxu0
        %1987 = vmatprep.mubr.f32.mxu0 0.0
        %1988 = vmatmul.mubr.f32.gmra.mxu0 %v1863
        %v1989 = vpop.f32.mrf.mxu0
        %v1990 = vadd.f32 0.0, %v1989
        %v1991 = vpop.f32.mrf.mxu0
        %1992 = vmatprep.mubr.f32.mxu0 0.0
        %1993 = vmatmul.mubr.f32.gmra.mxu0 %v1866
        %v1994 = vpop.f32.mrf.mxu0
        %v1995 = vadd.f32 0.0, %v1994
        %v1996 = vpop.f32.mrf.mxu0
        %1997 = vmatprep.mubr.f32.mxu0 0.0
        %1998 = vmatmul.mubr.f32.gmra.mxu0 %v1869
        %v1999 = vpop.f32.mrf.mxu0
        %v2000 = vadd.f32 0.0, %v1999
        %v2001 = vpop.f32.mrf.mxu0
        %2002 = vmatprep.mubr.f32.mxu0 0.0
        %2003 = vmatmul.mubr.f32.gmra.mxu0 %v1872
        %v2004 = vpop.f32.mrf.mxu0
        %v2005 = vadd.f32 0.0, %v2004
        %v2006 = vpop.f32.mrf.mxu0
        %2007 = vmatprep.mubr.f32.mxu0 0.0
        %2008 = vmatmul.mubr.f32.gmra.mxu0 %v1875
        %v2009 = vpop.f32.mrf.mxu0
        %v2010 = vadd.f32 0.0, %v2009
        %v2011 = vpop.f32.mrf.mxu0
        %2012 = vmatprep.mubr.f32.mxu0 0.0
        %2013 = vmatmul.mubr.f32.gmra.mxu0 %v1878
        %v2014 = vpop.f32.mrf.mxu0
        %v2015 = vadd.f32 0.0, %v2014
        %v2016 = vpop.f32.mrf.mxu0
        %2017 = vmatprep.mubr.f32.mxu0 0.0
        %2018 = vmatmul.mubr.f32.gmra.mxu0 %v1881
        %v2019 = vpop.f32.mrf.mxu0
        %v2020 = vadd.f32 0.0, %v2019
        %v2021 = vpop.f32.mrf.mxu0
        %2022 = vmatprep.mubr.f32.mxu0 0.0
        %2023 = vmatmul.mubr.f32.gmra.mxu0 %v1884
        %v2024 = vpop.f32.mrf.mxu0
        %v2025 = vadd.f32 0.0, %v2024
        %v2026 = vpop.f32.mrf.mxu0
        %2027 = vmatprep.mubr.f32.mxu0 0.0
        %2028 = vmatmul.mubr.f32.gmra.mxu0 %v1887
        %v2029 = vpop.f32.mrf.mxu0
        %v2030 = vadd.f32 0.0, %v2029
        %v2031 = vpop.f32.mrf.mxu0
        %2032 = vmatprep.mubr.f32.mxu0 0.0
        %2033 = vmatmul.mubr.f32.gmra.mxu0 %v1890
        %v2034 = vpop.f32.mrf.mxu0
        %v2035 = vadd.f32 0.0, %v2034
        %v2036 = vpop.f32.mrf.mxu0
        %2037 = vmatprep.mubr.f32.mxu0 0.0
        %2038 = vmatmul.mubr.f32.gmra.mxu0 %v1893
        %v2039 = vpop.f32.mrf.mxu0
        %v2040 = vadd.f32 0.0, %v2039
        %v2041 = vpop.f32.mrf.mxu0
        %2042 = vdwg.mxu0
        %v2043 = vadd.f32 %v1813, %v1965
        %v2044 = vadd.f32 %v1814, %v1970
        %v2045 = vadd.f32 %v1815, %v1975
        %v2046 = vadd.f32 %v1816, %v1980
        %v2047 = vadd.f32 %v1817, %v1985
        %v2048 = vadd.f32 %v1818, %v1990
        %v2049 = vadd.f32 %v1819, %v1995
        %v2050 = vadd.f32 %v1820, %v2000
        %v2051 = vadd.f32 %v1821, %v2005
        %v2052 = vadd.f32 %v1822, %v2010
        %v2053 = vadd.f32 %v1823, %v2015
        %v2054 = vadd.f32 %v1824, %v2020
        %v2055 = vadd.f32 %v1825, %v2025
        %v2056 = vadd.f32 %v1826, %v2030
        %v2057 = vadd.f32 %v1827, %v2035
        %v2058 = vadd.f32 %v1828, %v2040
        %v2059 = vld [vmem:[%s249 + $0x8] sm:$0xff]
        %v2060 = vld [vmem:[%s249 + $0x10] sm:$0xff]
        %v2061 = vld [vmem:[%s249 + $0x18] sm:$0xff]
        %v2062 = vld [vmem:[%s249 + $0x20] sm:$0xff]
        %v2063 = vld [vmem:[%s249 + $0x28] sm:$0xff]
        %v2064 = vld [vmem:[%s249 + $0x30] sm:$0xff]
        %v2065 = vld [vmem:[%s249 + $0x38] sm:$0xff]
        %v2066 = vld [vmem:[%s249 + $0x40] sm:$0xff]
        %v2067 = vld [vmem:[%s249 + $0x48] sm:$0xff]
        %v2068 = vld [vmem:[%s249 + $0x50] sm:$0xff]
        %v2069 = vld [vmem:[%s249 + $0x58] sm:$0xff]
        %v2070 = vld [vmem:[%s249 + $0x60] sm:$0xff]
        %v2071 = vld [vmem:[%s249 + $0x68] sm:$0xff]
        %v2072 = vld [vmem:[%s249 + $0x70] sm:$0xff]
        %v2073 = vld [vmem:[%s249 + $0x78] sm:$0xff]
        %v2074 = vld [vmem:[%s249 + $0x80] sm:$0x3f]
        %s2075 = scalar_lea.vmem %s1, 32
        %v2076 = vld [vmem:[%s2075] sm:$0xf]
        %v2078 = vsel %vm285, %v2059, 0
        %v2081 = vsel %vm285, %v2060, 0
        %v2084 = vsel %vm285, %v2061, 0
        %v2087 = vsel %vm285, %v2062, 0
        %v2090 = vsel %vm285, %v2063, 0
        %v2093 = vsel %vm285, %v2064, 0
        %v2096 = vsel %vm285, %v2065, 0
        %v2099 = vsel %vm285, %v2066, 0
        %v2102 = vsel %vm285, %v2067, 0
        %v2105 = vsel %vm285, %v2068, 0
        %v2108 = vsel %vm285, %v2069, 0
        %v2111 = vsel %vm285, %v2070, 0
        %v2114 = vsel %vm285, %v2071, 0
        %v2117 = vsel %vm285, %v2072, 0
        %v2120 = vsel %vm285, %v2073, 0
        %v2123 = vsel %vm285, %v2074, 0
        %v2126 = vsel %vm334, %v2076, 0
        %2128 = vmatprep.subr.mxu0 0.0
        %2129 = vmatpush1.msra.mxu0 0.0
        %2130 = vmatprep.subr.mxu0 0.0
        %2131 = vmatpush1.msra.mxu0 0.0
        %2132 = vmatprep.subr.mxu0 0.0
        %2133 = vmatpush1.msra.mxu0 0.0
        %2134 = vmatprep.subr.mxu0 0.0
        %2135 = vmatpush1.msra.mxu0 0.0
        %2136 = vmatprep.subr.mxu0 0.0
        %2137 = vmatpush1.msra.mxu0 0.0
        %2138 = vmatprep.subr.mxu0 0.0
        %2139 = vmatpush1.msra.mxu0 0.0
        %2140 = vmatprep.subr.mxu0 0.0
        %2141 = vmatpush1.msra.mxu0 0.0
        %2142 = vmatprep.subr.mxu0 0.0
        %2143 = vmatpush1.msra.mxu0 0.0
        %2144 = vmatprep.subr.mxu0 0.0
        %2145 = vmatpush1.msra.mxu0 0.0
        %2146 = vmatprep.subr.mxu0 0.0
        %2147 = vmatpush1.msra.mxu0 0.0
        %2148 = vmatprep.subr.mxu0 0.0
        %2149 = vmatpush1.msra.mxu0 0.0
        %2150 = vmatprep.subr.mxu0 0.0
        %2151 = vmatpush1.msra.mxu0 0.0
        %2152 = vmatprep.subr.mxu0 0.0
        %2153 = vmatpush1.msra.mxu0 0.0
        %2154 = vmatprep.subr.mxu0 0.0
        %2155 = vmatpush1.msra.mxu0 0.0
        %2156 = vmatprep.subr.mxu0 0.0
        %2157 = vmatpush1.msra.mxu0 0.0
        %2158 = vmatprep.subr.mxu0 0.0
        %2159 = vmatpush1.msra.mxu0 %v2126
        %2160 = vmatprep.subr.mxu0 0.0
        %2161 = vmatpush2.msra.mxu0 0.0
        %2162 = vmatprep.subr.mxu0 0.0
        %2163 = vmatpush2.msra.mxu0 0.0
        %2164 = vmatprep.subr.mxu0 0.0
        %2165 = vmatpush2.msra.mxu0 0.0
        %2166 = vmatprep.subr.mxu0 0.0
        %2167 = vmatpush2.msra.mxu0 0.0
        %2168 = vmatprep.subr.mxu0 0.0
        %2169 = vmatpush2.msra.mxu0 0.0
        %2170 = vmatprep.subr.mxu0 0.0
        %2171 = vmatpush2.msra.mxu0 0.0
        %2172 = vmatprep.subr.mxu0 0.0
        %2173 = vmatpush2.msra.mxu0 0.0
        %2174 = vmatprep.subr.mxu0 0.0
        %2175 = vmatpush2.msra.mxu0 0.0
        %2176 = vmatprep.subr.mxu0 0.0
        %2177 = vmatpush2.msra.mxu0 0.0
        %2178 = vmatprep.subr.mxu0 0.0
        %2179 = vmatpush2.msra.mxu0 0.0
        %2180 = vmatprep.subr.mxu0 0.0
        %2181 = vmatpush2.msra.mxu0 0.0
        %2182 = vmatprep.subr.mxu0 0.0
        %2183 = vmatpush2.msra.mxu0 0.0
        %2184 = vmatprep.subr.mxu0 0.0
        %2185 = vmatpush2.msra.mxu0 0.0
        %2186 = vmatprep.subr.mxu0 0.0
        %2187 = vmatpush2.msra.mxu0 0.0
        %2188 = vmatprep.subr.mxu0 0.0
        %2189 = vmatpush2.msra.mxu0 0.0
        %2190 = vmatprep.subr.mxu0 0.0
        %2191 = vmatpush2.msra.mxu0 0.0
        %2192 = vmatprep.mubr.f32.mxu0 0.0
        %2193 = vmatmul.mubr.f32.gmra.mxu0 %v2078
        %v2194 = vpop.f32.mrf.mxu0
        %v2195 = vadd.f32 0.0, %v2194
        %v2196 = vpop.f32.mrf.mxu0
        %2197 = vmatprep.mubr.f32.mxu0 0.0
        %2198 = vmatmul.mubr.f32.gmra.mxu0 %v2081
        %v2199 = vpop.f32.mrf.mxu0
        %v2200 = vadd.f32 0.0, %v2199
        %v2201 = vpop.f32.mrf.mxu0
        %2202 = vmatprep.mubr.f32.mxu0 0.0
        %2203 = vmatmul.mubr.f32.gmra.mxu0 %v2084
        %v2204 = vpop.f32.mrf.mxu0
        %v2205 = vadd.f32 0.0, %v2204
        %v2206 = vpop.f32.mrf.mxu0
        %2207 = vmatprep.mubr.f32.mxu0 0.0
        %2208 = vmatmul.mubr.f32.gmra.mxu0 %v2087
        %v2209 = vpop.f32.mrf.mxu0
        %v2210 = vadd.f32 0.0, %v2209
        %v2211 = vpop.f32.mrf.mxu0
        %2212 = vmatprep.mubr.f32.mxu0 0.0
        %2213 = vmatmul.mubr.f32.gmra.mxu0 %v2090
        %v2214 = vpop.f32.mrf.mxu0
        %v2215 = vadd.f32 0.0, %v2214
        %v2216 = vpop.f32.mrf.mxu0
        %2217 = vmatprep.mubr.f32.mxu0 0.0
        %2218 = vmatmul.mubr.f32.gmra.mxu0 %v2093
        %v2219 = vpop.f32.mrf.mxu0
        %v2220 = vadd.f32 0.0, %v2219
        %v2221 = vpop.f32.mrf.mxu0
        %2222 = vmatprep.mubr.f32.mxu0 0.0
        %2223 = vmatmul.mubr.f32.gmra.mxu0 %v2096
        %v2224 = vpop.f32.mrf.mxu0
        %v2225 = vadd.f32 0.0, %v2224
        %v2226 = vpop.f32.mrf.mxu0
        %2227 = vmatprep.mubr.f32.mxu0 0.0
        %2228 = vmatmul.mubr.f32.gmra.mxu0 %v2099
        %v2229 = vpop.f32.mrf.mxu0
        %v2230 = vadd.f32 0.0, %v2229
        %v2231 = vpop.f32.mrf.mxu0
        %2232 = vmatprep.mubr.f32.mxu0 0.0
        %2233 = vmatmul.mubr.f32.gmra.mxu0 %v2102
        %v2234 = vpop.f32.mrf.mxu0
        %v2235 = vadd.f32 0.0, %v2234
        %v2236 = vpop.f32.mrf.mxu0
        %2237 = vmatprep.mubr.f32.mxu0 0.0
        %2238 = vmatmul.mubr.f32.gmra.mxu0 %v2105
        %v2239 = vpop.f32.mrf.mxu0
        %v2240 = vadd.f32 0.0, %v2239
        %v2241 = vpop.f32.mrf.mxu0
        %2242 = vmatprep.mubr.f32.mxu0 0.0
        %2243 = vmatmul.mubr.f32.gmra.mxu0 %v2108
        %v2244 = vpop.f32.mrf.mxu0
        %v2245 = vadd.f32 0.0, %v2244
        %v2246 = vpop.f32.mrf.mxu0
        %2247 = vmatprep.mubr.f32.mxu0 0.0
        %2248 = vmatmul.mubr.f32.gmra.mxu0 %v2111
        %v2249 = vpop.f32.mrf.mxu0
        %v2250 = vadd.f32 0.0, %v2249
        %v2251 = vpop.f32.mrf.mxu0
        %2252 = vmatprep.mubr.f32.mxu0 0.0
        %2253 = vmatmul.mubr.f32.gmra.mxu0 %v2114
        %v2254 = vpop.f32.mrf.mxu0
        %v2255 = vadd.f32 0.0, %v2254
        %v2256 = vpop.f32.mrf.mxu0
        %2257 = vmatprep.mubr.f32.mxu0 0.0
        %2258 = vmatmul.mubr.f32.gmra.mxu0 %v2117
        %v2259 = vpop.f32.mrf.mxu0
        %v2260 = vadd.f32 0.0, %v2259
        %v2261 = vpop.f32.mrf.mxu0
        %2262 = vmatprep.mubr.f32.mxu0 0.0
        %2263 = vmatmul.mubr.f32.gmra.mxu0 %v2120
        %v2264 = vpop.f32.mrf.mxu0
        %v2265 = vadd.f32 0.0, %v2264
        %v2266 = vpop.f32.mrf.mxu0
        %2267 = vmatprep.mubr.f32.mxu0 0.0
        %2268 = vmatmul.mubr.f32.gmra.mxu0 %v2123
        %v2269 = vpop.f32.mrf.mxu0
        %v2270 = vadd.f32 0.0, %v2269
        %v2271 = vpop.f32.mrf.mxu0
        %2272 = vdwg.mxu0
        %v2273 = vadd.f32 %v2043, %v2195
        %v2274 = vadd.f32 %v2044, %v2200
        %v2275 = vadd.f32 %v2045, %v2205
        %v2276 = vadd.f32 %v2046, %v2210
        %v2277 = vadd.f32 %v2047, %v2215
        %v2278 = vadd.f32 %v2048, %v2220
        %v2279 = vadd.f32 %v2049, %v2225
        %v2280 = vadd.f32 %v2050, %v2230
        %v2281 = vadd.f32 %v2051, %v2235
        %v2282 = vadd.f32 %v2052, %v2240
        %v2283 = vadd.f32 %v2053, %v2245
        %v2284 = vadd.f32 %v2054, %v2250
        %v2285 = vadd.f32 %v2055, %v2255
        %v2286 = vadd.f32 %v2056, %v2260
        %v2287 = vadd.f32 %v2057, %v2265
        %v2288 = vadd.f32 %v2058, %v2270
        %v2289 = vld [vmem:[%s249 + $0x9] sm:$0xff]
        %v2290 = vld [vmem:[%s249 + $0x11] sm:$0xff]
        %v2291 = vld [vmem:[%s249 + $0x19] sm:$0xff]
        %v2292 = vld [vmem:[%s249 + $0x21] sm:$0xff]
        %v2293 = vld [vmem:[%s249 + $0x29] sm:$0xff]
        %v2294 = vld [vmem:[%s249 + $0x31] sm:$0xff]
        %v2295 = vld [vmem:[%s249 + $0x39] sm:$0xff]
        %v2296 = vld [vmem:[%s249 + $0x41] sm:$0xff]
        %v2297 = vld [vmem:[%s249 + $0x49] sm:$0xff]
        %v2298 = vld [vmem:[%s249 + $0x51] sm:$0xff]
        %v2299 = vld [vmem:[%s249 + $0x59] sm:$0xff]
        %v2300 = vld [vmem:[%s249 + $0x61] sm:$0xff]
        %v2301 = vld [vmem:[%s249 + $0x69] sm:$0xff]
        %v2302 = vld [vmem:[%s249 + $0x71] sm:$0xff]
        %v2303 = vld [vmem:[%s249 + $0x79] sm:$0xff]
        %v2304 = vld [vmem:[%s249 + $0x81] sm:$0x3f]
        %s2305 = scalar_lea.vmem %s1, 36
        %v2306 = vld [vmem:[%s2305] sm:$0xf]
        %v2308 = vsel %vm285, %v2289, 0
        %v2311 = vsel %vm285, %v2290, 0
        %v2314 = vsel %vm285, %v2291, 0
        %v2317 = vsel %vm285, %v2292, 0
        %v2320 = vsel %vm285, %v2293, 0
        %v2323 = vsel %vm285, %v2294, 0
        %v2326 = vsel %vm285, %v2295, 0
        %v2329 = vsel %vm285, %v2296, 0
        %v2332 = vsel %vm285, %v2297, 0
        %v2335 = vsel %vm285, %v2298, 0
        %v2338 = vsel %vm285, %v2299, 0
        %v2341 = vsel %vm285, %v2300, 0
        %v2344 = vsel %vm285, %v2301, 0
        %v2347 = vsel %vm285, %v2302, 0
        %v2350 = vsel %vm285, %v2303, 0
        %v2353 = vsel %vm285, %v2304, 0
        %v2356 = vsel %vm334, %v2306, 0
        %2358 = vmatprep.subr.mxu0 0.0
        %2359 = vmatpush1.msra.mxu0 0.0
        %2360 = vmatprep.subr.mxu0 0.0
        %2361 = vmatpush1.msra.mxu0 0.0
        %2362 = vmatprep.subr.mxu0 0.0
        %2363 = vmatpush1.msra.mxu0 0.0
        %2364 = vmatprep.subr.mxu0 0.0
        %2365 = vmatpush1.msra.mxu0 0.0
        %2366 = vmatprep.subr.mxu0 0.0
        %2367 = vmatpush1.msra.mxu0 0.0
        %2368 = vmatprep.subr.mxu0 0.0
        %2369 = vmatpush1.msra.mxu0 0.0
        %2370 = vmatprep.subr.mxu0 0.0
        %2371 = vmatpush1.msra.mxu0 0.0
        %2372 = vmatprep.subr.mxu0 0.0
        %2373 = vmatpush1.msra.mxu0 0.0
        %2374 = vmatprep.subr.mxu0 0.0
        %2375 = vmatpush1.msra.mxu0 0.0
        %2376 = vmatprep.subr.mxu0 0.0
        %2377 = vmatpush1.msra.mxu0 0.0
        %2378 = vmatprep.subr.mxu0 0.0
        %2379 = vmatpush1.msra.mxu0 0.0
        %2380 = vmatprep.subr.mxu0 0.0
        %2381 = vmatpush1.msra.mxu0 0.0
        %2382 = vmatprep.subr.mxu0 0.0
        %2383 = vmatpush1.msra.mxu0 0.0
        %2384 = vmatprep.subr.mxu0 0.0
        %2385 = vmatpush1.msra.mxu0 0.0
        %2386 = vmatprep.subr.mxu0 0.0
        %2387 = vmatpush1.msra.mxu0 0.0
        %2388 = vmatprep.subr.mxu0 0.0
        %2389 = vmatpush1.msra.mxu0 %v2356
        %2390 = vmatprep.subr.mxu0 0.0
        %2391 = vmatpush2.msra.mxu0 0.0
        %2392 = vmatprep.subr.mxu0 0.0
        %2393 = vmatpush2.msra.mxu0 0.0
        %2394 = vmatprep.subr.mxu0 0.0
        %2395 = vmatpush2.msra.mxu0 0.0
        %2396 = vmatprep.subr.mxu0 0.0
        %2397 = vmatpush2.msra.mxu0 0.0
        %2398 = vmatprep.subr.mxu0 0.0
        %2399 = vmatpush2.msra.mxu0 0.0
        %2400 = vmatprep.subr.mxu0 0.0
        %2401 = vmatpush2.msra.mxu0 0.0
        %2402 = vmatprep.subr.mxu0 0.0
        %2403 = vmatpush2.msra.mxu0 0.0
        %2404 = vmatprep.subr.mxu0 0.0
        %2405 = vmatpush2.msra.mxu0 0.0
        %2406 = vmatprep.subr.mxu0 0.0
        %2407 = vmatpush2.msra.mxu0 0.0
        %2408 = vmatprep.subr.mxu0 0.0
        %2409 = vmatpush2.msra.mxu0 0.0
        %2410 = vmatprep.subr.mxu0 0.0
        %2411 = vmatpush2.msra.mxu0 0.0
        %2412 = vmatprep.subr.mxu0 0.0
        %2413 = vmatpush2.msra.mxu0 0.0
        %2414 = vmatprep.subr.mxu0 0.0
        %2415 = vmatpush2.msra.mxu0 0.0
        %2416 = vmatprep.subr.mxu0 0.0
        %2417 = vmatpush2.msra.mxu0 0.0
        %2418 = vmatprep.subr.mxu0 0.0
        %2419 = vmatpush2.msra.mxu0 0.0
        %2420 = vmatprep.subr.mxu0 0.0
        %2421 = vmatpush2.msra.mxu0 0.0
        %2422 = vmatprep.mubr.f32.mxu0 0.0
        %2423 = vmatmul.mubr.f32.gmra.mxu0 %v2308
        %v2424 = vpop.f32.mrf.mxu0
        %v2425 = vadd.f32 0.0, %v2424
        %v2426 = vpop.f32.mrf.mxu0
        %2427 = vmatprep.mubr.f32.mxu0 0.0
        %2428 = vmatmul.mubr.f32.gmra.mxu0 %v2311
        %v2429 = vpop.f32.mrf.mxu0
        %v2430 = vadd.f32 0.0, %v2429
        %v2431 = vpop.f32.mrf.mxu0
        %2432 = vmatprep.mubr.f32.mxu0 0.0
        %2433 = vmatmul.mubr.f32.gmra.mxu0 %v2314
        %v2434 = vpop.f32.mrf.mxu0
        %v2435 = vadd.f32 0.0, %v2434
        %v2436 = vpop.f32.mrf.mxu0
        %2437 = vmatprep.mubr.f32.mxu0 0.0
        %2438 = vmatmul.mubr.f32.gmra.mxu0 %v2317
        %v2439 = vpop.f32.mrf.mxu0
        %v2440 = vadd.f32 0.0, %v2439
        %v2441 = vpop.f32.mrf.mxu0
        %2442 = vmatprep.mubr.f32.mxu0 0.0
        %2443 = vmatmul.mubr.f32.gmra.mxu0 %v2320
        %v2444 = vpop.f32.mrf.mxu0
        %v2445 = vadd.f32 0.0, %v2444
        %v2446 = vpop.f32.mrf.mxu0
        %2447 = vmatprep.mubr.f32.mxu0 0.0
        %2448 = vmatmul.mubr.f32.gmra.mxu0 %v2323
        %v2449 = vpop.f32.mrf.mxu0
        %v2450 = vadd.f32 0.0, %v2449
        %v2451 = vpop.f32.mrf.mxu0
        %2452 = vmatprep.mubr.f32.mxu0 0.0
        %2453 = vmatmul.mubr.f32.gmra.mxu0 %v2326
        %v2454 = vpop.f32.mrf.mxu0
        %v2455 = vadd.f32 0.0, %v2454
        %v2456 = vpop.f32.mrf.mxu0
        %2457 = vmatprep.mubr.f32.mxu0 0.0
        %2458 = vmatmul.mubr.f32.gmra.mxu0 %v2329
        %v2459 = vpop.f32.mrf.mxu0
        %v2460 = vadd.f32 0.0, %v2459
        %v2461 = vpop.f32.mrf.mxu0
        %2462 = vmatprep.mubr.f32.mxu0 0.0
        %2463 = vmatmul.mubr.f32.gmra.mxu0 %v2332
        %v2464 = vpop.f32.mrf.mxu0
        %v2465 = vadd.f32 0.0, %v2464
        %v2466 = vpop.f32.mrf.mxu0
        %2467 = vmatprep.mubr.f32.mxu0 0.0
        %2468 = vmatmul.mubr.f32.gmra.mxu0 %v2335
        %v2469 = vpop.f32.mrf.mxu0
        %v2470 = vadd.f32 0.0, %v2469
        %v2471 = vpop.f32.mrf.mxu0
        %2472 = vmatprep.mubr.f32.mxu0 0.0
        %2473 = vmatmul.mubr.f32.gmra.mxu0 %v2338
        %v2474 = vpop.f32.mrf.mxu0
        %v2475 = vadd.f32 0.0, %v2474
        %v2476 = vpop.f32.mrf.mxu0
        %2477 = vmatprep.mubr.f32.mxu0 0.0
        %2478 = vmatmul.mubr.f32.gmra.mxu0 %v2341
        %v2479 = vpop.f32.mrf.mxu0
        %v2480 = vadd.f32 0.0, %v2479
        %v2481 = vpop.f32.mrf.mxu0
        %2482 = vmatprep.mubr.f32.mxu0 0.0
        %2483 = vmatmul.mubr.f32.gmra.mxu0 %v2344
        %v2484 = vpop.f32.mrf.mxu0
        %v2485 = vadd.f32 0.0, %v2484
        %v2486 = vpop.f32.mrf.mxu0
        %2487 = vmatprep.mubr.f32.mxu0 0.0
        %2488 = vmatmul.mubr.f32.gmra.mxu0 %v2347
        %v2489 = vpop.f32.mrf.mxu0
        %v2490 = vadd.f32 0.0, %v2489
        %v2491 = vpop.f32.mrf.mxu0
        %2492 = vmatprep.mubr.f32.mxu0 0.0
        %2493 = vmatmul.mubr.f32.gmra.mxu0 %v2350
        %v2494 = vpop.f32.mrf.mxu0
        %v2495 = vadd.f32 0.0, %v2494
        %v2496 = vpop.f32.mrf.mxu0
        %2497 = vmatprep.mubr.f32.mxu0 0.0
        %2498 = vmatmul.mubr.f32.gmra.mxu0 %v2353
        %v2499 = vpop.f32.mrf.mxu0
        %v2500 = vadd.f32 0.0, %v2499
        %v2501 = vpop.f32.mrf.mxu0
        %2502 = vdwg.mxu0
        %v2503 = vadd.f32 %v2273, %v2425
        %v2504 = vadd.f32 %v2274, %v2430
        %v2505 = vadd.f32 %v2275, %v2435
        %v2506 = vadd.f32 %v2276, %v2440
        %v2507 = vadd.f32 %v2277, %v2445
        %v2508 = vadd.f32 %v2278, %v2450
        %v2509 = vadd.f32 %v2279, %v2455
        %v2510 = vadd.f32 %v2280, %v2460
        %v2511 = vadd.f32 %v2281, %v2465
        %v2512 = vadd.f32 %v2282, %v2470
        %v2513 = vadd.f32 %v2283, %v2475
        %v2514 = vadd.f32 %v2284, %v2480
        %v2515 = vadd.f32 %v2285, %v2485
        %v2516 = vadd.f32 %v2286, %v2490
        %v2517 = vadd.f32 %v2287, %v2495
        %v2518 = vadd.f32 %v2288, %v2500
        %v2519 = vld [vmem:[%s249 + $0xa] sm:$0xff]
        %v2520 = vld [vmem:[%s249 + $0x12] sm:$0xff]
        %v2521 = vld [vmem:[%s249 + $0x1a] sm:$0xff]
        %v2522 = vld [vmem:[%s249 + $0x22] sm:$0xff]
        %v2523 = vld [vmem:[%s249 + $0x2a] sm:$0xff]
        %v2524 = vld [vmem:[%s249 + $0x32] sm:$0xff]
        %v2525 = vld [vmem:[%s249 + $0x3a] sm:$0xff]
        %v2526 = vld [vmem:[%s249 + $0x42] sm:$0xff]
        %v2527 = vld [vmem:[%s249 + $0x4a] sm:$0xff]
        %v2528 = vld [vmem:[%s249 + $0x52] sm:$0xff]
        %v2529 = vld [vmem:[%s249 + $0x5a] sm:$0xff]
        %v2530 = vld [vmem:[%s249 + $0x62] sm:$0xff]
        %v2531 = vld [vmem:[%s249 + $0x6a] sm:$0xff]
        %v2532 = vld [vmem:[%s249 + $0x72] sm:$0xff]
        %v2533 = vld [vmem:[%s249 + $0x7a] sm:$0xff]
        %v2534 = vld [vmem:[%s249 + $0x82] sm:$0x3f]
        %s2535 = scalar_lea.vmem %s1, 40
        %v2536 = vld [vmem:[%s2535] sm:$0xf]
        %v2538 = vsel %vm285, %v2519, 0
        %v2541 = vsel %vm285, %v2520, 0
        %v2544 = vsel %vm285, %v2521, 0
        %v2547 = vsel %vm285, %v2522, 0
        %v2550 = vsel %vm285, %v2523, 0
        %v2553 = vsel %vm285, %v2524, 0
        %v2556 = vsel %vm285, %v2525, 0
        %v2559 = vsel %vm285, %v2526, 0
        %v2562 = vsel %vm285, %v2527, 0
        %v2565 = vsel %vm285, %v2528, 0
        %v2568 = vsel %vm285, %v2529, 0
        %v2571 = vsel %vm285, %v2530, 0
        %v2574 = vsel %vm285, %v2531, 0
        %v2577 = vsel %vm285, %v2532, 0
        %v2580 = vsel %vm285, %v2533, 0
        %v2583 = vsel %vm285, %v2534, 0
        %v2586 = vsel %vm334, %v2536, 0
        %2588 = vmatprep.subr.mxu0 0.0
        %2589 = vmatpush1.msra.mxu0 0.0
        %2590 = vmatprep.subr.mxu0 0.0
        %2591 = vmatpush1.msra.mxu0 0.0
        %2592 = vmatprep.subr.mxu0 0.0
        %2593 = vmatpush1.msra.mxu0 0.0
        %2594 = vmatprep.subr.mxu0 0.0
        %2595 = vmatpush1.msra.mxu0 0.0
        %2596 = vmatprep.subr.mxu0 0.0
        %2597 = vmatpush1.msra.mxu0 0.0
        %2598 = vmatprep.subr.mxu0 0.0
        %2599 = vmatpush1.msra.mxu0 0.0
        %2600 = vmatprep.subr.mxu0 0.0
        %2601 = vmatpush1.msra.mxu0 0.0
        %2602 = vmatprep.subr.mxu0 0.0
        %2603 = vmatpush1.msra.mxu0 0.0
        %2604 = vmatprep.subr.mxu0 0.0
        %2605 = vmatpush1.msra.mxu0 0.0
        %2606 = vmatprep.subr.mxu0 0.0
        %2607 = vmatpush1.msra.mxu0 0.0
        %2608 = vmatprep.subr.mxu0 0.0
        %2609 = vmatpush1.msra.mxu0 0.0
        %2610 = vmatprep.subr.mxu0 0.0
        %2611 = vmatpush1.msra.mxu0 0.0
        %2612 = vmatprep.subr.mxu0 0.0
        %2613 = vmatpush1.msra.mxu0 0.0
        %2614 = vmatprep.subr.mxu0 0.0
        %2615 = vmatpush1.msra.mxu0 0.0
        %2616 = vmatprep.subr.mxu0 0.0
        %2617 = vmatpush1.msra.mxu0 0.0
        %2618 = vmatprep.subr.mxu0 0.0
        %2619 = vmatpush1.msra.mxu0 %v2586
        %2620 = vmatprep.subr.mxu0 0.0
        %2621 = vmatpush2.msra.mxu0 0.0
        %2622 = vmatprep.subr.mxu0 0.0
        %2623 = vmatpush2.msra.mxu0 0.0
        %2624 = vmatprep.subr.mxu0 0.0
        %2625 = vmatpush2.msra.mxu0 0.0
        %2626 = vmatprep.subr.mxu0 0.0
        %2627 = vmatpush2.msra.mxu0 0.0
        %2628 = vmatprep.subr.mxu0 0.0
        %2629 = vmatpush2.msra.mxu0 0.0
        %2630 = vmatprep.subr.mxu0 0.0
        %2631 = vmatpush2.msra.mxu0 0.0
        %2632 = vmatprep.subr.mxu0 0.0
        %2633 = vmatpush2.msra.mxu0 0.0
        %2634 = vmatprep.subr.mxu0 0.0
        %2635 = vmatpush2.msra.mxu0 0.0
        %2636 = vmatprep.subr.mxu0 0.0
        %2637 = vmatpush2.msra.mxu0 0.0
        %2638 = vmatprep.subr.mxu0 0.0
        %2639 = vmatpush2.msra.mxu0 0.0
        %2640 = vmatprep.subr.mxu0 0.0
        %2641 = vmatpush2.msra.mxu0 0.0
        %2642 = vmatprep.subr.mxu0 0.0
        %2643 = vmatpush2.msra.mxu0 0.0
        %2644 = vmatprep.subr.mxu0 0.0
        %2645 = vmatpush2.msra.mxu0 0.0
        %2646 = vmatprep.subr.mxu0 0.0
        %2647 = vmatpush2.msra.mxu0 0.0
        %2648 = vmatprep.subr.mxu0 0.0
        %2649 = vmatpush2.msra.mxu0 0.0
        %2650 = vmatprep.subr.mxu0 0.0
        %2651 = vmatpush2.msra.mxu0 0.0
        %2652 = vmatprep.mubr.f32.mxu0 0.0
        %2653 = vmatmul.mubr.f32.gmra.mxu0 %v2538
        %v2654 = vpop.f32.mrf.mxu0
        %v2655 = vadd.f32 0.0, %v2654
        %v2656 = vpop.f32.mrf.mxu0
        %2657 = vmatprep.mubr.f32.mxu0 0.0
        %2658 = vmatmul.mubr.f32.gmra.mxu0 %v2541
        %v2659 = vpop.f32.mrf.mxu0
        %v2660 = vadd.f32 0.0, %v2659
        %v2661 = vpop.f32.mrf.mxu0
        %2662 = vmatprep.mubr.f32.mxu0 0.0
        %2663 = vmatmul.mubr.f32.gmra.mxu0 %v2544
        %v2664 = vpop.f32.mrf.mxu0
        %v2665 = vadd.f32 0.0, %v2664
        %v2666 = vpop.f32.mrf.mxu0
        %2667 = vmatprep.mubr.f32.mxu0 0.0
        %2668 = vmatmul.mubr.f32.gmra.mxu0 %v2547
        %v2669 = vpop.f32.mrf.mxu0
        %v2670 = vadd.f32 0.0, %v2669
        %v2671 = vpop.f32.mrf.mxu0
        %2672 = vmatprep.mubr.f32.mxu0 0.0
        %2673 = vmatmul.mubr.f32.gmra.mxu0 %v2550
        %v2674 = vpop.f32.mrf.mxu0
        %v2675 = vadd.f32 0.0, %v2674
        %v2676 = vpop.f32.mrf.mxu0
        %2677 = vmatprep.mubr.f32.mxu0 0.0
        %2678 = vmatmul.mubr.f32.gmra.mxu0 %v2553
        %v2679 = vpop.f32.mrf.mxu0
        %v2680 = vadd.f32 0.0, %v2679
        %v2681 = vpop.f32.mrf.mxu0
        %2682 = vmatprep.mubr.f32.mxu0 0.0
        %2683 = vmatmul.mubr.f32.gmra.mxu0 %v2556
        %v2684 = vpop.f32.mrf.mxu0
        %v2685 = vadd.f32 0.0, %v2684
        %v2686 = vpop.f32.mrf.mxu0
        %2687 = vmatprep.mubr.f32.mxu0 0.0
        %2688 = vmatmul.mubr.f32.gmra.mxu0 %v2559
        %v2689 = vpop.f32.mrf.mxu0
        %v2690 = vadd.f32 0.0, %v2689
        %v2691 = vpop.f32.mrf.mxu0
        %2692 = vmatprep.mubr.f32.mxu0 0.0
        %2693 = vmatmul.mubr.f32.gmra.mxu0 %v2562
        %v2694 = vpop.f32.mrf.mxu0
        %v2695 = vadd.f32 0.0, %v2694
        %v2696 = vpop.f32.mrf.mxu0
        %2697 = vmatprep.mubr.f32.mxu0 0.0
        %2698 = vmatmul.mubr.f32.gmra.mxu0 %v2565
        %v2699 = vpop.f32.mrf.mxu0
        %v2700 = vadd.f32 0.0, %v2699
        %v2701 = vpop.f32.mrf.mxu0
        %2702 = vmatprep.mubr.f32.mxu0 0.0
        %2703 = vmatmul.mubr.f32.gmra.mxu0 %v2568
        %v2704 = vpop.f32.mrf.mxu0
        %v2705 = vadd.f32 0.0, %v2704
        %v2706 = vpop.f32.mrf.mxu0
        %2707 = vmatprep.mubr.f32.mxu0 0.0
        %2708 = vmatmul.mubr.f32.gmra.mxu0 %v2571
        %v2709 = vpop.f32.mrf.mxu0
        %v2710 = vadd.f32 0.0, %v2709
        %v2711 = vpop.f32.mrf.mxu0
        %2712 = vmatprep.mubr.f32.mxu0 0.0
        %2713 = vmatmul.mubr.f32.gmra.mxu0 %v2574
        %v2714 = vpop.f32.mrf.mxu0
        %v2715 = vadd.f32 0.0, %v2714
        %v2716 = vpop.f32.mrf.mxu0
        %2717 = vmatprep.mubr.f32.mxu0 0.0
        %2718 = vmatmul.mubr.f32.gmra.mxu0 %v2577
        %v2719 = vpop.f32.mrf.mxu0
        %v2720 = vadd.f32 0.0, %v2719
        %v2721 = vpop.f32.mrf.mxu0
        %2722 = vmatprep.mubr.f32.mxu0 0.0
        %2723 = vmatmul.mubr.f32.gmra.mxu0 %v2580
        %v2724 = vpop.f32.mrf.mxu0
        %v2725 = vadd.f32 0.0, %v2724
        %v2726 = vpop.f32.mrf.mxu0
        %2727 = vmatprep.mubr.f32.mxu0 0.0
        %2728 = vmatmul.mubr.f32.gmra.mxu0 %v2583
        %v2729 = vpop.f32.mrf.mxu0
        %v2730 = vadd.f32 0.0, %v2729
        %v2731 = vpop.f32.mrf.mxu0
        %2732 = vdwg.mxu0
        %v2733 = vadd.f32 %v2503, %v2655
        %v2734 = vadd.f32 %v2504, %v2660
        %v2735 = vadd.f32 %v2505, %v2665
        %v2736 = vadd.f32 %v2506, %v2670
        %v2737 = vadd.f32 %v2507, %v2675
        %v2738 = vadd.f32 %v2508, %v2680
        %v2739 = vadd.f32 %v2509, %v2685
        %v2740 = vadd.f32 %v2510, %v2690
        %v2741 = vadd.f32 %v2511, %v2695
        %v2742 = vadd.f32 %v2512, %v2700
        %v2743 = vadd.f32 %v2513, %v2705
        %v2744 = vadd.f32 %v2514, %v2710
        %v2745 = vadd.f32 %v2515, %v2715
        %v2746 = vadd.f32 %v2516, %v2720
        %v2747 = vadd.f32 %v2517, %v2725
        %v2748 = vadd.f32 %v2518, %v2730
        %v2749 = vld [vmem:[%s249 + $0xb] sm:$0xff]
        %v2750 = vld [vmem:[%s249 + $0x13] sm:$0xff]
        %v2751 = vld [vmem:[%s249 + $0x1b] sm:$0xff]
        %v2752 = vld [vmem:[%s249 + $0x23] sm:$0xff]
        %v2753 = vld [vmem:[%s249 + $0x2b] sm:$0xff]
        %v2754 = vld [vmem:[%s249 + $0x33] sm:$0xff]
        %v2755 = vld [vmem:[%s249 + $0x3b] sm:$0xff]
        %v2756 = vld [vmem:[%s249 + $0x43] sm:$0xff]
        %v2757 = vld [vmem:[%s249 + $0x4b] sm:$0xff]
        %v2758 = vld [vmem:[%s249 + $0x53] sm:$0xff]
        %v2759 = vld [vmem:[%s249 + $0x5b] sm:$0xff]
        %v2760 = vld [vmem:[%s249 + $0x63] sm:$0xff]
        %v2761 = vld [vmem:[%s249 + $0x6b] sm:$0xff]
        %v2762 = vld [vmem:[%s249 + $0x73] sm:$0xff]
        %v2763 = vld [vmem:[%s249 + $0x7b] sm:$0xff]
        %v2764 = vld [vmem:[%s249 + $0x83] sm:$0x3f]
        %s2765 = scalar_lea.vmem %s1, 44
        %v2766 = vld [vmem:[%s2765] sm:$0xf]
        %v2768 = vsel %vm285, %v2749, 0
        %v2771 = vsel %vm285, %v2750, 0
        %v2774 = vsel %vm285, %v2751, 0
        %v2777 = vsel %vm285, %v2752, 0
        %v2780 = vsel %vm285, %v2753, 0
        %v2783 = vsel %vm285, %v2754, 0
        %v2786 = vsel %vm285, %v2755, 0
        %v2789 = vsel %vm285, %v2756, 0
        %v2792 = vsel %vm285, %v2757, 0
        %v2795 = vsel %vm285, %v2758, 0
        %v2798 = vsel %vm285, %v2759, 0
        %v2801 = vsel %vm285, %v2760, 0
        %v2804 = vsel %vm285, %v2761, 0
        %v2807 = vsel %vm285, %v2762, 0
        %v2810 = vsel %vm285, %v2763, 0
        %v2813 = vsel %vm285, %v2764, 0
        %v2816 = vsel %vm334, %v2766, 0
        %2818 = vmatprep.subr.mxu0 0.0
        %2819 = vmatpush1.msra.mxu0 0.0
        %2820 = vmatprep.subr.mxu0 0.0
        %2821 = vmatpush1.msra.mxu0 0.0
        %2822 = vmatprep.subr.mxu0 0.0
        %2823 = vmatpush1.msra.mxu0 0.0
        %2824 = vmatprep.subr.mxu0 0.0
        %2825 = vmatpush1.msra.mxu0 0.0
        %2826 = vmatprep.subr.mxu0 0.0
        %2827 = vmatpush1.msra.mxu0 0.0
        %2828 = vmatprep.subr.mxu0 0.0
        %2829 = vmatpush1.msra.mxu0 0.0
        %2830 = vmatprep.subr.mxu0 0.0
        %2831 = vmatpush1.msra.mxu0 0.0
        %2832 = vmatprep.subr.mxu0 0.0
        %2833 = vmatpush1.msra.mxu0 0.0
        %2834 = vmatprep.subr.mxu0 0.0
        %2835 = vmatpush1.msra.mxu0 0.0
        %2836 = vmatprep.subr.mxu0 0.0
        %2837 = vmatpush1.msra.mxu0 0.0
        %2838 = vmatprep.subr.mxu0 0.0
        %2839 = vmatpush1.msra.mxu0 0.0
        %2840 = vmatprep.subr.mxu0 0.0
        %2841 = vmatpush1.msra.mxu0 0.0
        %2842 = vmatprep.subr.mxu0 0.0
        %2843 = vmatpush1.msra.mxu0 0.0
        %2844 = vmatprep.subr.mxu0 0.0
        %2845 = vmatpush1.msra.mxu0 0.0
        %2846 = vmatprep.subr.mxu0 0.0
        %2847 = vmatpush1.msra.mxu0 0.0
        %2848 = vmatprep.subr.mxu0 0.0
        %2849 = vmatpush1.msra.mxu0 %v2816
        %2850 = vmatprep.subr.mxu0 0.0
        %2851 = vmatpush2.msra.mxu0 0.0
        %2852 = vmatprep.subr.mxu0 0.0
        %2853 = vmatpush2.msra.mxu0 0.0
        %2854 = vmatprep.subr.mxu0 0.0
        %2855 = vmatpush2.msra.mxu0 0.0
        %2856 = vmatprep.subr.mxu0 0.0
        %2857 = vmatpush2.msra.mxu0 0.0
        %2858 = vmatprep.subr.mxu0 0.0
        %2859 = vmatpush2.msra.mxu0 0.0
        %2860 = vmatprep.subr.mxu0 0.0
        %2861 = vmatpush2.msra.mxu0 0.0
        %2862 = vmatprep.subr.mxu0 0.0
        %2863 = vmatpush2.msra.mxu0 0.0
        %2864 = vmatprep.subr.mxu0 0.0
        %2865 = vmatpush2.msra.mxu0 0.0
        %2866 = vmatprep.subr.mxu0 0.0
        %2867 = vmatpush2.msra.mxu0 0.0
        %2868 = vmatprep.subr.mxu0 0.0
        %2869 = vmatpush2.msra.mxu0 0.0
        %2870 = vmatprep.subr.mxu0 0.0
        %2871 = vmatpush2.msra.mxu0 0.0
        %2872 = vmatprep.subr.mxu0 0.0
        %2873 = vmatpush2.msra.mxu0 0.0
        %2874 = vmatprep.subr.mxu0 0.0
        %2875 = vmatpush2.msra.mxu0 0.0
        %2876 = vmatprep.subr.mxu0 0.0
        %2877 = vmatpush2.msra.mxu0 0.0
        %2878 = vmatprep.subr.mxu0 0.0
        %2879 = vmatpush2.msra.mxu0 0.0
        %2880 = vmatprep.subr.mxu0 0.0
        %2881 = vmatpush2.msra.mxu0 0.0
        %2882 = vmatprep.mubr.f32.mxu0 0.0
        %2883 = vmatmul.mubr.f32.gmra.mxu0 %v2768
        %v2884 = vpop.f32.mrf.mxu0
        %v2885 = vadd.f32 0.0, %v2884
        %v2886 = vpop.f32.mrf.mxu0
        %2887 = vmatprep.mubr.f32.mxu0 0.0
        %2888 = vmatmul.mubr.f32.gmra.mxu0 %v2771
        %v2889 = vpop.f32.mrf.mxu0
        %v2890 = vadd.f32 0.0, %v2889
        %v2891 = vpop.f32.mrf.mxu0
        %2892 = vmatprep.mubr.f32.mxu0 0.0
        %2893 = vmatmul.mubr.f32.gmra.mxu0 %v2774
        %v2894 = vpop.f32.mrf.mxu0
        %v2895 = vadd.f32 0.0, %v2894
        %v2896 = vpop.f32.mrf.mxu0
        %2897 = vmatprep.mubr.f32.mxu0 0.0
        %2898 = vmatmul.mubr.f32.gmra.mxu0 %v2777
        %v2899 = vpop.f32.mrf.mxu0
        %v2900 = vadd.f32 0.0, %v2899
        %v2901 = vpop.f32.mrf.mxu0
        %2902 = vmatprep.mubr.f32.mxu0 0.0
        %2903 = vmatmul.mubr.f32.gmra.mxu0 %v2780
        %v2904 = vpop.f32.mrf.mxu0
        %v2905 = vadd.f32 0.0, %v2904
        %v2906 = vpop.f32.mrf.mxu0
        %2907 = vmatprep.mubr.f32.mxu0 0.0
        %2908 = vmatmul.mubr.f32.gmra.mxu0 %v2783
        %v2909 = vpop.f32.mrf.mxu0
        %v2910 = vadd.f32 0.0, %v2909
        %v2911 = vpop.f32.mrf.mxu0
        %2912 = vmatprep.mubr.f32.mxu0 0.0
        %2913 = vmatmul.mubr.f32.gmra.mxu0 %v2786
        %v2914 = vpop.f32.mrf.mxu0
        %v2915 = vadd.f32 0.0, %v2914
        %v2916 = vpop.f32.mrf.mxu0
        %2917 = vmatprep.mubr.f32.mxu0 0.0
        %2918 = vmatmul.mubr.f32.gmra.mxu0 %v2789
        %v2919 = vpop.f32.mrf.mxu0
        %v2920 = vadd.f32 0.0, %v2919
        %v2921 = vpop.f32.mrf.mxu0
        %2922 = vmatprep.mubr.f32.mxu0 0.0
        %2923 = vmatmul.mubr.f32.gmra.mxu0 %v2792
        %v2924 = vpop.f32.mrf.mxu0
        %v2925 = vadd.f32 0.0, %v2924
        %v2926 = vpop.f32.mrf.mxu0
        %2927 = vmatprep.mubr.f32.mxu0 0.0
        %2928 = vmatmul.mubr.f32.gmra.mxu0 %v2795
        %v2929 = vpop.f32.mrf.mxu0
        %v2930 = vadd.f32 0.0, %v2929
        %v2931 = vpop.f32.mrf.mxu0
        %2932 = vmatprep.mubr.f32.mxu0 0.0
        %2933 = vmatmul.mubr.f32.gmra.mxu0 %v2798
        %v2934 = vpop.f32.mrf.mxu0
        %v2935 = vadd.f32 0.0, %v2934
        %v2936 = vpop.f32.mrf.mxu0
        %2937 = vmatprep.mubr.f32.mxu0 0.0
        %2938 = vmatmul.mubr.f32.gmra.mxu0 %v2801
        %v2939 = vpop.f32.mrf.mxu0
        %v2940 = vadd.f32 0.0, %v2939
        %v2941 = vpop.f32.mrf.mxu0
        %2942 = vmatprep.mubr.f32.mxu0 0.0
        %2943 = vmatmul.mubr.f32.gmra.mxu0 %v2804
        %v2944 = vpop.f32.mrf.mxu0
        %v2945 = vadd.f32 0.0, %v2944
        %v2946 = vpop.f32.mrf.mxu0
        %2947 = vmatprep.mubr.f32.mxu0 0.0
        %2948 = vmatmul.mubr.f32.gmra.mxu0 %v2807
        %v2949 = vpop.f32.mrf.mxu0
        %v2950 = vadd.f32 0.0, %v2949
        %v2951 = vpop.f32.mrf.mxu0
        %2952 = vmatprep.mubr.f32.mxu0 0.0
        %2953 = vmatmul.mubr.f32.gmra.mxu0 %v2810
        %v2954 = vpop.f32.mrf.mxu0
        %v2955 = vadd.f32 0.0, %v2954
        %v2956 = vpop.f32.mrf.mxu0
        %2957 = vmatprep.mubr.f32.mxu0 0.0
        %2958 = vmatmul.mubr.f32.gmra.mxu0 %v2813
        %v2959 = vpop.f32.mrf.mxu0
        %v2960 = vadd.f32 0.0, %v2959
        %v2961 = vpop.f32.mrf.mxu0
        %2962 = vdwg.mxu0
        %v2963 = vadd.f32 %v2733, %v2885
        %v2964 = vadd.f32 %v2734, %v2890
        %v2965 = vadd.f32 %v2735, %v2895
        %v2966 = vadd.f32 %v2736, %v2900
        %v2967 = vadd.f32 %v2737, %v2905
        %v2968 = vadd.f32 %v2738, %v2910
        %v2969 = vadd.f32 %v2739, %v2915
        %v2970 = vadd.f32 %v2740, %v2920
        %v2971 = vadd.f32 %v2741, %v2925
        %v2972 = vadd.f32 %v2742, %v2930
        %v2973 = vadd.f32 %v2743, %v2935
        %v2974 = vadd.f32 %v2744, %v2940
        %v2975 = vadd.f32 %v2745, %v2945
        %v2976 = vadd.f32 %v2746, %v2950
        %v2977 = vadd.f32 %v2747, %v2955
        %v2978 = vadd.f32 %v2748, %v2960
        %v2979 = vld [vmem:[%s249 + $0xc] sm:$0xff]
        %v2980 = vld [vmem:[%s249 + $0x14] sm:$0xff]
        %v2981 = vld [vmem:[%s249 + $0x1c] sm:$0xff]
        %v2982 = vld [vmem:[%s249 + $0x24] sm:$0xff]
        %v2983 = vld [vmem:[%s249 + $0x2c] sm:$0xff]
        %v2984 = vld [vmem:[%s249 + $0x34] sm:$0xff]
        %v2985 = vld [vmem:[%s249 + $0x3c] sm:$0xff]
        %v2986 = vld [vmem:[%s249 + $0x44] sm:$0xff]
        %v2987 = vld [vmem:[%s249 + $0x4c] sm:$0xff]
        %v2988 = vld [vmem:[%s249 + $0x54] sm:$0xff]
        %v2989 = vld [vmem:[%s249 + $0x5c] sm:$0xff]
        %v2990 = vld [vmem:[%s249 + $0x64] sm:$0xff]
        %v2991 = vld [vmem:[%s249 + $0x6c] sm:$0xff]
        %v2992 = vld [vmem:[%s249 + $0x74] sm:$0xff]
        %v2993 = vld [vmem:[%s249 + $0x7c] sm:$0xff]
        %v2994 = vld [vmem:[%s249 + $0x84] sm:$0x3f]
        %s2995 = scalar_lea.vmem %s1, 48
        %v2996 = vld [vmem:[%s2995] sm:$0xf]
        %v2998 = vsel %vm285, %v2979, 0
        %v3001 = vsel %vm285, %v2980, 0
        %v3004 = vsel %vm285, %v2981, 0
        %v3007 = vsel %vm285, %v2982, 0
        %v3010 = vsel %vm285, %v2983, 0
        %v3013 = vsel %vm285, %v2984, 0
        %v3016 = vsel %vm285, %v2985, 0
        %v3019 = vsel %vm285, %v2986, 0
        %v3022 = vsel %vm285, %v2987, 0
        %v3025 = vsel %vm285, %v2988, 0
        %v3028 = vsel %vm285, %v2989, 0
        %v3031 = vsel %vm285, %v2990, 0
        %v3034 = vsel %vm285, %v2991, 0
        %v3037 = vsel %vm285, %v2992, 0
        %v3040 = vsel %vm285, %v2993, 0
        %v3043 = vsel %vm285, %v2994, 0
        %v3046 = vsel %vm334, %v2996, 0
        %3048 = vmatprep.subr.mxu0 0.0
        %3049 = vmatpush1.msra.mxu0 0.0
        %3050 = vmatprep.subr.mxu0 0.0
        %3051 = vmatpush1.msra.mxu0 0.0
        %3052 = vmatprep.subr.mxu0 0.0
        %3053 = vmatpush1.msra.mxu0 0.0
        %3054 = vmatprep.subr.mxu0 0.0
        %3055 = vmatpush1.msra.mxu0 0.0
        %3056 = vmatprep.subr.mxu0 0.0
        %3057 = vmatpush1.msra.mxu0 0.0
        %3058 = vmatprep.subr.mxu0 0.0
        %3059 = vmatpush1.msra.mxu0 0.0
        %3060 = vmatprep.subr.mxu0 0.0
        %3061 = vmatpush1.msra.mxu0 0.0
        %3062 = vmatprep.subr.mxu0 0.0
        %3063 = vmatpush1.msra.mxu0 0.0
        %3064 = vmatprep.subr.mxu0 0.0
        %3065 = vmatpush1.msra.mxu0 0.0
        %3066 = vmatprep.subr.mxu0 0.0
        %3067 = vmatpush1.msra.mxu0 0.0
        %3068 = vmatprep.subr.mxu0 0.0
        %3069 = vmatpush1.msra.mxu0 0.0
        %3070 = vmatprep.subr.mxu0 0.0
        %3071 = vmatpush1.msra.mxu0 0.0
        %3072 = vmatprep.subr.mxu0 0.0
        %3073 = vmatpush1.msra.mxu0 0.0
        %3074 = vmatprep.subr.mxu0 0.0
        %3075 = vmatpush1.msra.mxu0 0.0
        %3076 = vmatprep.subr.mxu0 0.0
        %3077 = vmatpush1.msra.mxu0 0.0
        %3078 = vmatprep.subr.mxu0 0.0
        %3079 = vmatpush1.msra.mxu0 %v3046
        %3080 = vmatprep.subr.mxu0 0.0
        %3081 = vmatpush2.msra.mxu0 0.0
        %3082 = vmatprep.subr.mxu0 0.0
        %3083 = vmatpush2.msra.mxu0 0.0
        %3084 = vmatprep.subr.mxu0 0.0
        %3085 = vmatpush2.msra.mxu0 0.0
        %3086 = vmatprep.subr.mxu0 0.0
        %3087 = vmatpush2.msra.mxu0 0.0
        %3088 = vmatprep.subr.mxu0 0.0
        %3089 = vmatpush2.msra.mxu0 0.0
        %3090 = vmatprep.subr.mxu0 0.0
        %3091 = vmatpush2.msra.mxu0 0.0
        %3092 = vmatprep.subr.mxu0 0.0
        %3093 = vmatpush2.msra.mxu0 0.0
        %3094 = vmatprep.subr.mxu0 0.0
        %3095 = vmatpush2.msra.mxu0 0.0
        %3096 = vmatprep.subr.mxu0 0.0
        %3097 = vmatpush2.msra.mxu0 0.0
        %3098 = vmatprep.subr.mxu0 0.0
        %3099 = vmatpush2.msra.mxu0 0.0
        %3100 = vmatprep.subr.mxu0 0.0
        %3101 = vmatpush2.msra.mxu0 0.0
        %3102 = vmatprep.subr.mxu0 0.0
        %3103 = vmatpush2.msra.mxu0 0.0
        %3104 = vmatprep.subr.mxu0 0.0
        %3105 = vmatpush2.msra.mxu0 0.0
        %3106 = vmatprep.subr.mxu0 0.0
        %3107 = vmatpush2.msra.mxu0 0.0
        %3108 = vmatprep.subr.mxu0 0.0
        %3109 = vmatpush2.msra.mxu0 0.0
        %3110 = vmatprep.subr.mxu0 0.0
        %3111 = vmatpush2.msra.mxu0 0.0
        %3112 = vmatprep.mubr.f32.mxu0 0.0
        %3113 = vmatmul.mubr.f32.gmra.mxu0 %v2998
        %v3114 = vpop.f32.mrf.mxu0
        %v3115 = vadd.f32 0.0, %v3114
        %v3116 = vpop.f32.mrf.mxu0
        %3117 = vmatprep.mubr.f32.mxu0 0.0
        %3118 = vmatmul.mubr.f32.gmra.mxu0 %v3001
        %v3119 = vpop.f32.mrf.mxu0
        %v3120 = vadd.f32 0.0, %v3119
        %v3121 = vpop.f32.mrf.mxu0
        %3122 = vmatprep.mubr.f32.mxu0 0.0
        %3123 = vmatmul.mubr.f32.gmra.mxu0 %v3004
        %v3124 = vpop.f32.mrf.mxu0
        %v3125 = vadd.f32 0.0, %v3124
        %v3126 = vpop.f32.mrf.mxu0
        %3127 = vmatprep.mubr.f32.mxu0 0.0
        %3128 = vmatmul.mubr.f32.gmra.mxu0 %v3007
        %v3129 = vpop.f32.mrf.mxu0
        %v3130 = vadd.f32 0.0, %v3129
        %v3131 = vpop.f32.mrf.mxu0
        %3132 = vmatprep.mubr.f32.mxu0 0.0
        %3133 = vmatmul.mubr.f32.gmra.mxu0 %v3010
        %v3134 = vpop.f32.mrf.mxu0
        %v3135 = vadd.f32 0.0, %v3134
        %v3136 = vpop.f32.mrf.mxu0
        %3137 = vmatprep.mubr.f32.mxu0 0.0
        %3138 = vmatmul.mubr.f32.gmra.mxu0 %v3013
        %v3139 = vpop.f32.mrf.mxu0
        %v3140 = vadd.f32 0.0, %v3139
        %v3141 = vpop.f32.mrf.mxu0
        %3142 = vmatprep.mubr.f32.mxu0 0.0
        %3143 = vmatmul.mubr.f32.gmra.mxu0 %v3016
        %v3144 = vpop.f32.mrf.mxu0
        %v3145 = vadd.f32 0.0, %v3144
        %v3146 = vpop.f32.mrf.mxu0
        %3147 = vmatprep.mubr.f32.mxu0 0.0
        %3148 = vmatmul.mubr.f32.gmra.mxu0 %v3019
        %v3149 = vpop.f32.mrf.mxu0
        %v3150 = vadd.f32 0.0, %v3149
        %v3151 = vpop.f32.mrf.mxu0
        %3152 = vmatprep.mubr.f32.mxu0 0.0
        %3153 = vmatmul.mubr.f32.gmra.mxu0 %v3022
        %v3154 = vpop.f32.mrf.mxu0
        %v3155 = vadd.f32 0.0, %v3154
        %v3156 = vpop.f32.mrf.mxu0
        %3157 = vmatprep.mubr.f32.mxu0 0.0
        %3158 = vmatmul.mubr.f32.gmra.mxu0 %v3025
        %v3159 = vpop.f32.mrf.mxu0
        %v3160 = vadd.f32 0.0, %v3159
        %v3161 = vpop.f32.mrf.mxu0
        %3162 = vmatprep.mubr.f32.mxu0 0.0
        %3163 = vmatmul.mubr.f32.gmra.mxu0 %v3028
        %v3164 = vpop.f32.mrf.mxu0
        %v3165 = vadd.f32 0.0, %v3164
        %v3166 = vpop.f32.mrf.mxu0
        %3167 = vmatprep.mubr.f32.mxu0 0.0
        %3168 = vmatmul.mubr.f32.gmra.mxu0 %v3031
        %v3169 = vpop.f32.mrf.mxu0
        %v3170 = vadd.f32 0.0, %v3169
        %v3171 = vpop.f32.mrf.mxu0
        %3172 = vmatprep.mubr.f32.mxu0 0.0
        %3173 = vmatmul.mubr.f32.gmra.mxu0 %v3034
        %v3174 = vpop.f32.mrf.mxu0
        %v3175 = vadd.f32 0.0, %v3174
        %v3176 = vpop.f32.mrf.mxu0
        %3177 = vmatprep.mubr.f32.mxu0 0.0
        %3178 = vmatmul.mubr.f32.gmra.mxu0 %v3037
        %v3179 = vpop.f32.mrf.mxu0
        %v3180 = vadd.f32 0.0, %v3179
        %v3181 = vpop.f32.mrf.mxu0
        %3182 = vmatprep.mubr.f32.mxu0 0.0
        %3183 = vmatmul.mubr.f32.gmra.mxu0 %v3040
        %v3184 = vpop.f32.mrf.mxu0
        %v3185 = vadd.f32 0.0, %v3184
        %v3186 = vpop.f32.mrf.mxu0
        %3187 = vmatprep.mubr.f32.mxu0 0.0
        %3188 = vmatmul.mubr.f32.gmra.mxu0 %v3043
        %v3189 = vpop.f32.mrf.mxu0
        %v3190 = vadd.f32 0.0, %v3189
        %v3191 = vpop.f32.mrf.mxu0
        %3192 = vdwg.mxu0
        %v3193 = vadd.f32 %v2963, %v3115
        %v3194 = vadd.f32 %v2964, %v3120
        %v3195 = vadd.f32 %v2965, %v3125
        %v3196 = vadd.f32 %v2966, %v3130
        %v3197 = vadd.f32 %v2967, %v3135
        %v3198 = vadd.f32 %v2968, %v3140
        %v3199 = vadd.f32 %v2969, %v3145
        %v3200 = vadd.f32 %v2970, %v3150
        %v3201 = vadd.f32 %v2971, %v3155
        %v3202 = vadd.f32 %v2972, %v3160
        %v3203 = vadd.f32 %v2973, %v3165
        %v3204 = vadd.f32 %v2974, %v3170
        %v3205 = vadd.f32 %v2975, %v3175
        %v3206 = vadd.f32 %v2976, %v3180
        %v3207 = vadd.f32 %v2977, %v3185
        %v3208 = vadd.f32 %v2978, %v3190
        %v3209 = vld [vmem:[%s249 + $0xd] sm:$0xff]
        %v3210 = vld [vmem:[%s249 + $0x15] sm:$0xff]
        %v3211 = vld [vmem:[%s249 + $0x1d] sm:$0xff]
        %v3212 = vld [vmem:[%s249 + $0x25] sm:$0xff]
        %v3213 = vld [vmem:[%s249 + $0x2d] sm:$0xff]
        %v3214 = vld [vmem:[%s249 + $0x35] sm:$0xff]
        %v3215 = vld [vmem:[%s249 + $0x3d] sm:$0xff]
        %v3216 = vld [vmem:[%s249 + $0x45] sm:$0xff]
        %v3217 = vld [vmem:[%s249 + $0x4d] sm:$0xff]
        %v3218 = vld [vmem:[%s249 + $0x55] sm:$0xff]
        %v3219 = vld [vmem:[%s249 + $0x5d] sm:$0xff]
        %v3220 = vld [vmem:[%s249 + $0x65] sm:$0xff]
        %v3221 = vld [vmem:[%s249 + $0x6d] sm:$0xff]
        %v3222 = vld [vmem:[%s249 + $0x75] sm:$0xff]
        %v3223 = vld [vmem:[%s249 + $0x7d] sm:$0xff]
        %v3224 = vld [vmem:[%s249 + $0x85] sm:$0x3f]
        %s3225 = scalar_lea.vmem %s1, 52
        %v3226 = vld [vmem:[%s3225] sm:$0xf]
        %v3228 = vsel %vm285, %v3209, 0
        %v3231 = vsel %vm285, %v3210, 0
        %v3234 = vsel %vm285, %v3211, 0
        %v3237 = vsel %vm285, %v3212, 0
        %v3240 = vsel %vm285, %v3213, 0
        %v3243 = vsel %vm285, %v3214, 0
        %v3246 = vsel %vm285, %v3215, 0
        %v3249 = vsel %vm285, %v3216, 0
        %v3252 = vsel %vm285, %v3217, 0
        %v3255 = vsel %vm285, %v3218, 0
        %v3258 = vsel %vm285, %v3219, 0
        %v3261 = vsel %vm285, %v3220, 0
        %v3264 = vsel %vm285, %v3221, 0
        %v3267 = vsel %vm285, %v3222, 0
        %v3270 = vsel %vm285, %v3223, 0
        %v3273 = vsel %vm285, %v3224, 0
        %v3276 = vsel %vm334, %v3226, 0
        %3278 = vmatprep.subr.mxu0 0.0
        %3279 = vmatpush1.msra.mxu0 0.0
        %3280 = vmatprep.subr.mxu0 0.0
        %3281 = vmatpush1.msra.mxu0 0.0
        %3282 = vmatprep.subr.mxu0 0.0
        %3283 = vmatpush1.msra.mxu0 0.0
        %3284 = vmatprep.subr.mxu0 0.0
        %3285 = vmatpush1.msra.mxu0 0.0
        %3286 = vmatprep.subr.mxu0 0.0
        %3287 = vmatpush1.msra.mxu0 0.0
        %3288 = vmatprep.subr.mxu0 0.0
        %3289 = vmatpush1.msra.mxu0 0.0
        %3290 = vmatprep.subr.mxu0 0.0
        %3291 = vmatpush1.msra.mxu0 0.0
        %3292 = vmatprep.subr.mxu0 0.0
        %3293 = vmatpush1.msra.mxu0 0.0
        %3294 = vmatprep.subr.mxu0 0.0
        %3295 = vmatpush1.msra.mxu0 0.0
        %3296 = vmatprep.subr.mxu0 0.0
        %3297 = vmatpush1.msra.mxu0 0.0
        %3298 = vmatprep.subr.mxu0 0.0
        %3299 = vmatpush1.msra.mxu0 0.0
        %3300 = vmatprep.subr.mxu0 0.0
        %3301 = vmatpush1.msra.mxu0 0.0
        %3302 = vmatprep.subr.mxu0 0.0
        %3303 = vmatpush1.msra.mxu0 0.0
        %3304 = vmatprep.subr.mxu0 0.0
        %3305 = vmatpush1.msra.mxu0 0.0
        %3306 = vmatprep.subr.mxu0 0.0
        %3307 = vmatpush1.msra.mxu0 0.0
        %3308 = vmatprep.subr.mxu0 0.0
        %3309 = vmatpush1.msra.mxu0 %v3276
        %3310 = vmatprep.subr.mxu0 0.0
        %3311 = vmatpush2.msra.mxu0 0.0
        %3312 = vmatprep.subr.mxu0 0.0
        %3313 = vmatpush2.msra.mxu0 0.0
        %3314 = vmatprep.subr.mxu0 0.0
        %3315 = vmatpush2.msra.mxu0 0.0
        %3316 = vmatprep.subr.mxu0 0.0
        %3317 = vmatpush2.msra.mxu0 0.0
        %3318 = vmatprep.subr.mxu0 0.0
        %3319 = vmatpush2.msra.mxu0 0.0
        %3320 = vmatprep.subr.mxu0 0.0
        %3321 = vmatpush2.msra.mxu0 0.0
        %3322 = vmatprep.subr.mxu0 0.0
        %3323 = vmatpush2.msra.mxu0 0.0
        %3324 = vmatprep.subr.mxu0 0.0
        %3325 = vmatpush2.msra.mxu0 0.0
        %3326 = vmatprep.subr.mxu0 0.0
        %3327 = vmatpush2.msra.mxu0 0.0
        %3328 = vmatprep.subr.mxu0 0.0
        %3329 = vmatpush2.msra.mxu0 0.0
        %3330 = vmatprep.subr.mxu0 0.0
        %3331 = vmatpush2.msra.mxu0 0.0
        %3332 = vmatprep.subr.mxu0 0.0
        %3333 = vmatpush2.msra.mxu0 0.0
        %3334 = vmatprep.subr.mxu0 0.0
        %3335 = vmatpush2.msra.mxu0 0.0
        %3336 = vmatprep.subr.mxu0 0.0
        %3337 = vmatpush2.msra.mxu0 0.0
        %3338 = vmatprep.subr.mxu0 0.0
        %3339 = vmatpush2.msra.mxu0 0.0
        %3340 = vmatprep.subr.mxu0 0.0
        %3341 = vmatpush2.msra.mxu0 0.0
        %3342 = vmatprep.mubr.f32.mxu0 0.0
        %3343 = vmatmul.mubr.f32.gmra.mxu0 %v3228
        %v3344 = vpop.f32.mrf.mxu0
        %v3345 = vadd.f32 0.0, %v3344
        %v3346 = vpop.f32.mrf.mxu0
        %3347 = vmatprep.mubr.f32.mxu0 0.0
        %3348 = vmatmul.mubr.f32.gmra.mxu0 %v3231
        %v3349 = vpop.f32.mrf.mxu0
        %v3350 = vadd.f32 0.0, %v3349
        %v3351 = vpop.f32.mrf.mxu0
        %3352 = vmatprep.mubr.f32.mxu0 0.0
        %3353 = vmatmul.mubr.f32.gmra.mxu0 %v3234
        %v3354 = vpop.f32.mrf.mxu0
        %v3355 = vadd.f32 0.0, %v3354
        %v3356 = vpop.f32.mrf.mxu0
        %3357 = vmatprep.mubr.f32.mxu0 0.0
        %3358 = vmatmul.mubr.f32.gmra.mxu0 %v3237
        %v3359 = vpop.f32.mrf.mxu0
        %v3360 = vadd.f32 0.0, %v3359
        %v3361 = vpop.f32.mrf.mxu0
        %3362 = vmatprep.mubr.f32.mxu0 0.0
        %3363 = vmatmul.mubr.f32.gmra.mxu0 %v3240
        %v3364 = vpop.f32.mrf.mxu0
        %v3365 = vadd.f32 0.0, %v3364
        %v3366 = vpop.f32.mrf.mxu0
        %3367 = vmatprep.mubr.f32.mxu0 0.0
        %3368 = vmatmul.mubr.f32.gmra.mxu0 %v3243
        %v3369 = vpop.f32.mrf.mxu0
        %v3370 = vadd.f32 0.0, %v3369
        %v3371 = vpop.f32.mrf.mxu0
        %3372 = vmatprep.mubr.f32.mxu0 0.0
        %3373 = vmatmul.mubr.f32.gmra.mxu0 %v3246
        %v3374 = vpop.f32.mrf.mxu0
        %v3375 = vadd.f32 0.0, %v3374
        %v3376 = vpop.f32.mrf.mxu0
        %3377 = vmatprep.mubr.f32.mxu0 0.0
        %3378 = vmatmul.mubr.f32.gmra.mxu0 %v3249
        %v3379 = vpop.f32.mrf.mxu0
        %v3380 = vadd.f32 0.0, %v3379
        %v3381 = vpop.f32.mrf.mxu0
        %3382 = vmatprep.mubr.f32.mxu0 0.0
        %3383 = vmatmul.mubr.f32.gmra.mxu0 %v3252
        %v3384 = vpop.f32.mrf.mxu0
        %v3385 = vadd.f32 0.0, %v3384
        %v3386 = vpop.f32.mrf.mxu0
        %3387 = vmatprep.mubr.f32.mxu0 0.0
        %3388 = vmatmul.mubr.f32.gmra.mxu0 %v3255
        %v3389 = vpop.f32.mrf.mxu0
        %v3390 = vadd.f32 0.0, %v3389
        %v3391 = vpop.f32.mrf.mxu0
        %3392 = vmatprep.mubr.f32.mxu0 0.0
        %3393 = vmatmul.mubr.f32.gmra.mxu0 %v3258
        %v3394 = vpop.f32.mrf.mxu0
        %v3395 = vadd.f32 0.0, %v3394
        %v3396 = vpop.f32.mrf.mxu0
        %3397 = vmatprep.mubr.f32.mxu0 0.0
        %3398 = vmatmul.mubr.f32.gmra.mxu0 %v3261
        %v3399 = vpop.f32.mrf.mxu0
        %v3400 = vadd.f32 0.0, %v3399
        %v3401 = vpop.f32.mrf.mxu0
        %3402 = vmatprep.mubr.f32.mxu0 0.0
        %3403 = vmatmul.mubr.f32.gmra.mxu0 %v3264
        %v3404 = vpop.f32.mrf.mxu0
        %v3405 = vadd.f32 0.0, %v3404
        %v3406 = vpop.f32.mrf.mxu0
        %3407 = vmatprep.mubr.f32.mxu0 0.0
        %3408 = vmatmul.mubr.f32.gmra.mxu0 %v3267
        %v3409 = vpop.f32.mrf.mxu0
        %v3410 = vadd.f32 0.0, %v3409
        %v3411 = vpop.f32.mrf.mxu0
        %3412 = vmatprep.mubr.f32.mxu0 0.0
        %3413 = vmatmul.mubr.f32.gmra.mxu0 %v3270
        %v3414 = vpop.f32.mrf.mxu0
        %v3415 = vadd.f32 0.0, %v3414
        %v3416 = vpop.f32.mrf.mxu0
        %3417 = vmatprep.mubr.f32.mxu0 0.0
        %3418 = vmatmul.mubr.f32.gmra.mxu0 %v3273
        %v3419 = vpop.f32.mrf.mxu0
        %v3420 = vadd.f32 0.0, %v3419
        %v3421 = vpop.f32.mrf.mxu0
        %3422 = vdwg.mxu0
        %v3423 = vadd.f32 %v3193, %v3345
        %v3424 = vadd.f32 %v3194, %v3350
        %v3425 = vadd.f32 %v3195, %v3355
        %v3426 = vadd.f32 %v3196, %v3360
        %v3427 = vadd.f32 %v3197, %v3365
        %v3428 = vadd.f32 %v3198, %v3370
        %v3429 = vadd.f32 %v3199, %v3375
        %v3430 = vadd.f32 %v3200, %v3380
        %v3431 = vadd.f32 %v3201, %v3385
        %v3432 = vadd.f32 %v3202, %v3390
        %v3433 = vadd.f32 %v3203, %v3395
        %v3434 = vadd.f32 %v3204, %v3400
        %v3435 = vadd.f32 %v3205, %v3405
        %v3436 = vadd.f32 %v3206, %v3410
        %v3437 = vadd.f32 %v3207, %v3415
        %v3438 = vadd.f32 %v3208, %v3420
        %v3439 = vld [vmem:[%s249 + $0xe] sm:$0xff]
        %v3440 = vld [vmem:[%s249 + $0x16] sm:$0xff]
        %v3441 = vld [vmem:[%s249 + $0x1e] sm:$0xff]
        %v3442 = vld [vmem:[%s249 + $0x26] sm:$0xff]
        %v3443 = vld [vmem:[%s249 + $0x2e] sm:$0xff]
        %v3444 = vld [vmem:[%s249 + $0x36] sm:$0xff]
        %v3445 = vld [vmem:[%s249 + $0x3e] sm:$0xff]
        %v3446 = vld [vmem:[%s249 + $0x46] sm:$0xff]
        %v3447 = vld [vmem:[%s249 + $0x4e] sm:$0xff]
        %v3448 = vld [vmem:[%s249 + $0x56] sm:$0xff]
        %v3449 = vld [vmem:[%s249 + $0x5e] sm:$0xff]
        %v3450 = vld [vmem:[%s249 + $0x66] sm:$0xff]
        %v3451 = vld [vmem:[%s249 + $0x6e] sm:$0xff]
        %v3452 = vld [vmem:[%s249 + $0x76] sm:$0xff]
        %v3453 = vld [vmem:[%s249 + $0x7e] sm:$0xff]
        %v3454 = vld [vmem:[%s249 + $0x86] sm:$0x3f]
        %s3455 = scalar_lea.vmem %s1, 56
        %v3456 = vld [vmem:[%s3455] sm:$0xf]
        %v3458 = vsel %vm285, %v3439, 0
        %v3461 = vsel %vm285, %v3440, 0
        %v3464 = vsel %vm285, %v3441, 0
        %v3467 = vsel %vm285, %v3442, 0
        %v3470 = vsel %vm285, %v3443, 0
        %v3473 = vsel %vm285, %v3444, 0
        %v3476 = vsel %vm285, %v3445, 0
        %v3479 = vsel %vm285, %v3446, 0
        %v3482 = vsel %vm285, %v3447, 0
        %v3485 = vsel %vm285, %v3448, 0
        %v3488 = vsel %vm285, %v3449, 0
        %v3491 = vsel %vm285, %v3450, 0
        %v3494 = vsel %vm285, %v3451, 0
        %v3497 = vsel %vm285, %v3452, 0
        %v3500 = vsel %vm285, %v3453, 0
        %v3503 = vsel %vm285, %v3454, 0
        %v3506 = vsel %vm334, %v3456, 0
        %3508 = vmatprep.subr.mxu0 0.0
        %3509 = vmatpush1.msra.mxu0 0.0
        %3510 = vmatprep.subr.mxu0 0.0
        %3511 = vmatpush1.msra.mxu0 0.0
        %3512 = vmatprep.subr.mxu0 0.0
        %3513 = vmatpush1.msra.mxu0 0.0
        %3514 = vmatprep.subr.mxu0 0.0
        %3515 = vmatpush1.msra.mxu0 0.0
        %3516 = vmatprep.subr.mxu0 0.0
        %3517 = vmatpush1.msra.mxu0 0.0
        %3518 = vmatprep.subr.mxu0 0.0
        %3519 = vmatpush1.msra.mxu0 0.0
        %3520 = vmatprep.subr.mxu0 0.0
        %3521 = vmatpush1.msra.mxu0 0.0
        %3522 = vmatprep.subr.mxu0 0.0
        %3523 = vmatpush1.msra.mxu0 0.0
        %3524 = vmatprep.subr.mxu0 0.0
        %3525 = vmatpush1.msra.mxu0 0.0
        %3526 = vmatprep.subr.mxu0 0.0
        %3527 = vmatpush1.msra.mxu0 0.0
        %3528 = vmatprep.subr.mxu0 0.0
        %3529 = vmatpush1.msra.mxu0 0.0
        %3530 = vmatprep.subr.mxu0 0.0
        %3531 = vmatpush1.msra.mxu0 0.0
        %3532 = vmatprep.subr.mxu0 0.0
        %3533 = vmatpush1.msra.mxu0 0.0
        %3534 = vmatprep.subr.mxu0 0.0
        %3535 = vmatpush1.msra.mxu0 0.0
        %3536 = vmatprep.subr.mxu0 0.0
        %3537 = vmatpush1.msra.mxu0 0.0
        %3538 = vmatprep.subr.mxu0 0.0
        %3539 = vmatpush1.msra.mxu0 %v3506
        %3540 = vmatprep.subr.mxu0 0.0
        %3541 = vmatpush2.msra.mxu0 0.0
        %3542 = vmatprep.subr.mxu0 0.0
        %3543 = vmatpush2.msra.mxu0 0.0
        %3544 = vmatprep.subr.mxu0 0.0
        %3545 = vmatpush2.msra.mxu0 0.0
        %3546 = vmatprep.subr.mxu0 0.0
        %3547 = vmatpush2.msra.mxu0 0.0
        %3548 = vmatprep.subr.mxu0 0.0
        %3549 = vmatpush2.msra.mxu0 0.0
        %3550 = vmatprep.subr.mxu0 0.0
        %3551 = vmatpush2.msra.mxu0 0.0
        %3552 = vmatprep.subr.mxu0 0.0
        %3553 = vmatpush2.msra.mxu0 0.0
        %3554 = vmatprep.subr.mxu0 0.0
        %3555 = vmatpush2.msra.mxu0 0.0
        %3556 = vmatprep.subr.mxu0 0.0
        %3557 = vmatpush2.msra.mxu0 0.0
        %3558 = vmatprep.subr.mxu0 0.0
        %3559 = vmatpush2.msra.mxu0 0.0
        %3560 = vmatprep.subr.mxu0 0.0
        %3561 = vmatpush2.msra.mxu0 0.0
        %3562 = vmatprep.subr.mxu0 0.0
        %3563 = vmatpush2.msra.mxu0 0.0
        %3564 = vmatprep.subr.mxu0 0.0
        %3565 = vmatpush2.msra.mxu0 0.0
        %3566 = vmatprep.subr.mxu0 0.0
        %3567 = vmatpush2.msra.mxu0 0.0
        %3568 = vmatprep.subr.mxu0 0.0
        %3569 = vmatpush2.msra.mxu0 0.0
        %3570 = vmatprep.subr.mxu0 0.0
        %3571 = vmatpush2.msra.mxu0 0.0
        %3572 = vmatprep.mubr.f32.mxu0 0.0
        %3573 = vmatmul.mubr.f32.gmra.mxu0 %v3458
        %v3574 = vpop.f32.mrf.mxu0
        %v3575 = vadd.f32 0.0, %v3574
        %v3576 = vpop.f32.mrf.mxu0
        %3577 = vmatprep.mubr.f32.mxu0 0.0
        %3578 = vmatmul.mubr.f32.gmra.mxu0 %v3461
        %v3579 = vpop.f32.mrf.mxu0
        %v3580 = vadd.f32 0.0, %v3579
        %v3581 = vpop.f32.mrf.mxu0
        %3582 = vmatprep.mubr.f32.mxu0 0.0
        %3583 = vmatmul.mubr.f32.gmra.mxu0 %v3464
        %v3584 = vpop.f32.mrf.mxu0
        %v3585 = vadd.f32 0.0, %v3584
        %v3586 = vpop.f32.mrf.mxu0
        %3587 = vmatprep.mubr.f32.mxu0 0.0
        %3588 = vmatmul.mubr.f32.gmra.mxu0 %v3467
        %v3589 = vpop.f32.mrf.mxu0
        %v3590 = vadd.f32 0.0, %v3589
        %v3591 = vpop.f32.mrf.mxu0
        %3592 = vmatprep.mubr.f32.mxu0 0.0
        %3593 = vmatmul.mubr.f32.gmra.mxu0 %v3470
        %v3594 = vpop.f32.mrf.mxu0
        %v3595 = vadd.f32 0.0, %v3594
        %v3596 = vpop.f32.mrf.mxu0
        %3597 = vmatprep.mubr.f32.mxu0 0.0
        %3598 = vmatmul.mubr.f32.gmra.mxu0 %v3473
        %v3599 = vpop.f32.mrf.mxu0
        %v3600 = vadd.f32 0.0, %v3599
        %v3601 = vpop.f32.mrf.mxu0
        %3602 = vmatprep.mubr.f32.mxu0 0.0
        %3603 = vmatmul.mubr.f32.gmra.mxu0 %v3476
        %v3604 = vpop.f32.mrf.mxu0
        %v3605 = vadd.f32 0.0, %v3604
        %v3606 = vpop.f32.mrf.mxu0
        %3607 = vmatprep.mubr.f32.mxu0 0.0
        %3608 = vmatmul.mubr.f32.gmra.mxu0 %v3479
        %v3609 = vpop.f32.mrf.mxu0
        %v3610 = vadd.f32 0.0, %v3609
        %v3611 = vpop.f32.mrf.mxu0
        %3612 = vmatprep.mubr.f32.mxu0 0.0
        %3613 = vmatmul.mubr.f32.gmra.mxu0 %v3482
        %v3614 = vpop.f32.mrf.mxu0
        %v3615 = vadd.f32 0.0, %v3614
        %v3616 = vpop.f32.mrf.mxu0
        %3617 = vmatprep.mubr.f32.mxu0 0.0
        %3618 = vmatmul.mubr.f32.gmra.mxu0 %v3485
        %v3619 = vpop.f32.mrf.mxu0
        %v3620 = vadd.f32 0.0, %v3619
        %v3621 = vpop.f32.mrf.mxu0
        %3622 = vmatprep.mubr.f32.mxu0 0.0
        %3623 = vmatmul.mubr.f32.gmra.mxu0 %v3488
        %v3624 = vpop.f32.mrf.mxu0
        %v3625 = vadd.f32 0.0, %v3624
        %v3626 = vpop.f32.mrf.mxu0
        %3627 = vmatprep.mubr.f32.mxu0 0.0
        %3628 = vmatmul.mubr.f32.gmra.mxu0 %v3491
        %v3629 = vpop.f32.mrf.mxu0
        %v3630 = vadd.f32 0.0, %v3629
        %v3631 = vpop.f32.mrf.mxu0
        %3632 = vmatprep.mubr.f32.mxu0 0.0
        %3633 = vmatmul.mubr.f32.gmra.mxu0 %v3494
        %v3634 = vpop.f32.mrf.mxu0
        %v3635 = vadd.f32 0.0, %v3634
        %v3636 = vpop.f32.mrf.mxu0
        %3637 = vmatprep.mubr.f32.mxu0 0.0
        %3638 = vmatmul.mubr.f32.gmra.mxu0 %v3497
        %v3639 = vpop.f32.mrf.mxu0
        %v3640 = vadd.f32 0.0, %v3639
        %v3641 = vpop.f32.mrf.mxu0
        %3642 = vmatprep.mubr.f32.mxu0 0.0
        %3643 = vmatmul.mubr.f32.gmra.mxu0 %v3500
        %v3644 = vpop.f32.mrf.mxu0
        %v3645 = vadd.f32 0.0, %v3644
        %v3646 = vpop.f32.mrf.mxu0
        %3647 = vmatprep.mubr.f32.mxu0 0.0
        %3648 = vmatmul.mubr.f32.gmra.mxu0 %v3503
        %v3649 = vpop.f32.mrf.mxu0
        %v3650 = vadd.f32 0.0, %v3649
        %v3651 = vpop.f32.mrf.mxu0
        %3652 = vdwg.mxu0
        %v3653 = vadd.f32 %v3423, %v3575
        %v3654 = vadd.f32 %v3424, %v3580
        %v3655 = vadd.f32 %v3425, %v3585
        %v3656 = vadd.f32 %v3426, %v3590
        %v3657 = vadd.f32 %v3427, %v3595
        %v3658 = vadd.f32 %v3428, %v3600
        %v3659 = vadd.f32 %v3429, %v3605
        %v3660 = vadd.f32 %v3430, %v3610
        %v3661 = vadd.f32 %v3431, %v3615
        %v3662 = vadd.f32 %v3432, %v3620
        %v3663 = vadd.f32 %v3433, %v3625
        %v3664 = vadd.f32 %v3434, %v3630
        %v3665 = vadd.f32 %v3435, %v3635
        %v3666 = vadd.f32 %v3436, %v3640
        %v3667 = vadd.f32 %v3437, %v3645
        %v3668 = vadd.f32 %v3438, %v3650
        %v3669 = vld [vmem:[%s249 + $0xf] sm:$0xff]
        %v3670 = vld [vmem:[%s249 + $0x17] sm:$0xff]
        %v3671 = vld [vmem:[%s249 + $0x1f] sm:$0xff]
        %v3672 = vld [vmem:[%s249 + $0x27] sm:$0xff]
        %v3673 = vld [vmem:[%s249 + $0x2f] sm:$0xff]
        %v3674 = vld [vmem:[%s249 + $0x37] sm:$0xff]
        %v3675 = vld [vmem:[%s249 + $0x3f] sm:$0xff]
        %v3676 = vld [vmem:[%s249 + $0x47] sm:$0xff]
        %v3677 = vld [vmem:[%s249 + $0x4f] sm:$0xff]
        %v3678 = vld [vmem:[%s249 + $0x57] sm:$0xff]
        %v3679 = vld [vmem:[%s249 + $0x5f] sm:$0xff]
        %v3680 = vld [vmem:[%s249 + $0x67] sm:$0xff]
        %v3681 = vld [vmem:[%s249 + $0x6f] sm:$0xff]
        %v3682 = vld [vmem:[%s249 + $0x77] sm:$0xff]
        %v3683 = vld [vmem:[%s249 + $0x7f] sm:$0xff]
        %v3684 = vld [vmem:[%s249 + $0x87] sm:$0x3f]
        %s3685 = scalar_lea.vmem %s1, 60
        %v3686 = vld [vmem:[%s3685] sm:$0xf]
        %v3688 = vsel %vm285, %v3669, 0
        %v3691 = vsel %vm285, %v3670, 0
        %v3694 = vsel %vm285, %v3671, 0
        %v3697 = vsel %vm285, %v3672, 0
        %v3700 = vsel %vm285, %v3673, 0
        %v3703 = vsel %vm285, %v3674, 0
        %v3706 = vsel %vm285, %v3675, 0
        %v3709 = vsel %vm285, %v3676, 0
        %v3712 = vsel %vm285, %v3677, 0
        %v3715 = vsel %vm285, %v3678, 0
        %v3718 = vsel %vm285, %v3679, 0
        %v3721 = vsel %vm285, %v3680, 0
        %v3724 = vsel %vm285, %v3681, 0
        %v3727 = vsel %vm285, %v3682, 0
        %v3730 = vsel %vm285, %v3683, 0
        %v3733 = vsel %vm285, %v3684, 0
        %v3736 = vsel %vm334, %v3686, 0
        %3738 = vmatprep.subr.mxu0 0.0
        %3739 = vmatpush1.msra.mxu0 0.0
        %3740 = vmatprep.subr.mxu0 0.0
        %3741 = vmatpush1.msra.mxu0 0.0
        %3742 = vmatprep.subr.mxu0 0.0
        %3743 = vmatpush1.msra.mxu0 0.0
        %3744 = vmatprep.subr.mxu0 0.0
        %3745 = vmatpush1.msra.mxu0 0.0
        %3746 = vmatprep.subr.mxu0 0.0
        %3747 = vmatpush1.msra.mxu0 0.0
        %3748 = vmatprep.subr.mxu0 0.0
        %3749 = vmatpush1.msra.mxu0 0.0
        %3750 = vmatprep.subr.mxu0 0.0
        %3751 = vmatpush1.msra.mxu0 0.0
        %3752 = vmatprep.subr.mxu0 0.0
        %3753 = vmatpush1.msra.mxu0 0.0
        %3754 = vmatprep.subr.mxu0 0.0
        %3755 = vmatpush1.msra.mxu0 0.0
        %3756 = vmatprep.subr.mxu0 0.0
        %3757 = vmatpush1.msra.mxu0 0.0
        %3758 = vmatprep.subr.mxu0 0.0
        %3759 = vmatpush1.msra.mxu0 0.0
        %3760 = vmatprep.subr.mxu0 0.0
        %3761 = vmatpush1.msra.mxu0 0.0
        %3762 = vmatprep.subr.mxu0 0.0
        %3763 = vmatpush1.msra.mxu0 0.0
        %3764 = vmatprep.subr.mxu0 0.0
        %3765 = vmatpush1.msra.mxu0 0.0
        %3766 = vmatprep.subr.mxu0 0.0
        %3767 = vmatpush1.msra.mxu0 0.0
        %3768 = vmatprep.subr.mxu0 0.0
        %3769 = vmatpush1.msra.mxu0 %v3736
        %3770 = vmatprep.subr.mxu0 0.0
        %3771 = vmatpush2.msra.mxu0 0.0
        %3772 = vmatprep.subr.mxu0 0.0
        %3773 = vmatpush2.msra.mxu0 0.0
        %3774 = vmatprep.subr.mxu0 0.0
        %3775 = vmatpush2.msra.mxu0 0.0
        %3776 = vmatprep.subr.mxu0 0.0
        %3777 = vmatpush2.msra.mxu0 0.0
        %3778 = vmatprep.subr.mxu0 0.0
        %3779 = vmatpush2.msra.mxu0 0.0
        %3780 = vmatprep.subr.mxu0 0.0
        %3781 = vmatpush2.msra.mxu0 0.0
        %3782 = vmatprep.subr.mxu0 0.0
        %3783 = vmatpush2.msra.mxu0 0.0
        %3784 = vmatprep.subr.mxu0 0.0
        %3785 = vmatpush2.msra.mxu0 0.0
        %3786 = vmatprep.subr.mxu0 0.0
        %3787 = vmatpush2.msra.mxu0 0.0
        %3788 = vmatprep.subr.mxu0 0.0
        %3789 = vmatpush2.msra.mxu0 0.0
        %3790 = vmatprep.subr.mxu0 0.0
        %3791 = vmatpush2.msra.mxu0 0.0
        %3792 = vmatprep.subr.mxu0 0.0
        %3793 = vmatpush2.msra.mxu0 0.0
        %3794 = vmatprep.subr.mxu0 0.0
        %3795 = vmatpush2.msra.mxu0 0.0
        %3796 = vmatprep.subr.mxu0 0.0
        %3797 = vmatpush2.msra.mxu0 0.0
        %3798 = vmatprep.subr.mxu0 0.0
        %3799 = vmatpush2.msra.mxu0 0.0
        %3800 = vmatprep.subr.mxu0 0.0
        %3801 = vmatpush2.msra.mxu0 0.0
        %3802 = vmatprep.mubr.f32.mxu0 0.0
        %3803 = vmatmul.mubr.f32.gmra.mxu0 %v3688
        %v3804 = vpop.f32.mrf.mxu0
        %v3805 = vadd.f32 0.0, %v3804
        %v3806 = vpop.f32.mrf.mxu0
        %3807 = vmatprep.mubr.f32.mxu0 0.0
        %3808 = vmatmul.mubr.f32.gmra.mxu0 %v3691
        %v3809 = vpop.f32.mrf.mxu0
        %v3810 = vadd.f32 0.0, %v3809
        %v3811 = vpop.f32.mrf.mxu0
        %3812 = vmatprep.mubr.f32.mxu0 0.0
        %3813 = vmatmul.mubr.f32.gmra.mxu0 %v3694
        %v3814 = vpop.f32.mrf.mxu0
        %v3815 = vadd.f32 0.0, %v3814
        %v3816 = vpop.f32.mrf.mxu0
        %3817 = vmatprep.mubr.f32.mxu0 0.0
        %3818 = vmatmul.mubr.f32.gmra.mxu0 %v3697
        %v3819 = vpop.f32.mrf.mxu0
        %v3820 = vadd.f32 0.0, %v3819
        %v3821 = vpop.f32.mrf.mxu0
        %3822 = vmatprep.mubr.f32.mxu0 0.0
        %3823 = vmatmul.mubr.f32.gmra.mxu0 %v3700
        %v3824 = vpop.f32.mrf.mxu0
        %v3825 = vadd.f32 0.0, %v3824
        %v3826 = vpop.f32.mrf.mxu0
        %3827 = vmatprep.mubr.f32.mxu0 0.0
        %3828 = vmatmul.mubr.f32.gmra.mxu0 %v3703
        %v3829 = vpop.f32.mrf.mxu0
        %v3830 = vadd.f32 0.0, %v3829
        %v3831 = vpop.f32.mrf.mxu0
        %3832 = vmatprep.mubr.f32.mxu0 0.0
        %3833 = vmatmul.mubr.f32.gmra.mxu0 %v3706
        %v3834 = vpop.f32.mrf.mxu0
        %v3835 = vadd.f32 0.0, %v3834
        %v3836 = vpop.f32.mrf.mxu0
        %3837 = vmatprep.mubr.f32.mxu0 0.0
        %3838 = vmatmul.mubr.f32.gmra.mxu0 %v3709
        %v3839 = vpop.f32.mrf.mxu0
        %v3840 = vadd.f32 0.0, %v3839
        %v3841 = vpop.f32.mrf.mxu0
        %3842 = vmatprep.mubr.f32.mxu0 0.0
        %3843 = vmatmul.mubr.f32.gmra.mxu0 %v3712
        %v3844 = vpop.f32.mrf.mxu0
        %v3845 = vadd.f32 0.0, %v3844
        %v3846 = vpop.f32.mrf.mxu0
        %3847 = vmatprep.mubr.f32.mxu0 0.0
        %3848 = vmatmul.mubr.f32.gmra.mxu0 %v3715
        %v3849 = vpop.f32.mrf.mxu0
        %v3850 = vadd.f32 0.0, %v3849
        %v3851 = vpop.f32.mrf.mxu0
        %3852 = vmatprep.mubr.f32.mxu0 0.0
        %3853 = vmatmul.mubr.f32.gmra.mxu0 %v3718
        %v3854 = vpop.f32.mrf.mxu0
        %v3855 = vadd.f32 0.0, %v3854
        %v3856 = vpop.f32.mrf.mxu0
        %3857 = vmatprep.mubr.f32.mxu0 0.0
        %3858 = vmatmul.mubr.f32.gmra.mxu0 %v3721
        %v3859 = vpop.f32.mrf.mxu0
        %v3860 = vadd.f32 0.0, %v3859
        %v3861 = vpop.f32.mrf.mxu0
        %3862 = vmatprep.mubr.f32.mxu0 0.0
        %3863 = vmatmul.mubr.f32.gmra.mxu0 %v3724
        %v3864 = vpop.f32.mrf.mxu0
        %v3865 = vadd.f32 0.0, %v3864
        %v3866 = vpop.f32.mrf.mxu0
        %3867 = vmatprep.mubr.f32.mxu0 0.0
        %3868 = vmatmul.mubr.f32.gmra.mxu0 %v3727
        %v3869 = vpop.f32.mrf.mxu0
        %v3870 = vadd.f32 0.0, %v3869
        %v3871 = vpop.f32.mrf.mxu0
        %3872 = vmatprep.mubr.f32.mxu0 0.0
        %3873 = vmatmul.mubr.f32.gmra.mxu0 %v3730
        %v3874 = vpop.f32.mrf.mxu0
        %v3875 = vadd.f32 0.0, %v3874
        %v3876 = vpop.f32.mrf.mxu0
        %3877 = vmatprep.mubr.f32.mxu0 0.0
        %3878 = vmatmul.mubr.f32.gmra.mxu0 %v3733
        %v3879 = vpop.f32.mrf.mxu0
        %v3880 = vadd.f32 0.0, %v3879
        %v3881 = vpop.f32.mrf.mxu0
        %3882 = vdwg.mxu0
        %v3883 = vadd.f32 %v3653, %v3805
        %v3884 = vadd.f32 %v3654, %v3810
        %v3885 = vadd.f32 %v3655, %v3815
        %v3886 = vadd.f32 %v3656, %v3820
        %v3887 = vadd.f32 %v3657, %v3825
        %v3888 = vadd.f32 %v3658, %v3830
        %v3889 = vadd.f32 %v3659, %v3835
        %v3890 = vadd.f32 %v3660, %v3840
        %v3891 = vadd.f32 %v3661, %v3845
        %v3892 = vadd.f32 %v3662, %v3850
        %v3893 = vadd.f32 %v3663, %v3855
        %v3894 = vadd.f32 %v3664, %v3860
        %v3895 = vadd.f32 %v3665, %v3865
        %v3896 = vadd.f32 %v3666, %v3870
        %v3897 = vadd.f32 %v3667, %v3875
        %v3898 = vadd.f32 %v3668, %v3880
        %v3899 = vld [vmem:[%s249 + $0x10] sm:$0xff]
        %v3900 = vld [vmem:[%s249 + $0x18] sm:$0xff]
        %v3901 = vld [vmem:[%s249 + $0x20] sm:$0xff]
        %v3902 = vld [vmem:[%s249 + $0x28] sm:$0xff]
        %v3903 = vld [vmem:[%s249 + $0x30] sm:$0xff]
        %v3904 = vld [vmem:[%s249 + $0x38] sm:$0xff]
        %v3905 = vld [vmem:[%s249 + $0x40] sm:$0xff]
        %v3906 = vld [vmem:[%s249 + $0x48] sm:$0xff]
        %v3907 = vld [vmem:[%s249 + $0x50] sm:$0xff]
        %v3908 = vld [vmem:[%s249 + $0x58] sm:$0xff]
        %v3909 = vld [vmem:[%s249 + $0x60] sm:$0xff]
        %v3910 = vld [vmem:[%s249 + $0x68] sm:$0xff]
        %v3911 = vld [vmem:[%s249 + $0x70] sm:$0xff]
        %v3912 = vld [vmem:[%s249 + $0x78] sm:$0xff]
        %v3913 = vld [vmem:[%s249 + $0x80] sm:$0xff]
        %v3914 = vld [vmem:[%s249 + $0x88] sm:$0x3f]
        %s3915 = scalar_lea.vmem %s1, 64
        %v3916 = vld [vmem:[%s3915] sm:$0xf]
        %v3918 = vsel %vm285, %v3899, 0
        %v3921 = vsel %vm285, %v3900, 0
        %v3924 = vsel %vm285, %v3901, 0
        %v3927 = vsel %vm285, %v3902, 0
        %v3930 = vsel %vm285, %v3903, 0
        %v3933 = vsel %vm285, %v3904, 0
        %v3936 = vsel %vm285, %v3905, 0
        %v3939 = vsel %vm285, %v3906, 0
        %v3942 = vsel %vm285, %v3907, 0
        %v3945 = vsel %vm285, %v3908, 0
        %v3948 = vsel %vm285, %v3909, 0
        %v3951 = vsel %vm285, %v3910, 0
        %v3954 = vsel %vm285, %v3911, 0
        %v3957 = vsel %vm285, %v3912, 0
        %v3960 = vsel %vm285, %v3913, 0
        %v3963 = vsel %vm285, %v3914, 0
        %v3966 = vsel %vm334, %v3916, 0
        %3968 = vmatprep.subr.mxu0 0.0
        %3969 = vmatpush1.msra.mxu0 0.0
        %3970 = vmatprep.subr.mxu0 0.0
        %3971 = vmatpush1.msra.mxu0 0.0
        %3972 = vmatprep.subr.mxu0 0.0
        %3973 = vmatpush1.msra.mxu0 0.0
        %3974 = vmatprep.subr.mxu0 0.0
        %3975 = vmatpush1.msra.mxu0 0.0
        %3976 = vmatprep.subr.mxu0 0.0
        %3977 = vmatpush1.msra.mxu0 0.0
        %3978 = vmatprep.subr.mxu0 0.0
        %3979 = vmatpush1.msra.mxu0 0.0
        %3980 = vmatprep.subr.mxu0 0.0
        %3981 = vmatpush1.msra.mxu0 0.0
        %3982 = vmatprep.subr.mxu0 0.0
        %3983 = vmatpush1.msra.mxu0 0.0
        %3984 = vmatprep.subr.mxu0 0.0
        %3985 = vmatpush1.msra.mxu0 0.0
        %3986 = vmatprep.subr.mxu0 0.0
        %3987 = vmatpush1.msra.mxu0 0.0
        %3988 = vmatprep.subr.mxu0 0.0
        %3989 = vmatpush1.msra.mxu0 0.0
        %3990 = vmatprep.subr.mxu0 0.0
        %3991 = vmatpush1.msra.mxu0 0.0
        %3992 = vmatprep.subr.mxu0 0.0
        %3993 = vmatpush1.msra.mxu0 0.0
        %3994 = vmatprep.subr.mxu0 0.0
        %3995 = vmatpush1.msra.mxu0 0.0
        %3996 = vmatprep.subr.mxu0 0.0
        %3997 = vmatpush1.msra.mxu0 0.0
        %3998 = vmatprep.subr.mxu0 0.0
        %3999 = vmatpush1.msra.mxu0 %v3966
        %4000 = vmatprep.subr.mxu0 0.0
        %4001 = vmatpush2.msra.mxu0 0.0
        %4002 = vmatprep.subr.mxu0 0.0
        %4003 = vmatpush2.msra.mxu0 0.0
        %4004 = vmatprep.subr.mxu0 0.0
        %4005 = vmatpush2.msra.mxu0 0.0
        %4006 = vmatprep.subr.mxu0 0.0
        %4007 = vmatpush2.msra.mxu0 0.0
        %4008 = vmatprep.subr.mxu0 0.0
        %4009 = vmatpush2.msra.mxu0 0.0
        %4010 = vmatprep.subr.mxu0 0.0
        %4011 = vmatpush2.msra.mxu0 0.0
        %4012 = vmatprep.subr.mxu0 0.0
        %4013 = vmatpush2.msra.mxu0 0.0
        %4014 = vmatprep.subr.mxu0 0.0
        %4015 = vmatpush2.msra.mxu0 0.0
        %4016 = vmatprep.subr.mxu0 0.0
        %4017 = vmatpush2.msra.mxu0 0.0
        %4018 = vmatprep.subr.mxu0 0.0
        %4019 = vmatpush2.msra.mxu0 0.0
        %4020 = vmatprep.subr.mxu0 0.0
        %4021 = vmatpush2.msra.mxu0 0.0
        %4022 = vmatprep.subr.mxu0 0.0
        %4023 = vmatpush2.msra.mxu0 0.0
        %4024 = vmatprep.subr.mxu0 0.0
        %4025 = vmatpush2.msra.mxu0 0.0
        %4026 = vmatprep.subr.mxu0 0.0
        %4027 = vmatpush2.msra.mxu0 0.0
        %4028 = vmatprep.subr.mxu0 0.0
        %4029 = vmatpush2.msra.mxu0 0.0
        %4030 = vmatprep.subr.mxu0 0.0
        %4031 = vmatpush2.msra.mxu0 0.0
        %4032 = vmatprep.mubr.f32.mxu0 0.0
        %4033 = vmatmul.mubr.f32.gmra.mxu0 %v3918
        %v4034 = vpop.f32.mrf.mxu0
        %v4035 = vadd.f32 0.0, %v4034
        %v4036 = vpop.f32.mrf.mxu0
        %4037 = vmatprep.mubr.f32.mxu0 0.0
        %4038 = vmatmul.mubr.f32.gmra.mxu0 %v3921
        %v4039 = vpop.f32.mrf.mxu0
        %v4040 = vadd.f32 0.0, %v4039
        %v4041 = vpop.f32.mrf.mxu0
        %4042 = vmatprep.mubr.f32.mxu0 0.0
        %4043 = vmatmul.mubr.f32.gmra.mxu0 %v3924
        %v4044 = vpop.f32.mrf.mxu0
        %v4045 = vadd.f32 0.0, %v4044
        %v4046 = vpop.f32.mrf.mxu0
        %4047 = vmatprep.mubr.f32.mxu0 0.0
        %4048 = vmatmul.mubr.f32.gmra.mxu0 %v3927
        %v4049 = vpop.f32.mrf.mxu0
        %v4050 = vadd.f32 0.0, %v4049
        %v4051 = vpop.f32.mrf.mxu0
        %4052 = vmatprep.mubr.f32.mxu0 0.0
        %4053 = vmatmul.mubr.f32.gmra.mxu0 %v3930
        %v4054 = vpop.f32.mrf.mxu0
        %v4055 = vadd.f32 0.0, %v4054
        %v4056 = vpop.f32.mrf.mxu0
        %4057 = vmatprep.mubr.f32.mxu0 0.0
        %4058 = vmatmul.mubr.f32.gmra.mxu0 %v3933
        %v4059 = vpop.f32.mrf.mxu0
        %v4060 = vadd.f32 0.0, %v4059
        %v4061 = vpop.f32.mrf.mxu0
        %4062 = vmatprep.mubr.f32.mxu0 0.0
        %4063 = vmatmul.mubr.f32.gmra.mxu0 %v3936
        %v4064 = vpop.f32.mrf.mxu0
        %v4065 = vadd.f32 0.0, %v4064
        %v4066 = vpop.f32.mrf.mxu0
        %4067 = vmatprep.mubr.f32.mxu0 0.0
        %4068 = vmatmul.mubr.f32.gmra.mxu0 %v3939
        %v4069 = vpop.f32.mrf.mxu0
        %v4070 = vadd.f32 0.0, %v4069
        %v4071 = vpop.f32.mrf.mxu0
        %4072 = vmatprep.mubr.f32.mxu0 0.0
        %4073 = vmatmul.mubr.f32.gmra.mxu0 %v3942
        %v4074 = vpop.f32.mrf.mxu0
        %v4075 = vadd.f32 0.0, %v4074
        %v4076 = vpop.f32.mrf.mxu0
        %4077 = vmatprep.mubr.f32.mxu0 0.0
        %4078 = vmatmul.mubr.f32.gmra.mxu0 %v3945
        %v4079 = vpop.f32.mrf.mxu0
        %v4080 = vadd.f32 0.0, %v4079
        %v4081 = vpop.f32.mrf.mxu0
        %4082 = vmatprep.mubr.f32.mxu0 0.0
        %4083 = vmatmul.mubr.f32.gmra.mxu0 %v3948
        %v4084 = vpop.f32.mrf.mxu0
        %v4085 = vadd.f32 0.0, %v4084
        %v4086 = vpop.f32.mrf.mxu0
        %4087 = vmatprep.mubr.f32.mxu0 0.0
        %4088 = vmatmul.mubr.f32.gmra.mxu0 %v3951
        %v4089 = vpop.f32.mrf.mxu0
        %v4090 = vadd.f32 0.0, %v4089
        %v4091 = vpop.f32.mrf.mxu0
        %4092 = vmatprep.mubr.f32.mxu0 0.0
        %4093 = vmatmul.mubr.f32.gmra.mxu0 %v3954
        %v4094 = vpop.f32.mrf.mxu0
        %v4095 = vadd.f32 0.0, %v4094
        %v4096 = vpop.f32.mrf.mxu0
        %4097 = vmatprep.mubr.f32.mxu0 0.0
        %4098 = vmatmul.mubr.f32.gmra.mxu0 %v3957
        %v4099 = vpop.f32.mrf.mxu0
        %v4100 = vadd.f32 0.0, %v4099
        %v4101 = vpop.f32.mrf.mxu0
        %4102 = vmatprep.mubr.f32.mxu0 0.0
        %4103 = vmatmul.mubr.f32.gmra.mxu0 %v3960
        %v4104 = vpop.f32.mrf.mxu0
        %v4105 = vadd.f32 0.0, %v4104
        %v4106 = vpop.f32.mrf.mxu0
        %4107 = vmatprep.mubr.f32.mxu0 0.0
        %4108 = vmatmul.mubr.f32.gmra.mxu0 %v3963
        %v4109 = vpop.f32.mrf.mxu0
        %v4110 = vadd.f32 0.0, %v4109
        %v4111 = vpop.f32.mrf.mxu0
        %4112 = vdwg.mxu0
        %v4113 = vadd.f32 %v3883, %v4035
        %v4114 = vadd.f32 %v3884, %v4040
        %v4115 = vadd.f32 %v3885, %v4045
        %v4116 = vadd.f32 %v3886, %v4050
        %v4117 = vadd.f32 %v3887, %v4055
        %v4118 = vadd.f32 %v3888, %v4060
        %v4119 = vadd.f32 %v3889, %v4065
        %v4120 = vadd.f32 %v3890, %v4070
        %v4121 = vadd.f32 %v3891, %v4075
        %v4122 = vadd.f32 %v3892, %v4080
        %v4123 = vadd.f32 %v3893, %v4085
        %v4124 = vadd.f32 %v3894, %v4090
        %v4125 = vadd.f32 %v3895, %v4095
        %v4126 = vadd.f32 %v3896, %v4100
        %v4127 = vadd.f32 %v3897, %v4105
        %v4128 = vadd.f32 %v3898, %v4110
        %v4129 = vld [vmem:[%s249 + $0x11] sm:$0xff]
        %v4130 = vld [vmem:[%s249 + $0x19] sm:$0xff]
        %v4131 = vld [vmem:[%s249 + $0x21] sm:$0xff]
        %v4132 = vld [vmem:[%s249 + $0x29] sm:$0xff]
        %v4133 = vld [vmem:[%s249 + $0x31] sm:$0xff]
        %v4134 = vld [vmem:[%s249 + $0x39] sm:$0xff]
        %v4135 = vld [vmem:[%s249 + $0x41] sm:$0xff]
        %v4136 = vld [vmem:[%s249 + $0x49] sm:$0xff]
        %v4137 = vld [vmem:[%s249 + $0x51] sm:$0xff]
        %v4138 = vld [vmem:[%s249 + $0x59] sm:$0xff]
        %v4139 = vld [vmem:[%s249 + $0x61] sm:$0xff]
        %v4140 = vld [vmem:[%s249 + $0x69] sm:$0xff]
        %v4141 = vld [vmem:[%s249 + $0x71] sm:$0xff]
        %v4142 = vld [vmem:[%s249 + $0x79] sm:$0xff]
        %v4143 = vld [vmem:[%s249 + $0x81] sm:$0xff]
        %v4144 = vld [vmem:[%s249 + $0x89] sm:$0x3f]
        %s4145 = scalar_lea.vmem %s1, 68
        %v4146 = vld [vmem:[%s4145] sm:$0xf]
        %v4148 = vsel %vm285, %v4129, 0
        %v4151 = vsel %vm285, %v4130, 0
        %v4154 = vsel %vm285, %v4131, 0
        %v4157 = vsel %vm285, %v4132, 0
        %v4160 = vsel %vm285, %v4133, 0
        %v4163 = vsel %vm285, %v4134, 0
        %v4166 = vsel %vm285, %v4135, 0
        %v4169 = vsel %vm285, %v4136, 0
        %v4172 = vsel %vm285, %v4137, 0
        %v4175 = vsel %vm285, %v4138, 0
        %v4178 = vsel %vm285, %v4139, 0
        %v4181 = vsel %vm285, %v4140, 0
        %v4184 = vsel %vm285, %v4141, 0
        %v4187 = vsel %vm285, %v4142, 0
        %v4190 = vsel %vm285, %v4143, 0
        %v4193 = vsel %vm285, %v4144, 0
        %v4196 = vsel %vm334, %v4146, 0
        %4198 = vmatprep.subr.mxu0 0.0
        %4199 = vmatpush1.msra.mxu0 0.0
        %4200 = vmatprep.subr.mxu0 0.0
        %4201 = vmatpush1.msra.mxu0 0.0
        %4202 = vmatprep.subr.mxu0 0.0
        %4203 = vmatpush1.msra.mxu0 0.0
        %4204 = vmatprep.subr.mxu0 0.0
        %4205 = vmatpush1.msra.mxu0 0.0
        %4206 = vmatprep.subr.mxu0 0.0
        %4207 = vmatpush1.msra.mxu0 0.0
        %4208 = vmatprep.subr.mxu0 0.0
        %4209 = vmatpush1.msra.mxu0 0.0
        %4210 = vmatprep.subr.mxu0 0.0
        %4211 = vmatpush1.msra.mxu0 0.0
        %4212 = vmatprep.subr.mxu0 0.0
        %4213 = vmatpush1.msra.mxu0 0.0
        %4214 = vmatprep.subr.mxu0 0.0
        %4215 = vmatpush1.msra.mxu0 0.0
        %4216 = vmatprep.subr.mxu0 0.0
        %4217 = vmatpush1.msra.mxu0 0.0
        %4218 = vmatprep.subr.mxu0 0.0
        %4219 = vmatpush1.msra.mxu0 0.0
        %4220 = vmatprep.subr.mxu0 0.0
        %4221 = vmatpush1.msra.mxu0 0.0
        %4222 = vmatprep.subr.mxu0 0.0
        %4223 = vmatpush1.msra.mxu0 0.0
        %4224 = vmatprep.subr.mxu0 0.0
        %4225 = vmatpush1.msra.mxu0 0.0
        %4226 = vmatprep.subr.mxu0 0.0
        %4227 = vmatpush1.msra.mxu0 0.0
        %4228 = vmatprep.subr.mxu0 0.0
        %4229 = vmatpush1.msra.mxu0 %v4196
        %4230 = vmatprep.subr.mxu0 0.0
        %4231 = vmatpush2.msra.mxu0 0.0
        %4232 = vmatprep.subr.mxu0 0.0
        %4233 = vmatpush2.msra.mxu0 0.0
        %4234 = vmatprep.subr.mxu0 0.0
        %4235 = vmatpush2.msra.mxu0 0.0
        %4236 = vmatprep.subr.mxu0 0.0
        %4237 = vmatpush2.msra.mxu0 0.0
        %4238 = vmatprep.subr.mxu0 0.0
        %4239 = vmatpush2.msra.mxu0 0.0
        %4240 = vmatprep.subr.mxu0 0.0
        %4241 = vmatpush2.msra.mxu0 0.0
        %4242 = vmatprep.subr.mxu0 0.0
        %4243 = vmatpush2.msra.mxu0 0.0
        %4244 = vmatprep.subr.mxu0 0.0
        %4245 = vmatpush2.msra.mxu0 0.0
        %4246 = vmatprep.subr.mxu0 0.0
        %4247 = vmatpush2.msra.mxu0 0.0
        %4248 = vmatprep.subr.mxu0 0.0
        %4249 = vmatpush2.msra.mxu0 0.0
        %4250 = vmatprep.subr.mxu0 0.0
        %4251 = vmatpush2.msra.mxu0 0.0
        %4252 = vmatprep.subr.mxu0 0.0
        %4253 = vmatpush2.msra.mxu0 0.0
        %4254 = vmatprep.subr.mxu0 0.0
        %4255 = vmatpush2.msra.mxu0 0.0
        %4256 = vmatprep.subr.mxu0 0.0
        %4257 = vmatpush2.msra.mxu0 0.0
        %4258 = vmatprep.subr.mxu0 0.0
        %4259 = vmatpush2.msra.mxu0 0.0
        %4260 = vmatprep.subr.mxu0 0.0
        %4261 = vmatpush2.msra.mxu0 0.0
        %4262 = vmatprep.mubr.f32.mxu0 0.0
        %4263 = vmatmul.mubr.f32.gmra.mxu0 %v4148
        %v4264 = vpop.f32.mrf.mxu0
        %v4265 = vadd.f32 0.0, %v4264
        %v4266 = vpop.f32.mrf.mxu0
        %4267 = vmatprep.mubr.f32.mxu0 0.0
        %4268 = vmatmul.mubr.f32.gmra.mxu0 %v4151
        %v4269 = vpop.f32.mrf.mxu0
        %v4270 = vadd.f32 0.0, %v4269
        %v4271 = vpop.f32.mrf.mxu0
        %4272 = vmatprep.mubr.f32.mxu0 0.0
        %4273 = vmatmul.mubr.f32.gmra.mxu0 %v4154
        %v4274 = vpop.f32.mrf.mxu0
        %v4275 = vadd.f32 0.0, %v4274
        %v4276 = vpop.f32.mrf.mxu0
        %4277 = vmatprep.mubr.f32.mxu0 0.0
        %4278 = vmatmul.mubr.f32.gmra.mxu0 %v4157
        %v4279 = vpop.f32.mrf.mxu0
        %v4280 = vadd.f32 0.0, %v4279
        %v4281 = vpop.f32.mrf.mxu0
        %4282 = vmatprep.mubr.f32.mxu0 0.0
        %4283 = vmatmul.mubr.f32.gmra.mxu0 %v4160
        %v4284 = vpop.f32.mrf.mxu0
        %v4285 = vadd.f32 0.0, %v4284
        %v4286 = vpop.f32.mrf.mxu0
        %4287 = vmatprep.mubr.f32.mxu0 0.0
        %4288 = vmatmul.mubr.f32.gmra.mxu0 %v4163
        %v4289 = vpop.f32.mrf.mxu0
        %v4290 = vadd.f32 0.0, %v4289
        %v4291 = vpop.f32.mrf.mxu0
        %4292 = vmatprep.mubr.f32.mxu0 0.0
        %4293 = vmatmul.mubr.f32.gmra.mxu0 %v4166
        %v4294 = vpop.f32.mrf.mxu0
        %v4295 = vadd.f32 0.0, %v4294
        %v4296 = vpop.f32.mrf.mxu0
        %4297 = vmatprep.mubr.f32.mxu0 0.0
        %4298 = vmatmul.mubr.f32.gmra.mxu0 %v4169
        %v4299 = vpop.f32.mrf.mxu0
        %v4300 = vadd.f32 0.0, %v4299
        %v4301 = vpop.f32.mrf.mxu0
        %4302 = vmatprep.mubr.f32.mxu0 0.0
        %4303 = vmatmul.mubr.f32.gmra.mxu0 %v4172
        %v4304 = vpop.f32.mrf.mxu0
        %v4305 = vadd.f32 0.0, %v4304
        %v4306 = vpop.f32.mrf.mxu0
        %4307 = vmatprep.mubr.f32.mxu0 0.0
        %4308 = vmatmul.mubr.f32.gmra.mxu0 %v4175
        %v4309 = vpop.f32.mrf.mxu0
        %v4310 = vadd.f32 0.0, %v4309
        %v4311 = vpop.f32.mrf.mxu0
        %4312 = vmatprep.mubr.f32.mxu0 0.0
        %4313 = vmatmul.mubr.f32.gmra.mxu0 %v4178
        %v4314 = vpop.f32.mrf.mxu0
        %v4315 = vadd.f32 0.0, %v4314
        %v4316 = vpop.f32.mrf.mxu0
        %4317 = vmatprep.mubr.f32.mxu0 0.0
        %4318 = vmatmul.mubr.f32.gmra.mxu0 %v4181
        %v4319 = vpop.f32.mrf.mxu0
        %v4320 = vadd.f32 0.0, %v4319
        %v4321 = vpop.f32.mrf.mxu0
        %4322 = vmatprep.mubr.f32.mxu0 0.0
        %4323 = vmatmul.mubr.f32.gmra.mxu0 %v4184
        %v4324 = vpop.f32.mrf.mxu0
        %v4325 = vadd.f32 0.0, %v4324
        %v4326 = vpop.f32.mrf.mxu0
        %4327 = vmatprep.mubr.f32.mxu0 0.0
        %4328 = vmatmul.mubr.f32.gmra.mxu0 %v4187
        %v4329 = vpop.f32.mrf.mxu0
        %v4330 = vadd.f32 0.0, %v4329
        %v4331 = vpop.f32.mrf.mxu0
        %4332 = vmatprep.mubr.f32.mxu0 0.0
        %4333 = vmatmul.mubr.f32.gmra.mxu0 %v4190
        %v4334 = vpop.f32.mrf.mxu0
        %v4335 = vadd.f32 0.0, %v4334
        %v4336 = vpop.f32.mrf.mxu0
        %4337 = vmatprep.mubr.f32.mxu0 0.0
        %4338 = vmatmul.mubr.f32.gmra.mxu0 %v4193
        %v4339 = vpop.f32.mrf.mxu0
        %v4340 = vadd.f32 0.0, %v4339
        %v4341 = vpop.f32.mrf.mxu0
        %4342 = vdwg.mxu0
        %v4343 = vadd.f32 %v4113, %v4265
        %v4344 = vadd.f32 %v4114, %v4270
        %v4345 = vadd.f32 %v4115, %v4275
        %v4346 = vadd.f32 %v4116, %v4280
        %v4347 = vadd.f32 %v4117, %v4285
        %v4348 = vadd.f32 %v4118, %v4290
        %v4349 = vadd.f32 %v4119, %v4295
        %v4350 = vadd.f32 %v4120, %v4300
        %v4351 = vadd.f32 %v4121, %v4305
        %v4352 = vadd.f32 %v4122, %v4310
        %v4353 = vadd.f32 %v4123, %v4315
        %v4354 = vadd.f32 %v4124, %v4320
        %v4355 = vadd.f32 %v4125, %v4325
        %v4356 = vadd.f32 %v4126, %v4330
        %v4357 = vadd.f32 %v4127, %v4335
        %v4358 = vadd.f32 %v4128, %v4340
        %v4359 = vld [vmem:[%s249 + $0x12] sm:$0xff]
        %v4360 = vld [vmem:[%s249 + $0x1a] sm:$0xff]
        %v4361 = vld [vmem:[%s249 + $0x22] sm:$0xff]
        %v4362 = vld [vmem:[%s249 + $0x2a] sm:$0xff]
        %v4363 = vld [vmem:[%s249 + $0x32] sm:$0xff]
        %v4364 = vld [vmem:[%s249 + $0x3a] sm:$0xff]
        %v4365 = vld [vmem:[%s249 + $0x42] sm:$0xff]
        %v4366 = vld [vmem:[%s249 + $0x4a] sm:$0xff]
        %v4367 = vld [vmem:[%s249 + $0x52] sm:$0xff]
        %v4368 = vld [vmem:[%s249 + $0x5a] sm:$0xff]
        %v4369 = vld [vmem:[%s249 + $0x62] sm:$0xff]
        %v4370 = vld [vmem:[%s249 + $0x6a] sm:$0xff]
        %v4371 = vld [vmem:[%s249 + $0x72] sm:$0xff]
        %v4372 = vld [vmem:[%s249 + $0x7a] sm:$0xff]
        %v4373 = vld [vmem:[%s249 + $0x82] sm:$0xff]
        %v4374 = vld [vmem:[%s249 + $0x8a] sm:$0x3f]
        %s4375 = scalar_lea.vmem %s1, 72
        %v4376 = vld [vmem:[%s4375] sm:$0xf]
        %v4378 = vsel %vm285, %v4359, 0
        %v4381 = vsel %vm285, %v4360, 0
        %v4384 = vsel %vm285, %v4361, 0
        %v4387 = vsel %vm285, %v4362, 0
        %v4390 = vsel %vm285, %v4363, 0
        %v4393 = vsel %vm285, %v4364, 0
        %v4396 = vsel %vm285, %v4365, 0
        %v4399 = vsel %vm285, %v4366, 0
        %v4402 = vsel %vm285, %v4367, 0
        %v4405 = vsel %vm285, %v4368, 0
        %v4408 = vsel %vm285, %v4369, 0
        %v4411 = vsel %vm285, %v4370, 0
        %v4414 = vsel %vm285, %v4371, 0
        %v4417 = vsel %vm285, %v4372, 0
        %v4420 = vsel %vm285, %v4373, 0
        %v4423 = vsel %vm285, %v4374, 0
        %v4426 = vsel %vm334, %v4376, 0
        %4428 = vmatprep.subr.mxu0 0.0
        %4429 = vmatpush1.msra.mxu0 0.0
        %4430 = vmatprep.subr.mxu0 0.0
        %4431 = vmatpush1.msra.mxu0 0.0
        %4432 = vmatprep.subr.mxu0 0.0
        %4433 = vmatpush1.msra.mxu0 0.0
        %4434 = vmatprep.subr.mxu0 0.0
        %4435 = vmatpush1.msra.mxu0 0.0
        %4436 = vmatprep.subr.mxu0 0.0
        %4437 = vmatpush1.msra.mxu0 0.0
        %4438 = vmatprep.subr.mxu0 0.0
        %4439 = vmatpush1.msra.mxu0 0.0
        %4440 = vmatprep.subr.mxu0 0.0
        %4441 = vmatpush1.msra.mxu0 0.0
        %4442 = vmatprep.subr.mxu0 0.0
        %4443 = vmatpush1.msra.mxu0 0.0
        %4444 = vmatprep.subr.mxu0 0.0
        %4445 = vmatpush1.msra.mxu0 0.0
        %4446 = vmatprep.subr.mxu0 0.0
        %4447 = vmatpush1.msra.mxu0 0.0
        %4448 = vmatprep.subr.mxu0 0.0
        %4449 = vmatpush1.msra.mxu0 0.0
        %4450 = vmatprep.subr.mxu0 0.0
        %4451 = vmatpush1.msra.mxu0 0.0
        %4452 = vmatprep.subr.mxu0 0.0
        %4453 = vmatpush1.msra.mxu0 0.0
        %4454 = vmatprep.subr.mxu0 0.0
        %4455 = vmatpush1.msra.mxu0 0.0
        %4456 = vmatprep.subr.mxu0 0.0
        %4457 = vmatpush1.msra.mxu0 0.0
        %4458 = vmatprep.subr.mxu0 0.0
        %4459 = vmatpush1.msra.mxu0 %v4426
        %4460 = vmatprep.subr.mxu0 0.0
        %4461 = vmatpush2.msra.mxu0 0.0
        %4462 = vmatprep.subr.mxu0 0.0
        %4463 = vmatpush2.msra.mxu0 0.0
        %4464 = vmatprep.subr.mxu0 0.0
        %4465 = vmatpush2.msra.mxu0 0.0
        %4466 = vmatprep.subr.mxu0 0.0
        %4467 = vmatpush2.msra.mxu0 0.0
        %4468 = vmatprep.subr.mxu0 0.0
        %4469 = vmatpush2.msra.mxu0 0.0
        %4470 = vmatprep.subr.mxu0 0.0
        %4471 = vmatpush2.msra.mxu0 0.0
        %4472 = vmatprep.subr.mxu0 0.0
        %4473 = vmatpush2.msra.mxu0 0.0
        %4474 = vmatprep.subr.mxu0 0.0
        %4475 = vmatpush2.msra.mxu0 0.0
        %4476 = vmatprep.subr.mxu0 0.0
        %4477 = vmatpush2.msra.mxu0 0.0
        %4478 = vmatprep.subr.mxu0 0.0
        %4479 = vmatpush2.msra.mxu0 0.0
        %4480 = vmatprep.subr.mxu0 0.0
        %4481 = vmatpush2.msra.mxu0 0.0
        %4482 = vmatprep.subr.mxu0 0.0
        %4483 = vmatpush2.msra.mxu0 0.0
        %4484 = vmatprep.subr.mxu0 0.0
        %4485 = vmatpush2.msra.mxu0 0.0
        %4486 = vmatprep.subr.mxu0 0.0
        %4487 = vmatpush2.msra.mxu0 0.0
        %4488 = vmatprep.subr.mxu0 0.0
        %4489 = vmatpush2.msra.mxu0 0.0
        %4490 = vmatprep.subr.mxu0 0.0
        %4491 = vmatpush2.msra.mxu0 0.0
        %4492 = vmatprep.mubr.f32.mxu0 0.0
        %4493 = vmatmul.mubr.f32.gmra.mxu0 %v4378
        %v4494 = vpop.f32.mrf.mxu0
        %v4495 = vadd.f32 0.0, %v4494
        %v4496 = vpop.f32.mrf.mxu0
        %4497 = vmatprep.mubr.f32.mxu0 0.0
        %4498 = vmatmul.mubr.f32.gmra.mxu0 %v4381
        %v4499 = vpop.f32.mrf.mxu0
        %v4500 = vadd.f32 0.0, %v4499
        %v4501 = vpop.f32.mrf.mxu0
        %4502 = vmatprep.mubr.f32.mxu0 0.0
        %4503 = vmatmul.mubr.f32.gmra.mxu0 %v4384
        %v4504 = vpop.f32.mrf.mxu0
        %v4505 = vadd.f32 0.0, %v4504
        %v4506 = vpop.f32.mrf.mxu0
        %4507 = vmatprep.mubr.f32.mxu0 0.0
        %4508 = vmatmul.mubr.f32.gmra.mxu0 %v4387
        %v4509 = vpop.f32.mrf.mxu0
        %v4510 = vadd.f32 0.0, %v4509
        %v4511 = vpop.f32.mrf.mxu0
        %4512 = vmatprep.mubr.f32.mxu0 0.0
        %4513 = vmatmul.mubr.f32.gmra.mxu0 %v4390
        %v4514 = vpop.f32.mrf.mxu0
        %v4515 = vadd.f32 0.0, %v4514
        %v4516 = vpop.f32.mrf.mxu0
        %4517 = vmatprep.mubr.f32.mxu0 0.0
        %4518 = vmatmul.mubr.f32.gmra.mxu0 %v4393
        %v4519 = vpop.f32.mrf.mxu0
        %v4520 = vadd.f32 0.0, %v4519
        %v4521 = vpop.f32.mrf.mxu0
        %4522 = vmatprep.mubr.f32.mxu0 0.0
        %4523 = vmatmul.mubr.f32.gmra.mxu0 %v4396
        %v4524 = vpop.f32.mrf.mxu0
        %v4525 = vadd.f32 0.0, %v4524
        %v4526 = vpop.f32.mrf.mxu0
        %4527 = vmatprep.mubr.f32.mxu0 0.0
        %4528 = vmatmul.mubr.f32.gmra.mxu0 %v4399
        %v4529 = vpop.f32.mrf.mxu0
        %v4530 = vadd.f32 0.0, %v4529
        %v4531 = vpop.f32.mrf.mxu0
        %4532 = vmatprep.mubr.f32.mxu0 0.0
        %4533 = vmatmul.mubr.f32.gmra.mxu0 %v4402
        %v4534 = vpop.f32.mrf.mxu0
        %v4535 = vadd.f32 0.0, %v4534
        %v4536 = vpop.f32.mrf.mxu0
        %4537 = vmatprep.mubr.f32.mxu0 0.0
        %4538 = vmatmul.mubr.f32.gmra.mxu0 %v4405
        %v4539 = vpop.f32.mrf.mxu0
        %v4540 = vadd.f32 0.0, %v4539
        %v4541 = vpop.f32.mrf.mxu0
        %4542 = vmatprep.mubr.f32.mxu0 0.0
        %4543 = vmatmul.mubr.f32.gmra.mxu0 %v4408
        %v4544 = vpop.f32.mrf.mxu0
        %v4545 = vadd.f32 0.0, %v4544
        %v4546 = vpop.f32.mrf.mxu0
        %4547 = vmatprep.mubr.f32.mxu0 0.0
        %4548 = vmatmul.mubr.f32.gmra.mxu0 %v4411
        %v4549 = vpop.f32.mrf.mxu0
        %v4550 = vadd.f32 0.0, %v4549
        %v4551 = vpop.f32.mrf.mxu0
        %4552 = vmatprep.mubr.f32.mxu0 0.0
        %4553 = vmatmul.mubr.f32.gmra.mxu0 %v4414
        %v4554 = vpop.f32.mrf.mxu0
        %v4555 = vadd.f32 0.0, %v4554
        %v4556 = vpop.f32.mrf.mxu0
        %4557 = vmatprep.mubr.f32.mxu0 0.0
        %4558 = vmatmul.mubr.f32.gmra.mxu0 %v4417
        %v4559 = vpop.f32.mrf.mxu0
        %v4560 = vadd.f32 0.0, %v4559
        %v4561 = vpop.f32.mrf.mxu0
        %4562 = vmatprep.mubr.f32.mxu0 0.0
        %4563 = vmatmul.mubr.f32.gmra.mxu0 %v4420
        %v4564 = vpop.f32.mrf.mxu0
        %v4565 = vadd.f32 0.0, %v4564
        %v4566 = vpop.f32.mrf.mxu0
        %4567 = vmatprep.mubr.f32.mxu0 0.0
        %4568 = vmatmul.mubr.f32.gmra.mxu0 %v4423
        %v4569 = vpop.f32.mrf.mxu0
        %v4570 = vadd.f32 0.0, %v4569
        %v4571 = vpop.f32.mrf.mxu0
        %4572 = vdwg.mxu0
        %v4573 = vadd.f32 %v4343, %v4495
        %v4574 = vadd.f32 %v4344, %v4500
        %v4575 = vadd.f32 %v4345, %v4505
        %v4576 = vadd.f32 %v4346, %v4510
        %v4577 = vadd.f32 %v4347, %v4515
        %v4578 = vadd.f32 %v4348, %v4520
        %v4579 = vadd.f32 %v4349, %v4525
        %v4580 = vadd.f32 %v4350, %v4530
        %v4581 = vadd.f32 %v4351, %v4535
        %v4582 = vadd.f32 %v4352, %v4540
        %v4583 = vadd.f32 %v4353, %v4545
        %v4584 = vadd.f32 %v4354, %v4550
        %v4585 = vadd.f32 %v4355, %v4555
        %v4586 = vadd.f32 %v4356, %v4560
        %v4587 = vadd.f32 %v4357, %v4565
        %v4588 = vadd.f32 %v4358, %v4570
        %v4589 = vld [vmem:[%s249 + $0x13] sm:$0xff]
        %v4590 = vld [vmem:[%s249 + $0x1b] sm:$0xff]
        %v4591 = vld [vmem:[%s249 + $0x23] sm:$0xff]
        %v4592 = vld [vmem:[%s249 + $0x2b] sm:$0xff]
        %v4593 = vld [vmem:[%s249 + $0x33] sm:$0xff]
        %v4594 = vld [vmem:[%s249 + $0x3b] sm:$0xff]
        %v4595 = vld [vmem:[%s249 + $0x43] sm:$0xff]
        %v4596 = vld [vmem:[%s249 + $0x4b] sm:$0xff]
        %v4597 = vld [vmem:[%s249 + $0x53] sm:$0xff]
        %v4598 = vld [vmem:[%s249 + $0x5b] sm:$0xff]
        %v4599 = vld [vmem:[%s249 + $0x63] sm:$0xff]
        %v4600 = vld [vmem:[%s249 + $0x6b] sm:$0xff]
        %v4601 = vld [vmem:[%s249 + $0x73] sm:$0xff]
        %v4602 = vld [vmem:[%s249 + $0x7b] sm:$0xff]
        %v4603 = vld [vmem:[%s249 + $0x83] sm:$0xff]
        %v4604 = vld [vmem:[%s249 + $0x8b] sm:$0x3f]
        %s4605 = scalar_lea.vmem %s1, 76
        %v4606 = vld [vmem:[%s4605] sm:$0xf]
        %v4608 = vsel %vm285, %v4589, 0
        %v4611 = vsel %vm285, %v4590, 0
        %v4614 = vsel %vm285, %v4591, 0
        %v4617 = vsel %vm285, %v4592, 0
        %v4620 = vsel %vm285, %v4593, 0
        %v4623 = vsel %vm285, %v4594, 0
        %v4626 = vsel %vm285, %v4595, 0
        %v4629 = vsel %vm285, %v4596, 0
        %v4632 = vsel %vm285, %v4597, 0
        %v4635 = vsel %vm285, %v4598, 0
        %v4638 = vsel %vm285, %v4599, 0
        %v4641 = vsel %vm285, %v4600, 0
        %v4644 = vsel %vm285, %v4601, 0
        %v4647 = vsel %vm285, %v4602, 0
        %v4650 = vsel %vm285, %v4603, 0
        %v4653 = vsel %vm285, %v4604, 0
        %v4656 = vsel %vm334, %v4606, 0
        %4658 = vmatprep.subr.mxu0 0.0
        %4659 = vmatpush1.msra.mxu0 0.0
        %4660 = vmatprep.subr.mxu0 0.0
        %4661 = vmatpush1.msra.mxu0 0.0
        %4662 = vmatprep.subr.mxu0 0.0
        %4663 = vmatpush1.msra.mxu0 0.0
        %4664 = vmatprep.subr.mxu0 0.0
        %4665 = vmatpush1.msra.mxu0 0.0
        %4666 = vmatprep.subr.mxu0 0.0
        %4667 = vmatpush1.msra.mxu0 0.0
        %4668 = vmatprep.subr.mxu0 0.0
        %4669 = vmatpush1.msra.mxu0 0.0
        %4670 = vmatprep.subr.mxu0 0.0
        %4671 = vmatpush1.msra.mxu0 0.0
        %4672 = vmatprep.subr.mxu0 0.0
        %4673 = vmatpush1.msra.mxu0 0.0
        %4674 = vmatprep.subr.mxu0 0.0
        %4675 = vmatpush1.msra.mxu0 0.0
        %4676 = vmatprep.subr.mxu0 0.0
        %4677 = vmatpush1.msra.mxu0 0.0
        %4678 = vmatprep.subr.mxu0 0.0
        %4679 = vmatpush1.msra.mxu0 0.0
        %4680 = vmatprep.subr.mxu0 0.0
        %4681 = vmatpush1.msra.mxu0 0.0
        %4682 = vmatprep.subr.mxu0 0.0
        %4683 = vmatpush1.msra.mxu0 0.0
        %4684 = vmatprep.subr.mxu0 0.0
        %4685 = vmatpush1.msra.mxu0 0.0
        %4686 = vmatprep.subr.mxu0 0.0
        %4687 = vmatpush1.msra.mxu0 0.0
        %4688 = vmatprep.subr.mxu0 0.0
        %4689 = vmatpush1.msra.mxu0 %v4656
        %4690 = vmatprep.subr.mxu0 0.0
        %4691 = vmatpush2.msra.mxu0 0.0
        %4692 = vmatprep.subr.mxu0 0.0
        %4693 = vmatpush2.msra.mxu0 0.0
        %4694 = vmatprep.subr.mxu0 0.0
        %4695 = vmatpush2.msra.mxu0 0.0
        %4696 = vmatprep.subr.mxu0 0.0
        %4697 = vmatpush2.msra.mxu0 0.0
        %4698 = vmatprep.subr.mxu0 0.0
        %4699 = vmatpush2.msra.mxu0 0.0
        %4700 = vmatprep.subr.mxu0 0.0
        %4701 = vmatpush2.msra.mxu0 0.0
        %4702 = vmatprep.subr.mxu0 0.0
        %4703 = vmatpush2.msra.mxu0 0.0
        %4704 = vmatprep.subr.mxu0 0.0
        %4705 = vmatpush2.msra.mxu0 0.0
        %4706 = vmatprep.subr.mxu0 0.0
        %4707 = vmatpush2.msra.mxu0 0.0
        %4708 = vmatprep.subr.mxu0 0.0
        %4709 = vmatpush2.msra.mxu0 0.0
        %4710 = vmatprep.subr.mxu0 0.0
        %4711 = vmatpush2.msra.mxu0 0.0
        %4712 = vmatprep.subr.mxu0 0.0
        %4713 = vmatpush2.msra.mxu0 0.0
        %4714 = vmatprep.subr.mxu0 0.0
        %4715 = vmatpush2.msra.mxu0 0.0
        %4716 = vmatprep.subr.mxu0 0.0
        %4717 = vmatpush2.msra.mxu0 0.0
        %4718 = vmatprep.subr.mxu0 0.0
        %4719 = vmatpush2.msra.mxu0 0.0
        %4720 = vmatprep.subr.mxu0 0.0
        %4721 = vmatpush2.msra.mxu0 0.0
        %4722 = vmatprep.mubr.f32.mxu0 0.0
        %4723 = vmatmul.mubr.f32.gmra.mxu0 %v4608
        %v4724 = vpop.f32.mrf.mxu0
        %v4725 = vadd.f32 0.0, %v4724
        %v4726 = vpop.f32.mrf.mxu0
        %4727 = vmatprep.mubr.f32.mxu0 0.0
        %4728 = vmatmul.mubr.f32.gmra.mxu0 %v4611
        %v4729 = vpop.f32.mrf.mxu0
        %v4730 = vadd.f32 0.0, %v4729
        %v4731 = vpop.f32.mrf.mxu0
        %4732 = vmatprep.mubr.f32.mxu0 0.0
        %4733 = vmatmul.mubr.f32.gmra.mxu0 %v4614
        %v4734 = vpop.f32.mrf.mxu0
        %v4735 = vadd.f32 0.0, %v4734
        %v4736 = vpop.f32.mrf.mxu0
        %4737 = vmatprep.mubr.f32.mxu0 0.0
        %4738 = vmatmul.mubr.f32.gmra.mxu0 %v4617
        %v4739 = vpop.f32.mrf.mxu0
        %v4740 = vadd.f32 0.0, %v4739
        %v4741 = vpop.f32.mrf.mxu0
        %4742 = vmatprep.mubr.f32.mxu0 0.0
        %4743 = vmatmul.mubr.f32.gmra.mxu0 %v4620
        %v4744 = vpop.f32.mrf.mxu0
        %v4745 = vadd.f32 0.0, %v4744
        %v4746 = vpop.f32.mrf.mxu0
        %4747 = vmatprep.mubr.f32.mxu0 0.0
        %4748 = vmatmul.mubr.f32.gmra.mxu0 %v4623
        %v4749 = vpop.f32.mrf.mxu0
        %v4750 = vadd.f32 0.0, %v4749
        %v4751 = vpop.f32.mrf.mxu0
        %4752 = vmatprep.mubr.f32.mxu0 0.0
        %4753 = vmatmul.mubr.f32.gmra.mxu0 %v4626
        %v4754 = vpop.f32.mrf.mxu0
        %v4755 = vadd.f32 0.0, %v4754
        %v4756 = vpop.f32.mrf.mxu0
        %4757 = vmatprep.mubr.f32.mxu0 0.0
        %4758 = vmatmul.mubr.f32.gmra.mxu0 %v4629
        %v4759 = vpop.f32.mrf.mxu0
        %v4760 = vadd.f32 0.0, %v4759
        %v4761 = vpop.f32.mrf.mxu0
        %4762 = vmatprep.mubr.f32.mxu0 0.0
        %4763 = vmatmul.mubr.f32.gmra.mxu0 %v4632
        %v4764 = vpop.f32.mrf.mxu0
        %v4765 = vadd.f32 0.0, %v4764
        %v4766 = vpop.f32.mrf.mxu0
        %4767 = vmatprep.mubr.f32.mxu0 0.0
        %4768 = vmatmul.mubr.f32.gmra.mxu0 %v4635
        %v4769 = vpop.f32.mrf.mxu0
        %v4770 = vadd.f32 0.0, %v4769
        %v4771 = vpop.f32.mrf.mxu0
        %4772 = vmatprep.mubr.f32.mxu0 0.0
        %4773 = vmatmul.mubr.f32.gmra.mxu0 %v4638
        %v4774 = vpop.f32.mrf.mxu0
        %v4775 = vadd.f32 0.0, %v4774
        %v4776 = vpop.f32.mrf.mxu0
        %4777 = vmatprep.mubr.f32.mxu0 0.0
        %4778 = vmatmul.mubr.f32.gmra.mxu0 %v4641
        %v4779 = vpop.f32.mrf.mxu0
        %v4780 = vadd.f32 0.0, %v4779
        %v4781 = vpop.f32.mrf.mxu0
        %4782 = vmatprep.mubr.f32.mxu0 0.0
        %4783 = vmatmul.mubr.f32.gmra.mxu0 %v4644
        %v4784 = vpop.f32.mrf.mxu0
        %v4785 = vadd.f32 0.0, %v4784
        %v4786 = vpop.f32.mrf.mxu0
        %4787 = vmatprep.mubr.f32.mxu0 0.0
        %4788 = vmatmul.mubr.f32.gmra.mxu0 %v4647
        %v4789 = vpop.f32.mrf.mxu0
        %v4790 = vadd.f32 0.0, %v4789
        %v4791 = vpop.f32.mrf.mxu0
        %4792 = vmatprep.mubr.f32.mxu0 0.0
        %4793 = vmatmul.mubr.f32.gmra.mxu0 %v4650
        %v4794 = vpop.f32.mrf.mxu0
        %v4795 = vadd.f32 0.0, %v4794
        %v4796 = vpop.f32.mrf.mxu0
        %4797 = vmatprep.mubr.f32.mxu0 0.0
        %4798 = vmatmul.mubr.f32.gmra.mxu0 %v4653
        %v4799 = vpop.f32.mrf.mxu0
        %v4800 = vadd.f32 0.0, %v4799
        %v4801 = vpop.f32.mrf.mxu0
        %4802 = vdwg.mxu0
        %v4803 = vadd.f32 %v4573, %v4725
        %v4804 = vadd.f32 %v4574, %v4730
        %v4805 = vadd.f32 %v4575, %v4735
        %v4806 = vadd.f32 %v4576, %v4740
        %v4807 = vadd.f32 %v4577, %v4745
        %v4808 = vadd.f32 %v4578, %v4750
        %v4809 = vadd.f32 %v4579, %v4755
        %v4810 = vadd.f32 %v4580, %v4760
        %v4811 = vadd.f32 %v4581, %v4765
        %v4812 = vadd.f32 %v4582, %v4770
        %v4813 = vadd.f32 %v4583, %v4775
        %v4814 = vadd.f32 %v4584, %v4780
        %v4815 = vadd.f32 %v4585, %v4785
        %v4816 = vadd.f32 %v4586, %v4790
        %v4817 = vadd.f32 %v4587, %v4795
        %v4818 = vadd.f32 %v4588, %v4800
        %v4819 = vld [vmem:[%s249 + $0x14] sm:$0xff]
        %v4820 = vld [vmem:[%s249 + $0x1c] sm:$0xff]
        %v4821 = vld [vmem:[%s249 + $0x24] sm:$0xff]
        %v4822 = vld [vmem:[%s249 + $0x2c] sm:$0xff]
        %v4823 = vld [vmem:[%s249 + $0x34] sm:$0xff]
        %v4824 = vld [vmem:[%s249 + $0x3c] sm:$0xff]
        %v4825 = vld [vmem:[%s249 + $0x44] sm:$0xff]
        %v4826 = vld [vmem:[%s249 + $0x4c] sm:$0xff]
        %v4827 = vld [vmem:[%s249 + $0x54] sm:$0xff]
        %v4828 = vld [vmem:[%s249 + $0x5c] sm:$0xff]
        %v4829 = vld [vmem:[%s249 + $0x64] sm:$0xff]
        %v4830 = vld [vmem:[%s249 + $0x6c] sm:$0xff]
        %v4831 = vld [vmem:[%s249 + $0x74] sm:$0xff]
        %v4832 = vld [vmem:[%s249 + $0x7c] sm:$0xff]
        %v4833 = vld [vmem:[%s249 + $0x84] sm:$0xff]
        %v4834 = vld [vmem:[%s249 + $0x8c] sm:$0x3f]
        %s4835 = scalar_lea.vmem %s1, 80
        %v4836 = vld [vmem:[%s4835] sm:$0xf]
        %v4838 = vsel %vm285, %v4819, 0
        %v4841 = vsel %vm285, %v4820, 0
        %v4844 = vsel %vm285, %v4821, 0
        %v4847 = vsel %vm285, %v4822, 0
        %v4850 = vsel %vm285, %v4823, 0
        %v4853 = vsel %vm285, %v4824, 0
        %v4856 = vsel %vm285, %v4825, 0
        %v4859 = vsel %vm285, %v4826, 0
        %v4862 = vsel %vm285, %v4827, 0
        %v4865 = vsel %vm285, %v4828, 0
        %v4868 = vsel %vm285, %v4829, 0
        %v4871 = vsel %vm285, %v4830, 0
        %v4874 = vsel %vm285, %v4831, 0
        %v4877 = vsel %vm285, %v4832, 0
        %v4880 = vsel %vm285, %v4833, 0
        %v4883 = vsel %vm285, %v4834, 0
        %v4886 = vsel %vm334, %v4836, 0
        %4888 = vmatprep.subr.mxu0 0.0
        %4889 = vmatpush1.msra.mxu0 0.0
        %4890 = vmatprep.subr.mxu0 0.0
        %4891 = vmatpush1.msra.mxu0 0.0
        %4892 = vmatprep.subr.mxu0 0.0
        %4893 = vmatpush1.msra.mxu0 0.0
        %4894 = vmatprep.subr.mxu0 0.0
        %4895 = vmatpush1.msra.mxu0 0.0
        %4896 = vmatprep.subr.mxu0 0.0
        %4897 = vmatpush1.msra.mxu0 0.0
        %4898 = vmatprep.subr.mxu0 0.0
        %4899 = vmatpush1.msra.mxu0 0.0
        %4900 = vmatprep.subr.mxu0 0.0
        %4901 = vmatpush1.msra.mxu0 0.0
        %4902 = vmatprep.subr.mxu0 0.0
        %4903 = vmatpush1.msra.mxu0 0.0
        %4904 = vmatprep.subr.mxu0 0.0
        %4905 = vmatpush1.msra.mxu0 0.0
        %4906 = vmatprep.subr.mxu0 0.0
        %4907 = vmatpush1.msra.mxu0 0.0
        %4908 = vmatprep.subr.mxu0 0.0
        %4909 = vmatpush1.msra.mxu0 0.0
        %4910 = vmatprep.subr.mxu0 0.0
        %4911 = vmatpush1.msra.mxu0 0.0
        %4912 = vmatprep.subr.mxu0 0.0
        %4913 = vmatpush1.msra.mxu0 0.0
        %4914 = vmatprep.subr.mxu0 0.0
        %4915 = vmatpush1.msra.mxu0 0.0
        %4916 = vmatprep.subr.mxu0 0.0
        %4917 = vmatpush1.msra.mxu0 0.0
        %4918 = vmatprep.subr.mxu0 0.0
        %4919 = vmatpush1.msra.mxu0 %v4886
        %4920 = vmatprep.subr.mxu0 0.0
        %4921 = vmatpush2.msra.mxu0 0.0
        %4922 = vmatprep.subr.mxu0 0.0
        %4923 = vmatpush2.msra.mxu0 0.0
        %4924 = vmatprep.subr.mxu0 0.0
        %4925 = vmatpush2.msra.mxu0 0.0
        %4926 = vmatprep.subr.mxu0 0.0
        %4927 = vmatpush2.msra.mxu0 0.0
        %4928 = vmatprep.subr.mxu0 0.0
        %4929 = vmatpush2.msra.mxu0 0.0
        %4930 = vmatprep.subr.mxu0 0.0
        %4931 = vmatpush2.msra.mxu0 0.0
        %4932 = vmatprep.subr.mxu0 0.0
        %4933 = vmatpush2.msra.mxu0 0.0
        %4934 = vmatprep.subr.mxu0 0.0
        %4935 = vmatpush2.msra.mxu0 0.0
        %4936 = vmatprep.subr.mxu0 0.0
        %4937 = vmatpush2.msra.mxu0 0.0
        %4938 = vmatprep.subr.mxu0 0.0
        %4939 = vmatpush2.msra.mxu0 0.0
        %4940 = vmatprep.subr.mxu0 0.0
        %4941 = vmatpush2.msra.mxu0 0.0
        %4942 = vmatprep.subr.mxu0 0.0
        %4943 = vmatpush2.msra.mxu0 0.0
        %4944 = vmatprep.subr.mxu0 0.0
        %4945 = vmatpush2.msra.mxu0 0.0
        %4946 = vmatprep.subr.mxu0 0.0
        %4947 = vmatpush2.msra.mxu0 0.0
        %4948 = vmatprep.subr.mxu0 0.0
        %4949 = vmatpush2.msra.mxu0 0.0
        %4950 = vmatprep.subr.mxu0 0.0
        %4951 = vmatpush2.msra.mxu0 0.0
        %4952 = vmatprep.mubr.f32.mxu0 0.0
        %4953 = vmatmul.mubr.f32.gmra.mxu0 %v4838
        %v4954 = vpop.f32.mrf.mxu0
        %v4955 = vadd.f32 0.0, %v4954
        %v4956 = vpop.f32.mrf.mxu0
        %4957 = vmatprep.mubr.f32.mxu0 0.0
        %4958 = vmatmul.mubr.f32.gmra.mxu0 %v4841
        %v4959 = vpop.f32.mrf.mxu0
        %v4960 = vadd.f32 0.0, %v4959
        %v4961 = vpop.f32.mrf.mxu0
        %4962 = vmatprep.mubr.f32.mxu0 0.0
        %4963 = vmatmul.mubr.f32.gmra.mxu0 %v4844
        %v4964 = vpop.f32.mrf.mxu0
        %v4965 = vadd.f32 0.0, %v4964
        %v4966 = vpop.f32.mrf.mxu0
        %4967 = vmatprep.mubr.f32.mxu0 0.0
        %4968 = vmatmul.mubr.f32.gmra.mxu0 %v4847
        %v4969 = vpop.f32.mrf.mxu0
        %v4970 = vadd.f32 0.0, %v4969
        %v4971 = vpop.f32.mrf.mxu0
        %4972 = vmatprep.mubr.f32.mxu0 0.0
        %4973 = vmatmul.mubr.f32.gmra.mxu0 %v4850
        %v4974 = vpop.f32.mrf.mxu0
        %v4975 = vadd.f32 0.0, %v4974
        %v4976 = vpop.f32.mrf.mxu0
        %4977 = vmatprep.mubr.f32.mxu0 0.0
        %4978 = vmatmul.mubr.f32.gmra.mxu0 %v4853
        %v4979 = vpop.f32.mrf.mxu0
        %v4980 = vadd.f32 0.0, %v4979
        %v4981 = vpop.f32.mrf.mxu0
        %4982 = vmatprep.mubr.f32.mxu0 0.0
        %4983 = vmatmul.mubr.f32.gmra.mxu0 %v4856
        %v4984 = vpop.f32.mrf.mxu0
        %v4985 = vadd.f32 0.0, %v4984
        %v4986 = vpop.f32.mrf.mxu0
        %4987 = vmatprep.mubr.f32.mxu0 0.0
        %4988 = vmatmul.mubr.f32.gmra.mxu0 %v4859
        %v4989 = vpop.f32.mrf.mxu0
        %v4990 = vadd.f32 0.0, %v4989
        %v4991 = vpop.f32.mrf.mxu0
        %4992 = vmatprep.mubr.f32.mxu0 0.0
        %4993 = vmatmul.mubr.f32.gmra.mxu0 %v4862
        %v4994 = vpop.f32.mrf.mxu0
        %v4995 = vadd.f32 0.0, %v4994
        %v4996 = vpop.f32.mrf.mxu0
        %4997 = vmatprep.mubr.f32.mxu0 0.0
        %4998 = vmatmul.mubr.f32.gmra.mxu0 %v4865
        %v4999 = vpop.f32.mrf.mxu0
        %v5000 = vadd.f32 0.0, %v4999
        %v5001 = vpop.f32.mrf.mxu0
        %5002 = vmatprep.mubr.f32.mxu0 0.0
        %5003 = vmatmul.mubr.f32.gmra.mxu0 %v4868
        %v5004 = vpop.f32.mrf.mxu0
        %v5005 = vadd.f32 0.0, %v5004
        %v5006 = vpop.f32.mrf.mxu0
        %5007 = vmatprep.mubr.f32.mxu0 0.0
        %5008 = vmatmul.mubr.f32.gmra.mxu0 %v4871
        %v5009 = vpop.f32.mrf.mxu0
        %v5010 = vadd.f32 0.0, %v5009
        %v5011 = vpop.f32.mrf.mxu0
        %5012 = vmatprep.mubr.f32.mxu0 0.0
        %5013 = vmatmul.mubr.f32.gmra.mxu0 %v4874
        %v5014 = vpop.f32.mrf.mxu0
        %v5015 = vadd.f32 0.0, %v5014
        %v5016 = vpop.f32.mrf.mxu0
        %5017 = vmatprep.mubr.f32.mxu0 0.0
        %5018 = vmatmul.mubr.f32.gmra.mxu0 %v4877
        %v5019 = vpop.f32.mrf.mxu0
        %v5020 = vadd.f32 0.0, %v5019
        %v5021 = vpop.f32.mrf.mxu0
        %5022 = vmatprep.mubr.f32.mxu0 0.0
        %5023 = vmatmul.mubr.f32.gmra.mxu0 %v4880
        %v5024 = vpop.f32.mrf.mxu0
        %v5025 = vadd.f32 0.0, %v5024
        %v5026 = vpop.f32.mrf.mxu0
        %5027 = vmatprep.mubr.f32.mxu0 0.0
        %5028 = vmatmul.mubr.f32.gmra.mxu0 %v4883
        %v5029 = vpop.f32.mrf.mxu0
        %v5030 = vadd.f32 0.0, %v5029
        %v5031 = vpop.f32.mrf.mxu0
        %5032 = vdwg.mxu0
        %v5033 = vadd.f32 %v4803, %v4955
        %v5034 = vadd.f32 %v4804, %v4960
        %v5035 = vadd.f32 %v4805, %v4965
        %v5036 = vadd.f32 %v4806, %v4970
        %v5037 = vadd.f32 %v4807, %v4975
        %v5038 = vadd.f32 %v4808, %v4980
        %v5039 = vadd.f32 %v4809, %v4985
        %v5040 = vadd.f32 %v4810, %v4990
        %v5041 = vadd.f32 %v4811, %v4995
        %v5042 = vadd.f32 %v4812, %v5000
        %v5043 = vadd.f32 %v4813, %v5005
        %v5044 = vadd.f32 %v4814, %v5010
        %v5045 = vadd.f32 %v4815, %v5015
        %v5046 = vadd.f32 %v4816, %v5020
        %v5047 = vadd.f32 %v4817, %v5025
        %v5048 = vadd.f32 %v4818, %v5030
        %v5049 = vld [vmem:[%s249 + $0x15] sm:$0xff]
        %v5050 = vld [vmem:[%s249 + $0x1d] sm:$0xff]
        %v5051 = vld [vmem:[%s249 + $0x25] sm:$0xff]
        %v5052 = vld [vmem:[%s249 + $0x2d] sm:$0xff]
        %v5053 = vld [vmem:[%s249 + $0x35] sm:$0xff]
        %v5054 = vld [vmem:[%s249 + $0x3d] sm:$0xff]
        %v5055 = vld [vmem:[%s249 + $0x45] sm:$0xff]
        %v5056 = vld [vmem:[%s249 + $0x4d] sm:$0xff]
        %v5057 = vld [vmem:[%s249 + $0x55] sm:$0xff]
        %v5058 = vld [vmem:[%s249 + $0x5d] sm:$0xff]
        %v5059 = vld [vmem:[%s249 + $0x65] sm:$0xff]
        %v5060 = vld [vmem:[%s249 + $0x6d] sm:$0xff]
        %v5061 = vld [vmem:[%s249 + $0x75] sm:$0xff]
        %v5062 = vld [vmem:[%s249 + $0x7d] sm:$0xff]
        %v5063 = vld [vmem:[%s249 + $0x85] sm:$0xff]
        %v5064 = vld [vmem:[%s249 + $0x8d] sm:$0x3f]
        %s5065 = scalar_lea.vmem %s1, 84
        %v5066 = vld [vmem:[%s5065] sm:$0xf]
        %v5068 = vsel %vm285, %v5049, 0
        %v5071 = vsel %vm285, %v5050, 0
        %v5074 = vsel %vm285, %v5051, 0
        %v5077 = vsel %vm285, %v5052, 0
        %v5080 = vsel %vm285, %v5053, 0
        %v5083 = vsel %vm285, %v5054, 0
        %v5086 = vsel %vm285, %v5055, 0
        %v5089 = vsel %vm285, %v5056, 0
        %v5092 = vsel %vm285, %v5057, 0
        %v5095 = vsel %vm285, %v5058, 0
        %v5098 = vsel %vm285, %v5059, 0
        %v5101 = vsel %vm285, %v5060, 0
        %v5104 = vsel %vm285, %v5061, 0
        %v5107 = vsel %vm285, %v5062, 0
        %v5110 = vsel %vm285, %v5063, 0
        %v5113 = vsel %vm285, %v5064, 0
        %v5116 = vsel %vm334, %v5066, 0
        %5118 = vmatprep.subr.mxu0 0.0
        %5119 = vmatpush1.msra.mxu0 0.0
        %5120 = vmatprep.subr.mxu0 0.0
        %5121 = vmatpush1.msra.mxu0 0.0
        %5122 = vmatprep.subr.mxu0 0.0
        %5123 = vmatpush1.msra.mxu0 0.0
        %5124 = vmatprep.subr.mxu0 0.0
        %5125 = vmatpush1.msra.mxu0 0.0
        %5126 = vmatprep.subr.mxu0 0.0
        %5127 = vmatpush1.msra.mxu0 0.0
        %5128 = vmatprep.subr.mxu0 0.0
        %5129 = vmatpush1.msra.mxu0 0.0
        %5130 = vmatprep.subr.mxu0 0.0
        %5131 = vmatpush1.msra.mxu0 0.0
        %5132 = vmatprep.subr.mxu0 0.0
        %5133 = vmatpush1.msra.mxu0 0.0
        %5134 = vmatprep.subr.mxu0 0.0
        %5135 = vmatpush1.msra.mxu0 0.0
        %5136 = vmatprep.subr.mxu0 0.0
        %5137 = vmatpush1.msra.mxu0 0.0
        %5138 = vmatprep.subr.mxu0 0.0
        %5139 = vmatpush1.msra.mxu0 0.0
        %5140 = vmatprep.subr.mxu0 0.0
        %5141 = vmatpush1.msra.mxu0 0.0
        %5142 = vmatprep.subr.mxu0 0.0
        %5143 = vmatpush1.msra.mxu0 0.0
        %5144 = vmatprep.subr.mxu0 0.0
        %5145 = vmatpush1.msra.mxu0 0.0
        %5146 = vmatprep.subr.mxu0 0.0
        %5147 = vmatpush1.msra.mxu0 0.0
        %5148 = vmatprep.subr.mxu0 0.0
        %5149 = vmatpush1.msra.mxu0 %v5116
        %5150 = vmatprep.subr.mxu0 0.0
        %5151 = vmatpush2.msra.mxu0 0.0
        %5152 = vmatprep.subr.mxu0 0.0
        %5153 = vmatpush2.msra.mxu0 0.0
        %5154 = vmatprep.subr.mxu0 0.0
        %5155 = vmatpush2.msra.mxu0 0.0
        %5156 = vmatprep.subr.mxu0 0.0
        %5157 = vmatpush2.msra.mxu0 0.0
        %5158 = vmatprep.subr.mxu0 0.0
        %5159 = vmatpush2.msra.mxu0 0.0
        %5160 = vmatprep.subr.mxu0 0.0
        %5161 = vmatpush2.msra.mxu0 0.0
        %5162 = vmatprep.subr.mxu0 0.0
        %5163 = vmatpush2.msra.mxu0 0.0
        %5164 = vmatprep.subr.mxu0 0.0
        %5165 = vmatpush2.msra.mxu0 0.0
        %5166 = vmatprep.subr.mxu0 0.0
        %5167 = vmatpush2.msra.mxu0 0.0
        %5168 = vmatprep.subr.mxu0 0.0
        %5169 = vmatpush2.msra.mxu0 0.0
        %5170 = vmatprep.subr.mxu0 0.0
        %5171 = vmatpush2.msra.mxu0 0.0
        %5172 = vmatprep.subr.mxu0 0.0
        %5173 = vmatpush2.msra.mxu0 0.0
        %5174 = vmatprep.subr.mxu0 0.0
        %5175 = vmatpush2.msra.mxu0 0.0
        %5176 = vmatprep.subr.mxu0 0.0
        %5177 = vmatpush2.msra.mxu0 0.0
        %5178 = vmatprep.subr.mxu0 0.0
        %5179 = vmatpush2.msra.mxu0 0.0
        %5180 = vmatprep.subr.mxu0 0.0
        %5181 = vmatpush2.msra.mxu0 0.0
        %5182 = vmatprep.mubr.f32.mxu0 0.0
        %5183 = vmatmul.mubr.f32.gmra.mxu0 %v5068
        %v5184 = vpop.f32.mrf.mxu0
        %v5185 = vadd.f32 0.0, %v5184
        %v5186 = vpop.f32.mrf.mxu0
        %5187 = vmatprep.mubr.f32.mxu0 0.0
        %5188 = vmatmul.mubr.f32.gmra.mxu0 %v5071
        %v5189 = vpop.f32.mrf.mxu0
        %v5190 = vadd.f32 0.0, %v5189
        %v5191 = vpop.f32.mrf.mxu0
        %5192 = vmatprep.mubr.f32.mxu0 0.0
        %5193 = vmatmul.mubr.f32.gmra.mxu0 %v5074
        %v5194 = vpop.f32.mrf.mxu0
        %v5195 = vadd.f32 0.0, %v5194
        %v5196 = vpop.f32.mrf.mxu0
        %5197 = vmatprep.mubr.f32.mxu0 0.0
        %5198 = vmatmul.mubr.f32.gmra.mxu0 %v5077
        %v5199 = vpop.f32.mrf.mxu0
        %v5200 = vadd.f32 0.0, %v5199
        %v5201 = vpop.f32.mrf.mxu0
        %5202 = vmatprep.mubr.f32.mxu0 0.0
        %5203 = vmatmul.mubr.f32.gmra.mxu0 %v5080
        %v5204 = vpop.f32.mrf.mxu0
        %v5205 = vadd.f32 0.0, %v5204
        %v5206 = vpop.f32.mrf.mxu0
        %5207 = vmatprep.mubr.f32.mxu0 0.0
        %5208 = vmatmul.mubr.f32.gmra.mxu0 %v5083
        %v5209 = vpop.f32.mrf.mxu0
        %v5210 = vadd.f32 0.0, %v5209
        %v5211 = vpop.f32.mrf.mxu0
        %5212 = vmatprep.mubr.f32.mxu0 0.0
        %5213 = vmatmul.mubr.f32.gmra.mxu0 %v5086
        %v5214 = vpop.f32.mrf.mxu0
        %v5215 = vadd.f32 0.0, %v5214
        %v5216 = vpop.f32.mrf.mxu0
        %5217 = vmatprep.mubr.f32.mxu0 0.0
        %5218 = vmatmul.mubr.f32.gmra.mxu0 %v5089
        %v5219 = vpop.f32.mrf.mxu0
        %v5220 = vadd.f32 0.0, %v5219
        %v5221 = vpop.f32.mrf.mxu0
        %5222 = vmatprep.mubr.f32.mxu0 0.0
        %5223 = vmatmul.mubr.f32.gmra.mxu0 %v5092
        %v5224 = vpop.f32.mrf.mxu0
        %v5225 = vadd.f32 0.0, %v5224
        %v5226 = vpop.f32.mrf.mxu0
        %5227 = vmatprep.mubr.f32.mxu0 0.0
        %5228 = vmatmul.mubr.f32.gmra.mxu0 %v5095
        %v5229 = vpop.f32.mrf.mxu0
        %v5230 = vadd.f32 0.0, %v5229
        %v5231 = vpop.f32.mrf.mxu0
        %5232 = vmatprep.mubr.f32.mxu0 0.0
        %5233 = vmatmul.mubr.f32.gmra.mxu0 %v5098
        %v5234 = vpop.f32.mrf.mxu0
        %v5235 = vadd.f32 0.0, %v5234
        %v5236 = vpop.f32.mrf.mxu0
        %5237 = vmatprep.mubr.f32.mxu0 0.0
        %5238 = vmatmul.mubr.f32.gmra.mxu0 %v5101
        %v5239 = vpop.f32.mrf.mxu0
        %v5240 = vadd.f32 0.0, %v5239
        %v5241 = vpop.f32.mrf.mxu0
        %5242 = vmatprep.mubr.f32.mxu0 0.0
        %5243 = vmatmul.mubr.f32.gmra.mxu0 %v5104
        %v5244 = vpop.f32.mrf.mxu0
        %v5245 = vadd.f32 0.0, %v5244
        %v5246 = vpop.f32.mrf.mxu0
        %5247 = vmatprep.mubr.f32.mxu0 0.0
        %5248 = vmatmul.mubr.f32.gmra.mxu0 %v5107
        %v5249 = vpop.f32.mrf.mxu0
        %v5250 = vadd.f32 0.0, %v5249
        %v5251 = vpop.f32.mrf.mxu0
        %5252 = vmatprep.mubr.f32.mxu0 0.0
        %5253 = vmatmul.mubr.f32.gmra.mxu0 %v5110
        %v5254 = vpop.f32.mrf.mxu0
        %v5255 = vadd.f32 0.0, %v5254
        %v5256 = vpop.f32.mrf.mxu0
        %5257 = vmatprep.mubr.f32.mxu0 0.0
        %5258 = vmatmul.mubr.f32.gmra.mxu0 %v5113
        %v5259 = vpop.f32.mrf.mxu0
        %v5260 = vadd.f32 0.0, %v5259
        %v5261 = vpop.f32.mrf.mxu0
        %5262 = vdwg.mxu0
        %v5263 = vadd.f32 %v5033, %v5185
        %v5264 = vadd.f32 %v5034, %v5190
        %v5265 = vadd.f32 %v5035, %v5195
        %v5266 = vadd.f32 %v5036, %v5200
        %v5267 = vadd.f32 %v5037, %v5205
        %v5268 = vadd.f32 %v5038, %v5210
        %v5269 = vadd.f32 %v5039, %v5215
        %v5270 = vadd.f32 %v5040, %v5220
        %v5271 = vadd.f32 %v5041, %v5225
        %v5272 = vadd.f32 %v5042, %v5230
        %v5273 = vadd.f32 %v5043, %v5235
        %v5274 = vadd.f32 %v5044, %v5240
        %v5275 = vadd.f32 %v5045, %v5245
        %v5276 = vadd.f32 %v5046, %v5250
        %v5277 = vadd.f32 %v5047, %v5255
        %v5278 = vadd.f32 %v5048, %v5260
        %v5279 = vld [vmem:[%s249 + $0x16] sm:$0xff]
        %v5280 = vld [vmem:[%s249 + $0x1e] sm:$0xff]
        %v5281 = vld [vmem:[%s249 + $0x26] sm:$0xff]
        %v5282 = vld [vmem:[%s249 + $0x2e] sm:$0xff]
        %v5283 = vld [vmem:[%s249 + $0x36] sm:$0xff]
        %v5284 = vld [vmem:[%s249 + $0x3e] sm:$0xff]
        %v5285 = vld [vmem:[%s249 + $0x46] sm:$0xff]
        %v5286 = vld [vmem:[%s249 + $0x4e] sm:$0xff]
        %v5287 = vld [vmem:[%s249 + $0x56] sm:$0xff]
        %v5288 = vld [vmem:[%s249 + $0x5e] sm:$0xff]
        %v5289 = vld [vmem:[%s249 + $0x66] sm:$0xff]
        %v5290 = vld [vmem:[%s249 + $0x6e] sm:$0xff]
        %v5291 = vld [vmem:[%s249 + $0x76] sm:$0xff]
        %v5292 = vld [vmem:[%s249 + $0x7e] sm:$0xff]
        %v5293 = vld [vmem:[%s249 + $0x86] sm:$0xff]
        %v5294 = vld [vmem:[%s249 + $0x8e] sm:$0x3f]
        %s5295 = scalar_lea.vmem %s1, 88
        %v5296 = vld [vmem:[%s5295] sm:$0xf]
        %v5298 = vsel %vm285, %v5279, 0
        %v5301 = vsel %vm285, %v5280, 0
        %v5304 = vsel %vm285, %v5281, 0
        %v5307 = vsel %vm285, %v5282, 0
        %v5310 = vsel %vm285, %v5283, 0
        %v5313 = vsel %vm285, %v5284, 0
        %v5316 = vsel %vm285, %v5285, 0
        %v5319 = vsel %vm285, %v5286, 0
        %v5322 = vsel %vm285, %v5287, 0
        %v5325 = vsel %vm285, %v5288, 0
        %v5328 = vsel %vm285, %v5289, 0
        %v5331 = vsel %vm285, %v5290, 0
        %v5334 = vsel %vm285, %v5291, 0
        %v5337 = vsel %vm285, %v5292, 0
        %v5340 = vsel %vm285, %v5293, 0
        %v5343 = vsel %vm285, %v5294, 0
        %v5346 = vsel %vm334, %v5296, 0
        %5348 = vmatprep.subr.mxu0 0.0
        %5349 = vmatpush1.msra.mxu0 0.0
        %5350 = vmatprep.subr.mxu0 0.0
        %5351 = vmatpush1.msra.mxu0 0.0
        %5352 = vmatprep.subr.mxu0 0.0
        %5353 = vmatpush1.msra.mxu0 0.0
        %5354 = vmatprep.subr.mxu0 0.0
        %5355 = vmatpush1.msra.mxu0 0.0
        %5356 = vmatprep.subr.mxu0 0.0
        %5357 = vmatpush1.msra.mxu0 0.0
        %5358 = vmatprep.subr.mxu0 0.0
        %5359 = vmatpush1.msra.mxu0 0.0
        %5360 = vmatprep.subr.mxu0 0.0
        %5361 = vmatpush1.msra.mxu0 0.0
        %5362 = vmatprep.subr.mxu0 0.0
        %5363 = vmatpush1.msra.mxu0 0.0
        %5364 = vmatprep.subr.mxu0 0.0
        %5365 = vmatpush1.msra.mxu0 0.0
        %5366 = vmatprep.subr.mxu0 0.0
        %5367 = vmatpush1.msra.mxu0 0.0
        %5368 = vmatprep.subr.mxu0 0.0
        %5369 = vmatpush1.msra.mxu0 0.0
        %5370 = vmatprep.subr.mxu0 0.0
        %5371 = vmatpush1.msra.mxu0 0.0
        %5372 = vmatprep.subr.mxu0 0.0
        %5373 = vmatpush1.msra.mxu0 0.0
        %5374 = vmatprep.subr.mxu0 0.0
        %5375 = vmatpush1.msra.mxu0 0.0
        %5376 = vmatprep.subr.mxu0 0.0
        %5377 = vmatpush1.msra.mxu0 0.0
        %5378 = vmatprep.subr.mxu0 0.0
        %5379 = vmatpush1.msra.mxu0 %v5346
        %5380 = vmatprep.subr.mxu0 0.0
        %5381 = vmatpush2.msra.mxu0 0.0
        %5382 = vmatprep.subr.mxu0 0.0
        %5383 = vmatpush2.msra.mxu0 0.0
        %5384 = vmatprep.subr.mxu0 0.0
        %5385 = vmatpush2.msra.mxu0 0.0
        %5386 = vmatprep.subr.mxu0 0.0
        %5387 = vmatpush2.msra.mxu0 0.0
        %5388 = vmatprep.subr.mxu0 0.0
        %5389 = vmatpush2.msra.mxu0 0.0
        %5390 = vmatprep.subr.mxu0 0.0
        %5391 = vmatpush2.msra.mxu0 0.0
        %5392 = vmatprep.subr.mxu0 0.0
        %5393 = vmatpush2.msra.mxu0 0.0
        %5394 = vmatprep.subr.mxu0 0.0
        %5395 = vmatpush2.msra.mxu0 0.0
        %5396 = vmatprep.subr.mxu0 0.0
        %5397 = vmatpush2.msra.mxu0 0.0
        %5398 = vmatprep.subr.mxu0 0.0
        %5399 = vmatpush2.msra.mxu0 0.0
        %5400 = vmatprep.subr.mxu0 0.0
        %5401 = vmatpush2.msra.mxu0 0.0
        %5402 = vmatprep.subr.mxu0 0.0
        %5403 = vmatpush2.msra.mxu0 0.0
        %5404 = vmatprep.subr.mxu0 0.0
        %5405 = vmatpush2.msra.mxu0 0.0
        %5406 = vmatprep.subr.mxu0 0.0
        %5407 = vmatpush2.msra.mxu0 0.0
        %5408 = vmatprep.subr.mxu0 0.0
        %5409 = vmatpush2.msra.mxu0 0.0
        %5410 = vmatprep.subr.mxu0 0.0
        %5411 = vmatpush2.msra.mxu0 0.0
        %5412 = vmatprep.mubr.f32.mxu0 0.0
        %5413 = vmatmul.mubr.f32.gmra.mxu0 %v5298
        %v5414 = vpop.f32.mrf.mxu0
        %v5415 = vadd.f32 0.0, %v5414
        %v5416 = vpop.f32.mrf.mxu0
        %5417 = vmatprep.mubr.f32.mxu0 0.0
        %5418 = vmatmul.mubr.f32.gmra.mxu0 %v5301
        %v5419 = vpop.f32.mrf.mxu0
        %v5420 = vadd.f32 0.0, %v5419
        %v5421 = vpop.f32.mrf.mxu0
        %5422 = vmatprep.mubr.f32.mxu0 0.0
        %5423 = vmatmul.mubr.f32.gmra.mxu0 %v5304
        %v5424 = vpop.f32.mrf.mxu0
        %v5425 = vadd.f32 0.0, %v5424
        %v5426 = vpop.f32.mrf.mxu0
        %5427 = vmatprep.mubr.f32.mxu0 0.0
        %5428 = vmatmul.mubr.f32.gmra.mxu0 %v5307
        %v5429 = vpop.f32.mrf.mxu0
        %v5430 = vadd.f32 0.0, %v5429
        %v5431 = vpop.f32.mrf.mxu0
        %5432 = vmatprep.mubr.f32.mxu0 0.0
        %5433 = vmatmul.mubr.f32.gmra.mxu0 %v5310
        %v5434 = vpop.f32.mrf.mxu0
        %v5435 = vadd.f32 0.0, %v5434
        %v5436 = vpop.f32.mrf.mxu0
        %5437 = vmatprep.mubr.f32.mxu0 0.0
        %5438 = vmatmul.mubr.f32.gmra.mxu0 %v5313
        %v5439 = vpop.f32.mrf.mxu0
        %v5440 = vadd.f32 0.0, %v5439
        %v5441 = vpop.f32.mrf.mxu0
        %5442 = vmatprep.mubr.f32.mxu0 0.0
        %5443 = vmatmul.mubr.f32.gmra.mxu0 %v5316
        %v5444 = vpop.f32.mrf.mxu0
        %v5445 = vadd.f32 0.0, %v5444
        %v5446 = vpop.f32.mrf.mxu0
        %5447 = vmatprep.mubr.f32.mxu0 0.0
        %5448 = vmatmul.mubr.f32.gmra.mxu0 %v5319
        %v5449 = vpop.f32.mrf.mxu0
        %v5450 = vadd.f32 0.0, %v5449
        %v5451 = vpop.f32.mrf.mxu0
        %5452 = vmatprep.mubr.f32.mxu0 0.0
        %5453 = vmatmul.mubr.f32.gmra.mxu0 %v5322
        %v5454 = vpop.f32.mrf.mxu0
        %v5455 = vadd.f32 0.0, %v5454
        %v5456 = vpop.f32.mrf.mxu0
        %5457 = vmatprep.mubr.f32.mxu0 0.0
        %5458 = vmatmul.mubr.f32.gmra.mxu0 %v5325
        %v5459 = vpop.f32.mrf.mxu0
        %v5460 = vadd.f32 0.0, %v5459
        %v5461 = vpop.f32.mrf.mxu0
        %5462 = vmatprep.mubr.f32.mxu0 0.0
        %5463 = vmatmul.mubr.f32.gmra.mxu0 %v5328
        %v5464 = vpop.f32.mrf.mxu0
        %v5465 = vadd.f32 0.0, %v5464
        %v5466 = vpop.f32.mrf.mxu0
        %5467 = vmatprep.mubr.f32.mxu0 0.0
        %5468 = vmatmul.mubr.f32.gmra.mxu0 %v5331
        %v5469 = vpop.f32.mrf.mxu0
        %v5470 = vadd.f32 0.0, %v5469
        %v5471 = vpop.f32.mrf.mxu0
        %5472 = vmatprep.mubr.f32.mxu0 0.0
        %5473 = vmatmul.mubr.f32.gmra.mxu0 %v5334
        %v5474 = vpop.f32.mrf.mxu0
        %v5475 = vadd.f32 0.0, %v5474
        %v5476 = vpop.f32.mrf.mxu0
        %5477 = vmatprep.mubr.f32.mxu0 0.0
        %5478 = vmatmul.mubr.f32.gmra.mxu0 %v5337
        %v5479 = vpop.f32.mrf.mxu0
        %v5480 = vadd.f32 0.0, %v5479
        %v5481 = vpop.f32.mrf.mxu0
        %5482 = vmatprep.mubr.f32.mxu0 0.0
        %5483 = vmatmul.mubr.f32.gmra.mxu0 %v5340
        %v5484 = vpop.f32.mrf.mxu0
        %v5485 = vadd.f32 0.0, %v5484
        %v5486 = vpop.f32.mrf.mxu0
        %5487 = vmatprep.mubr.f32.mxu0 0.0
        %5488 = vmatmul.mubr.f32.gmra.mxu0 %v5343
        %v5489 = vpop.f32.mrf.mxu0
        %v5490 = vadd.f32 0.0, %v5489
        %v5491 = vpop.f32.mrf.mxu0
        %5492 = vdwg.mxu0
        %v5493 = vadd.f32 %v5263, %v5415
        %v5494 = vadd.f32 %v5264, %v5420
        %v5495 = vadd.f32 %v5265, %v5425
        %v5496 = vadd.f32 %v5266, %v5430
        %v5497 = vadd.f32 %v5267, %v5435
        %v5498 = vadd.f32 %v5268, %v5440
        %v5499 = vadd.f32 %v5269, %v5445
        %v5500 = vadd.f32 %v5270, %v5450
        %v5501 = vadd.f32 %v5271, %v5455
        %v5502 = vadd.f32 %v5272, %v5460
        %v5503 = vadd.f32 %v5273, %v5465
        %v5504 = vadd.f32 %v5274, %v5470
        %v5505 = vadd.f32 %v5275, %v5475
        %v5506 = vadd.f32 %v5276, %v5480
        %v5507 = vadd.f32 %v5277, %v5485
        %v5508 = vadd.f32 %v5278, %v5490
        %v5509 = vld [vmem:[%s249 + $0x17] sm:$0xff]
        %v5510 = vld [vmem:[%s249 + $0x1f] sm:$0xff]
        %v5511 = vld [vmem:[%s249 + $0x27] sm:$0xff]
        %v5512 = vld [vmem:[%s249 + $0x2f] sm:$0xff]
        %v5513 = vld [vmem:[%s249 + $0x37] sm:$0xff]
        %v5514 = vld [vmem:[%s249 + $0x3f] sm:$0xff]
        %v5515 = vld [vmem:[%s249 + $0x47] sm:$0xff]
        %v5516 = vld [vmem:[%s249 + $0x4f] sm:$0xff]
        %v5517 = vld [vmem:[%s249 + $0x57] sm:$0xff]
        %v5518 = vld [vmem:[%s249 + $0x5f] sm:$0xff]
        %v5519 = vld [vmem:[%s249 + $0x67] sm:$0xff]
        %v5520 = vld [vmem:[%s249 + $0x6f] sm:$0xff]
        %v5521 = vld [vmem:[%s249 + $0x77] sm:$0xff]
        %v5522 = vld [vmem:[%s249 + $0x7f] sm:$0xff]
        %v5523 = vld [vmem:[%s249 + $0x87] sm:$0xff]
        %v5524 = vld [vmem:[%s249 + $0x8f] sm:$0x3f]
        %s5525 = scalar_lea.vmem %s1, 92
        %v5526 = vld [vmem:[%s5525] sm:$0xf]
        %v5528 = vsel %vm285, %v5509, 0
        %v5531 = vsel %vm285, %v5510, 0
        %v5534 = vsel %vm285, %v5511, 0
        %v5537 = vsel %vm285, %v5512, 0
        %v5540 = vsel %vm285, %v5513, 0
        %v5543 = vsel %vm285, %v5514, 0
        %v5546 = vsel %vm285, %v5515, 0
        %v5549 = vsel %vm285, %v5516, 0
        %v5552 = vsel %vm285, %v5517, 0
        %v5555 = vsel %vm285, %v5518, 0
        %v5558 = vsel %vm285, %v5519, 0
        %v5561 = vsel %vm285, %v5520, 0
        %v5564 = vsel %vm285, %v5521, 0
        %v5567 = vsel %vm285, %v5522, 0
        %v5570 = vsel %vm285, %v5523, 0
        %v5573 = vsel %vm285, %v5524, 0
        %v5576 = vsel %vm334, %v5526, 0
        %5578 = vmatprep.subr.mxu0 0.0
        %5579 = vmatpush1.msra.mxu0 0.0
        %5580 = vmatprep.subr.mxu0 0.0
        %5581 = vmatpush1.msra.mxu0 0.0
        %5582 = vmatprep.subr.mxu0 0.0
        %5583 = vmatpush1.msra.mxu0 0.0
        %5584 = vmatprep.subr.mxu0 0.0
        %5585 = vmatpush1.msra.mxu0 0.0
        %5586 = vmatprep.subr.mxu0 0.0
        %5587 = vmatpush1.msra.mxu0 0.0
        %5588 = vmatprep.subr.mxu0 0.0
        %5589 = vmatpush1.msra.mxu0 0.0
        %5590 = vmatprep.subr.mxu0 0.0
        %5591 = vmatpush1.msra.mxu0 0.0
        %5592 = vmatprep.subr.mxu0 0.0
        %5593 = vmatpush1.msra.mxu0 0.0
        %5594 = vmatprep.subr.mxu0 0.0
        %5595 = vmatpush1.msra.mxu0 0.0
        %5596 = vmatprep.subr.mxu0 0.0
        %5597 = vmatpush1.msra.mxu0 0.0
        %5598 = vmatprep.subr.mxu0 0.0
        %5599 = vmatpush1.msra.mxu0 0.0
        %5600 = vmatprep.subr.mxu0 0.0
        %5601 = vmatpush1.msra.mxu0 0.0
        %5602 = vmatprep.subr.mxu0 0.0
        %5603 = vmatpush1.msra.mxu0 0.0
        %5604 = vmatprep.subr.mxu0 0.0
        %5605 = vmatpush1.msra.mxu0 0.0
        %5606 = vmatprep.subr.mxu0 0.0
        %5607 = vmatpush1.msra.mxu0 0.0
        %5608 = vmatprep.subr.mxu0 0.0
        %5609 = vmatpush1.msra.mxu0 %v5576
        %5610 = vmatprep.subr.mxu0 0.0
        %5611 = vmatpush2.msra.mxu0 0.0
        %5612 = vmatprep.subr.mxu0 0.0
        %5613 = vmatpush2.msra.mxu0 0.0
        %5614 = vmatprep.subr.mxu0 0.0
        %5615 = vmatpush2.msra.mxu0 0.0
        %5616 = vmatprep.subr.mxu0 0.0
        %5617 = vmatpush2.msra.mxu0 0.0
        %5618 = vmatprep.subr.mxu0 0.0
        %5619 = vmatpush2.msra.mxu0 0.0
        %5620 = vmatprep.subr.mxu0 0.0
        %5621 = vmatpush2.msra.mxu0 0.0
        %5622 = vmatprep.subr.mxu0 0.0
        %5623 = vmatpush2.msra.mxu0 0.0
        %5624 = vmatprep.subr.mxu0 0.0
        %5625 = vmatpush2.msra.mxu0 0.0
        %5626 = vmatprep.subr.mxu0 0.0
        %5627 = vmatpush2.msra.mxu0 0.0
        %5628 = vmatprep.subr.mxu0 0.0
        %5629 = vmatpush2.msra.mxu0 0.0
        %5630 = vmatprep.subr.mxu0 0.0
        %5631 = vmatpush2.msra.mxu0 0.0
        %5632 = vmatprep.subr.mxu0 0.0
        %5633 = vmatpush2.msra.mxu0 0.0
        %5634 = vmatprep.subr.mxu0 0.0
        %5635 = vmatpush2.msra.mxu0 0.0
        %5636 = vmatprep.subr.mxu0 0.0
        %5637 = vmatpush2.msra.mxu0 0.0
        %5638 = vmatprep.subr.mxu0 0.0
        %5639 = vmatpush2.msra.mxu0 0.0
        %5640 = vmatprep.subr.mxu0 0.0
        %5641 = vmatpush2.msra.mxu0 0.0
        %5642 = vmatprep.mubr.f32.mxu0 0.0
        %5643 = vmatmul.mubr.f32.gmra.mxu0 %v5528
        %v5644 = vpop.f32.mrf.mxu0
        %v5645 = vadd.f32 0.0, %v5644
        %v5646 = vpop.f32.mrf.mxu0
        %5647 = vmatprep.mubr.f32.mxu0 0.0
        %5648 = vmatmul.mubr.f32.gmra.mxu0 %v5531
        %v5649 = vpop.f32.mrf.mxu0
        %v5650 = vadd.f32 0.0, %v5649
        %v5651 = vpop.f32.mrf.mxu0
        %5652 = vmatprep.mubr.f32.mxu0 0.0
        %5653 = vmatmul.mubr.f32.gmra.mxu0 %v5534
        %v5654 = vpop.f32.mrf.mxu0
        %v5655 = vadd.f32 0.0, %v5654
        %v5656 = vpop.f32.mrf.mxu0
        %5657 = vmatprep.mubr.f32.mxu0 0.0
        %5658 = vmatmul.mubr.f32.gmra.mxu0 %v5537
        %v5659 = vpop.f32.mrf.mxu0
        %v5660 = vadd.f32 0.0, %v5659
        %v5661 = vpop.f32.mrf.mxu0
        %5662 = vmatprep.mubr.f32.mxu0 0.0
        %5663 = vmatmul.mubr.f32.gmra.mxu0 %v5540
        %v5664 = vpop.f32.mrf.mxu0
        %v5665 = vadd.f32 0.0, %v5664
        %v5666 = vpop.f32.mrf.mxu0
        %5667 = vmatprep.mubr.f32.mxu0 0.0
        %5668 = vmatmul.mubr.f32.gmra.mxu0 %v5543
        %v5669 = vpop.f32.mrf.mxu0
        %v5670 = vadd.f32 0.0, %v5669
        %v5671 = vpop.f32.mrf.mxu0
        %5672 = vmatprep.mubr.f32.mxu0 0.0
        %5673 = vmatmul.mubr.f32.gmra.mxu0 %v5546
        %v5674 = vpop.f32.mrf.mxu0
        %v5675 = vadd.f32 0.0, %v5674
        %v5676 = vpop.f32.mrf.mxu0
        %5677 = vmatprep.mubr.f32.mxu0 0.0
        %5678 = vmatmul.mubr.f32.gmra.mxu0 %v5549
        %v5679 = vpop.f32.mrf.mxu0
        %v5680 = vadd.f32 0.0, %v5679
        %v5681 = vpop.f32.mrf.mxu0
        %5682 = vmatprep.mubr.f32.mxu0 0.0
        %5683 = vmatmul.mubr.f32.gmra.mxu0 %v5552
        %v5684 = vpop.f32.mrf.mxu0
        %v5685 = vadd.f32 0.0, %v5684
        %v5686 = vpop.f32.mrf.mxu0
        %5687 = vmatprep.mubr.f32.mxu0 0.0
        %5688 = vmatmul.mubr.f32.gmra.mxu0 %v5555
        %v5689 = vpop.f32.mrf.mxu0
        %v5690 = vadd.f32 0.0, %v5689
        %v5691 = vpop.f32.mrf.mxu0
        %5692 = vmatprep.mubr.f32.mxu0 0.0
        %5693 = vmatmul.mubr.f32.gmra.mxu0 %v5558
        %v5694 = vpop.f32.mrf.mxu0
        %v5695 = vadd.f32 0.0, %v5694
        %v5696 = vpop.f32.mrf.mxu0
        %5697 = vmatprep.mubr.f32.mxu0 0.0
        %5698 = vmatmul.mubr.f32.gmra.mxu0 %v5561
        %v5699 = vpop.f32.mrf.mxu0
        %v5700 = vadd.f32 0.0, %v5699
        %v5701 = vpop.f32.mrf.mxu0
        %5702 = vmatprep.mubr.f32.mxu0 0.0
        %5703 = vmatmul.mubr.f32.gmra.mxu0 %v5564
        %v5704 = vpop.f32.mrf.mxu0
        %v5705 = vadd.f32 0.0, %v5704
        %v5706 = vpop.f32.mrf.mxu0
        %5707 = vmatprep.mubr.f32.mxu0 0.0
        %5708 = vmatmul.mubr.f32.gmra.mxu0 %v5567
        %v5709 = vpop.f32.mrf.mxu0
        %v5710 = vadd.f32 0.0, %v5709
        %v5711 = vpop.f32.mrf.mxu0
        %5712 = vmatprep.mubr.f32.mxu0 0.0
        %5713 = vmatmul.mubr.f32.gmra.mxu0 %v5570
        %v5714 = vpop.f32.mrf.mxu0
        %v5715 = vadd.f32 0.0, %v5714
        %v5716 = vpop.f32.mrf.mxu0
        %5717 = vmatprep.mubr.f32.mxu0 0.0
        %5718 = vmatmul.mubr.f32.gmra.mxu0 %v5573
        %v5719 = vpop.f32.mrf.mxu0
        %v5720 = vadd.f32 0.0, %v5719
        %v5721 = vpop.f32.mrf.mxu0
        %5722 = vdwg.mxu0
        %v5723 = vadd.f32 %v5493, %v5645
        %v5724 = vadd.f32 %v5494, %v5650
        %v5725 = vadd.f32 %v5495, %v5655
        %v5726 = vadd.f32 %v5496, %v5660
        %v5727 = vadd.f32 %v5497, %v5665
        %v5728 = vadd.f32 %v5498, %v5670
        %v5729 = vadd.f32 %v5499, %v5675
        %v5730 = vadd.f32 %v5500, %v5680
        %v5731 = vadd.f32 %v5501, %v5685
        %v5732 = vadd.f32 %v5502, %v5690
        %v5733 = vadd.f32 %v5503, %v5695
        %v5734 = vadd.f32 %v5504, %v5700
        %v5735 = vadd.f32 %v5505, %v5705
        %v5736 = vadd.f32 %v5506, %v5710
        %v5737 = vadd.f32 %v5507, %v5715
        %v5738 = vadd.f32 %v5508, %v5720
        %v5739 = vld [vmem:[%s249 + $0x18] sm:$0xff]
        %v5740 = vld [vmem:[%s249 + $0x20] sm:$0xff]
        %v5741 = vld [vmem:[%s249 + $0x28] sm:$0xff]
        %v5742 = vld [vmem:[%s249 + $0x30] sm:$0xff]
        %v5743 = vld [vmem:[%s249 + $0x38] sm:$0xff]
        %v5744 = vld [vmem:[%s249 + $0x40] sm:$0xff]
        %v5745 = vld [vmem:[%s249 + $0x48] sm:$0xff]
        %v5746 = vld [vmem:[%s249 + $0x50] sm:$0xff]
        %v5747 = vld [vmem:[%s249 + $0x58] sm:$0xff]
        %v5748 = vld [vmem:[%s249 + $0x60] sm:$0xff]
        %v5749 = vld [vmem:[%s249 + $0x68] sm:$0xff]
        %v5750 = vld [vmem:[%s249 + $0x70] sm:$0xff]
        %v5751 = vld [vmem:[%s249 + $0x78] sm:$0xff]
        %v5752 = vld [vmem:[%s249 + $0x80] sm:$0xff]
        %v5753 = vld [vmem:[%s249 + $0x88] sm:$0xff]
        %v5754 = vld [vmem:[%s249 + $0x90] sm:$0x3f]
        %s5755 = scalar_lea.vmem %s1, 96
        %v5756 = vld [vmem:[%s5755] sm:$0xf]
        %v5758 = vsel %vm285, %v5739, 0
        %v5761 = vsel %vm285, %v5740, 0
        %v5764 = vsel %vm285, %v5741, 0
        %v5767 = vsel %vm285, %v5742, 0
        %v5770 = vsel %vm285, %v5743, 0
        %v5773 = vsel %vm285, %v5744, 0
        %v5776 = vsel %vm285, %v5745, 0
        %v5779 = vsel %vm285, %v5746, 0
        %v5782 = vsel %vm285, %v5747, 0
        %v5785 = vsel %vm285, %v5748, 0
        %v5788 = vsel %vm285, %v5749, 0
        %v5791 = vsel %vm285, %v5750, 0
        %v5794 = vsel %vm285, %v5751, 0
        %v5797 = vsel %vm285, %v5752, 0
        %v5800 = vsel %vm285, %v5753, 0
        %v5803 = vsel %vm285, %v5754, 0
        %v5806 = vsel %vm334, %v5756, 0
        %5808 = vmatprep.subr.mxu0 0.0
        %5809 = vmatpush1.msra.mxu0 0.0
        %5810 = vmatprep.subr.mxu0 0.0
        %5811 = vmatpush1.msra.mxu0 0.0
        %5812 = vmatprep.subr.mxu0 0.0
        %5813 = vmatpush1.msra.mxu0 0.0
        %5814 = vmatprep.subr.mxu0 0.0
        %5815 = vmatpush1.msra.mxu0 0.0
        %5816 = vmatprep.subr.mxu0 0.0
        %5817 = vmatpush1.msra.mxu0 0.0
        %5818 = vmatprep.subr.mxu0 0.0
        %5819 = vmatpush1.msra.mxu0 0.0
        %5820 = vmatprep.subr.mxu0 0.0
        %5821 = vmatpush1.msra.mxu0 0.0
        %5822 = vmatprep.subr.mxu0 0.0
        %5823 = vmatpush1.msra.mxu0 0.0
        %5824 = vmatprep.subr.mxu0 0.0
        %5825 = vmatpush1.msra.mxu0 0.0
        %5826 = vmatprep.subr.mxu0 0.0
        %5827 = vmatpush1.msra.mxu0 0.0
        %5828 = vmatprep.subr.mxu0 0.0
        %5829 = vmatpush1.msra.mxu0 0.0
        %5830 = vmatprep.subr.mxu0 0.0
        %5831 = vmatpush1.msra.mxu0 0.0
        %5832 = vmatprep.subr.mxu0 0.0
        %5833 = vmatpush1.msra.mxu0 0.0
        %5834 = vmatprep.subr.mxu0 0.0
        %5835 = vmatpush1.msra.mxu0 0.0
        %5836 = vmatprep.subr.mxu0 0.0
        %5837 = vmatpush1.msra.mxu0 0.0
        %5838 = vmatprep.subr.mxu0 0.0
        %5839 = vmatpush1.msra.mxu0 %v5806
        %5840 = vmatprep.subr.mxu0 0.0
        %5841 = vmatpush2.msra.mxu0 0.0
        %5842 = vmatprep.subr.mxu0 0.0
        %5843 = vmatpush2.msra.mxu0 0.0
        %5844 = vmatprep.subr.mxu0 0.0
        %5845 = vmatpush2.msra.mxu0 0.0
        %5846 = vmatprep.subr.mxu0 0.0
        %5847 = vmatpush2.msra.mxu0 0.0
        %5848 = vmatprep.subr.mxu0 0.0
        %5849 = vmatpush2.msra.mxu0 0.0
        %5850 = vmatprep.subr.mxu0 0.0
        %5851 = vmatpush2.msra.mxu0 0.0
        %5852 = vmatprep.subr.mxu0 0.0
        %5853 = vmatpush2.msra.mxu0 0.0
        %5854 = vmatprep.subr.mxu0 0.0
        %5855 = vmatpush2.msra.mxu0 0.0
        %5856 = vmatprep.subr.mxu0 0.0
        %5857 = vmatpush2.msra.mxu0 0.0
        %5858 = vmatprep.subr.mxu0 0.0
        %5859 = vmatpush2.msra.mxu0 0.0
        %5860 = vmatprep.subr.mxu0 0.0
        %5861 = vmatpush2.msra.mxu0 0.0
        %5862 = vmatprep.subr.mxu0 0.0
        %5863 = vmatpush2.msra.mxu0 0.0
        %5864 = vmatprep.subr.mxu0 0.0
        %5865 = vmatpush2.msra.mxu0 0.0
        %5866 = vmatprep.subr.mxu0 0.0
        %5867 = vmatpush2.msra.mxu0 0.0
        %5868 = vmatprep.subr.mxu0 0.0
        %5869 = vmatpush2.msra.mxu0 0.0
        %5870 = vmatprep.subr.mxu0 0.0
        %5871 = vmatpush2.msra.mxu0 0.0
        %5872 = vmatprep.mubr.f32.mxu0 0.0
        %5873 = vmatmul.mubr.f32.gmra.mxu0 %v5758
        %v5874 = vpop.f32.mrf.mxu0
        %v5875 = vadd.f32 0.0, %v5874
        %v5876 = vpop.f32.mrf.mxu0
        %5877 = vmatprep.mubr.f32.mxu0 0.0
        %5878 = vmatmul.mubr.f32.gmra.mxu0 %v5761
        %v5879 = vpop.f32.mrf.mxu0
        %v5880 = vadd.f32 0.0, %v5879
        %v5881 = vpop.f32.mrf.mxu0
        %5882 = vmatprep.mubr.f32.mxu0 0.0
        %5883 = vmatmul.mubr.f32.gmra.mxu0 %v5764
        %v5884 = vpop.f32.mrf.mxu0
        %v5885 = vadd.f32 0.0, %v5884
        %v5886 = vpop.f32.mrf.mxu0
        %5887 = vmatprep.mubr.f32.mxu0 0.0
        %5888 = vmatmul.mubr.f32.gmra.mxu0 %v5767
        %v5889 = vpop.f32.mrf.mxu0
        %v5890 = vadd.f32 0.0, %v5889
        %v5891 = vpop.f32.mrf.mxu0
        %5892 = vmatprep.mubr.f32.mxu0 0.0
        %5893 = vmatmul.mubr.f32.gmra.mxu0 %v5770
        %v5894 = vpop.f32.mrf.mxu0
        %v5895 = vadd.f32 0.0, %v5894
        %v5896 = vpop.f32.mrf.mxu0
        %5897 = vmatprep.mubr.f32.mxu0 0.0
        %5898 = vmatmul.mubr.f32.gmra.mxu0 %v5773
        %v5899 = vpop.f32.mrf.mxu0
        %v5900 = vadd.f32 0.0, %v5899
        %v5901 = vpop.f32.mrf.mxu0
        %5902 = vmatprep.mubr.f32.mxu0 0.0
        %5903 = vmatmul.mubr.f32.gmra.mxu0 %v5776
        %v5904 = vpop.f32.mrf.mxu0
        %v5905 = vadd.f32 0.0, %v5904
        %v5906 = vpop.f32.mrf.mxu0
        %5907 = vmatprep.mubr.f32.mxu0 0.0
        %5908 = vmatmul.mubr.f32.gmra.mxu0 %v5779
        %v5909 = vpop.f32.mrf.mxu0
        %v5910 = vadd.f32 0.0, %v5909
        %v5911 = vpop.f32.mrf.mxu0
        %5912 = vmatprep.mubr.f32.mxu0 0.0
        %5913 = vmatmul.mubr.f32.gmra.mxu0 %v5782
        %v5914 = vpop.f32.mrf.mxu0
        %v5915 = vadd.f32 0.0, %v5914
        %v5916 = vpop.f32.mrf.mxu0
        %5917 = vmatprep.mubr.f32.mxu0 0.0
        %5918 = vmatmul.mubr.f32.gmra.mxu0 %v5785
        %v5919 = vpop.f32.mrf.mxu0
        %v5920 = vadd.f32 0.0, %v5919
        %v5921 = vpop.f32.mrf.mxu0
        %5922 = vmatprep.mubr.f32.mxu0 0.0
        %5923 = vmatmul.mubr.f32.gmra.mxu0 %v5788
        %v5924 = vpop.f32.mrf.mxu0
        %v5925 = vadd.f32 0.0, %v5924
        %v5926 = vpop.f32.mrf.mxu0
        %5927 = vmatprep.mubr.f32.mxu0 0.0
        %5928 = vmatmul.mubr.f32.gmra.mxu0 %v5791
        %v5929 = vpop.f32.mrf.mxu0
        %v5930 = vadd.f32 0.0, %v5929
        %v5931 = vpop.f32.mrf.mxu0
        %5932 = vmatprep.mubr.f32.mxu0 0.0
        %5933 = vmatmul.mubr.f32.gmra.mxu0 %v5794
        %v5934 = vpop.f32.mrf.mxu0
        %v5935 = vadd.f32 0.0, %v5934
        %v5936 = vpop.f32.mrf.mxu0
        %5937 = vmatprep.mubr.f32.mxu0 0.0
        %5938 = vmatmul.mubr.f32.gmra.mxu0 %v5797
        %v5939 = vpop.f32.mrf.mxu0
        %v5940 = vadd.f32 0.0, %v5939
        %v5941 = vpop.f32.mrf.mxu0
        %5942 = vmatprep.mubr.f32.mxu0 0.0
        %5943 = vmatmul.mubr.f32.gmra.mxu0 %v5800
        %v5944 = vpop.f32.mrf.mxu0
        %v5945 = vadd.f32 0.0, %v5944
        %v5946 = vpop.f32.mrf.mxu0
        %5947 = vmatprep.mubr.f32.mxu0 0.0
        %5948 = vmatmul.mubr.f32.gmra.mxu0 %v5803
        %v5949 = vpop.f32.mrf.mxu0
        %v5950 = vadd.f32 0.0, %v5949
        %v5951 = vpop.f32.mrf.mxu0
        %5952 = vdwg.mxu0
        %v5953 = vadd.f32 %v5723, %v5875
        %v5954 = vadd.f32 %v5724, %v5880
        %v5955 = vadd.f32 %v5725, %v5885
        %v5956 = vadd.f32 %v5726, %v5890
        %v5957 = vadd.f32 %v5727, %v5895
        %v5958 = vadd.f32 %v5728, %v5900
        %v5959 = vadd.f32 %v5729, %v5905
        %v5960 = vadd.f32 %v5730, %v5910
        %v5961 = vadd.f32 %v5731, %v5915
        %v5962 = vadd.f32 %v5732, %v5920
        %v5963 = vadd.f32 %v5733, %v5925
        %v5964 = vadd.f32 %v5734, %v5930
        %v5965 = vadd.f32 %v5735, %v5935
        %v5966 = vadd.f32 %v5736, %v5940
        %v5967 = vadd.f32 %v5737, %v5945
        %v5968 = vadd.f32 %v5738, %v5950
        %v5969 = vld [vmem:[%s2] sm:$0x1]
        %v5971 = vlaneseq
        %v5972 = vshrl.u32 %v5971, 7
        %v5973 = vsub.s32 0, %v5972
        %v5974 = vrot.slane %v5969, %v5973
        %v5976 = vadd.f32 %v5953, %v5974
        %v5977 = vadd.f32 %v5954, %v5974
        %v5978 = vadd.f32 %v5955, %v5974
        %v5979 = vadd.f32 %v5956, %v5974
        %v5980 = vadd.f32 %v5957, %v5974
        %v5981 = vadd.f32 %v5958, %v5974
        %v5982 = vadd.f32 %v5959, %v5974
        %v5983 = vadd.f32 %v5960, %v5974
        %v5984 = vadd.f32 %v5961, %v5974
        %v5985 = vadd.f32 %v5962, %v5974
        %v5986 = vadd.f32 %v5963, %v5974
        %v5987 = vadd.f32 %v5964, %v5974
        %v5988 = vadd.f32 %v5965, %v5974
        %v5989 = vadd.f32 %v5966, %v5974
        %v5990 = vadd.f32 %v5967, %v5974
        %v5991 = vadd.f32 %v5968, %v5974
        %v5992 = vld [vmem:[%s3] sm:$0x1]
        %v5994 = vlaneseq
        %v5995 = vshrl.u32 %v5994, 7
        %v5996 = vsub.s32 0, %v5995
        %v5997 = vrot.slane %v5992, %v5996
        %v5999 = vmul.f32 %v5976, %v5997
        %v6000 = vmul.f32 %v5977, %v5997
        %v6001 = vmul.f32 %v5978, %v5997
        %v6002 = vmul.f32 %v5979, %v5997
        %v6003 = vmul.f32 %v5980, %v5997
        %v6004 = vmul.f32 %v5981, %v5997
        %v6005 = vmul.f32 %v5982, %v5997
        %v6006 = vmul.f32 %v5983, %v5997
        %v6007 = vmul.f32 %v5984, %v5997
        %v6008 = vmul.f32 %v5985, %v5997
        %v6009 = vmul.f32 %v5986, %v5997
        %v6010 = vmul.f32 %v5987, %v5997
        %v6011 = vmul.f32 %v5988, %v5997
        %v6012 = vmul.f32 %v5989, %v5997
        %v6013 = vmul.f32 %v5990, %v5997
        %v6014 = vmul.f32 %v5991, %v5997
        %v6015 = vld [vmem:[%s4] sm:$0x1]
        %v6017 = vlaneseq
        %v6018 = vshrl.u32 %v6017, 7
        %v6019 = vsub.s32 0, %v6018
        %v6020 = vrot.slane %v6015, %v6019
        %v6022 = vadd.f32 %v5999, %v6020
        %v6023 = vadd.f32 %v6000, %v6020
        %v6024 = vadd.f32 %v6001, %v6020
        %v6025 = vadd.f32 %v6002, %v6020
        %v6026 = vadd.f32 %v6003, %v6020
        %v6027 = vadd.f32 %v6004, %v6020
        %v6028 = vadd.f32 %v6005, %v6020
        %v6029 = vadd.f32 %v6006, %v6020
        %v6030 = vadd.f32 %v6007, %v6020
        %v6031 = vadd.f32 %v6008, %v6020
        %v6032 = vadd.f32 %v6009, %v6020
        %v6033 = vadd.f32 %v6010, %v6020
        %v6034 = vadd.f32 %v6011, %v6020
        %v6035 = vadd.f32 %v6012, %v6020
        %v6036 = vadd.f32 %v6013, %v6020
        %v6037 = vadd.f32 %v6014, %v6020
        %v6038 = vmul.f32 %v6022, %v6022
        %v6039 = vmul.f32 %v6023, %v6023
        %v6040 = vmul.f32 %v6024, %v6024
        %v6041 = vmul.f32 %v6025, %v6025
        %v6042 = vmul.f32 %v6026, %v6026
        %v6043 = vmul.f32 %v6027, %v6027
        %v6044 = vmul.f32 %v6028, %v6028
        %v6045 = vmul.f32 %v6029, %v6029
        %v6046 = vmul.f32 %v6030, %v6030
        %v6047 = vmul.f32 %v6031, %v6031
        %v6048 = vmul.f32 %v6032, %v6032
        %v6049 = vmul.f32 %v6033, %v6033
        %v6050 = vmul.f32 %v6034, %v6034
        %v6051 = vmul.f32 %v6035, %v6035
        %v6052 = vmul.f32 %v6036, %v6036
        %v6053 = vmul.f32 %v6037, %v6037
        %v6054 = vld [vmem:[%s5] sm:$0xf]
        %vm6055 = vcmask 1031168
        %v6057 = vsel %vm6055, %v6054, 0
        %vm6059 = vcmask 1045504
        %v6061 = vsel %vm6059, %v6053, 0
        %6063 = vmatprep.subr.mxu0 0.0
        %6064 = vmatpush1.msra.mxu0 %v6061
        %6065 = vmatprep.subr.mxu0 0.0
        %6066 = vmatpush1.msra.mxu0 %v6052
        %6067 = vmatprep.subr.mxu0 0.0
        %6068 = vmatpush1.msra.mxu0 %v6051
        %6069 = vmatprep.subr.mxu0 0.0
        %6070 = vmatpush1.msra.mxu0 %v6050
        %6071 = vmatprep.subr.mxu0 0.0
        %6072 = vmatpush1.msra.mxu0 %v6049
        %6073 = vmatprep.subr.mxu0 0.0
        %6074 = vmatpush1.msra.mxu0 %v6048
        %6075 = vmatprep.subr.mxu0 0.0
        %6076 = vmatpush1.msra.mxu0 %v6047
        %6077 = vmatprep.subr.mxu0 0.0
        %6078 = vmatpush1.msra.mxu0 %v6046
        %6079 = vmatprep.subr.mxu0 0.0
        %6080 = vmatpush1.msra.mxu0 %v6045
        %6081 = vmatprep.subr.mxu0 0.0
        %6082 = vmatpush1.msra.mxu0 %v6044
        %6083 = vmatprep.subr.mxu0 0.0
        %6084 = vmatpush1.msra.mxu0 %v6043
        %6085 = vmatprep.subr.mxu0 0.0
        %6086 = vmatpush1.msra.mxu0 %v6042
        %6087 = vmatprep.subr.mxu0 0.0
        %6088 = vmatpush1.msra.mxu0 %v6041
        %6089 = vmatprep.subr.mxu0 0.0
        %6090 = vmatpush1.msra.mxu0 %v6040
        %6091 = vmatprep.subr.mxu0 0.0
        %6092 = vmatpush1.msra.mxu0 %v6039
        %6093 = vmatprep.subr.mxu0 0.0
        %6094 = vmatpush1.msra.mxu0 %v6038
        %6095 = vmatprep.subr.mxu0 0.0
        %6096 = vmatpush2.msra.mxu0 0.0
        %6097 = vmatprep.subr.mxu0 0.0
        %6098 = vmatpush2.msra.mxu0 0.0
        %6099 = vmatprep.subr.mxu0 0.0
        %6100 = vmatpush2.msra.mxu0 0.0
        %6101 = vmatprep.subr.mxu0 0.0
        %6102 = vmatpush2.msra.mxu0 0.0
        %6103 = vmatprep.subr.mxu0 0.0
        %6104 = vmatpush2.msra.mxu0 0.0
        %6105 = vmatprep.subr.mxu0 0.0
        %6106 = vmatpush2.msra.mxu0 0.0
        %6107 = vmatprep.subr.mxu0 0.0
        %6108 = vmatpush2.msra.mxu0 0.0
        %6109 = vmatprep.subr.mxu0 0.0
        %6110 = vmatpush2.msra.mxu0 0.0
        %6111 = vmatprep.subr.mxu0 0.0
        %6112 = vmatpush2.msra.mxu0 0.0
        %6113 = vmatprep.subr.mxu0 0.0
        %6114 = vmatpush2.msra.mxu0 0.0
        %6115 = vmatprep.subr.mxu0 0.0
        %6116 = vmatpush2.msra.mxu0 0.0
        %6117 = vmatprep.subr.mxu0 0.0
        %6118 = vmatpush2.msra.mxu0 0.0
        %6119 = vmatprep.subr.mxu0 0.0
        %6120 = vmatpush2.msra.mxu0 0.0
        %6121 = vmatprep.subr.mxu0 0.0
        %6122 = vmatpush2.msra.mxu0 0.0
        %6123 = vmatprep.subr.mxu0 0.0
        %6124 = vmatpush2.msra.mxu0 0.0
        %6125 = vmatprep.subr.mxu0 0.0
        %6126 = vmatpush2.msra.mxu0 0.0
        %6127 = vmatprep.mubr.f32.mxu0 0.0
        %6128 = vmatmul.mubr.f32.gmra.mxu0 %v6057
        %v6129 = vpop.f32.mrf.mxu0
        %v6130 = vadd.f32 0.0, %v6129
        %v6131 = vpop.f32.mrf.mxu0
        %6132 = vdwg.mxu0
        %v6133 = vmax.f32 %v6130, 1e-06
        %v6134 = vlog2.pop %v6133
        %v6135 = vmul.f32 %v6134, 0.6931472
        %vm6136 = vcmask 322560
        %6137 = vst.msk [vmem:[%s244] sm:$0xf] %vm6136, %v6135
        %s6138 = sand.u32 %s159, 1
        %s6139 = scalar_lea.sflag [#allocation3], %s6138
        %s6140 = sand.u32 %s159, 1
        %s6141 = smul.addr %s6140, 4
        %s6142 = scalar_lea.vmem [#allocation2], %s6141
        // Predicated region
        $region45: #{create_base_forward.1} parent=43 // pred_check
          %p6143 = pneg %p169
        $region46: #{create_base_forward.1} parent=43 // pred_check_branch
          %6145 = sbr.rel (%p6143) target = $region48
        $region47: #{create_base_forward.1} parent=43 // pred_region
          %s6147 = ssub.s32 64, 64
          %6148 = vsyncadd %s6139, %s6147
          %s6149 = smul.addr %s20, 64
          %s6150 = scalar_lea.hbm %s6, %s6149
          %s6152 = sshll.u32 %s6142, 4
          %s6153 = int_to_ptr.vmem [resolvable:$true] %s6152
          %6155 = dma.vmem_to_hbm [thread:$0]  %s6153, 64, %s6150, %s6139
        $region48: #{create_base_forward.1} parent=43 // pred_fallthru
          _
      $region44: #{create_base_forward.1} parent=5 // pred_fallthru
        _
      %p6156 = scmp.le.s32.totalorder 2, %s15
      // Predicated region
      $region49: #{create_base_forward.1} parent=5 // pred_check
        %p6157 = pneg %p6156
      $region50: #{create_base_forward.1} parent=5 // pred_check_branch
        %6159 = sbr.rel (%p6157) target = $region52
      $region51: #{create_base_forward.1} parent=5 // pred_region
        %s6160 = ssub.s32 %s15, 2
        // Predicated region
        $region53: #{create_base_forward.1} parent=51 // pred_check
          %p6161 = pneg %p175
        $region54: #{create_base_forward.1} parent=51 // pred_check_branch
          %6163 = sbr.rel (%p6161) target = $region56
        $region55: #{create_base_forward.1} parent=51 // pred_region
          %s6164 = sand.u32 %s160, 1
          %s6165 = scalar_lea.sflag [#allocation3], %s6164
          %s6166 = sand.u32 %s160, 1
          %s6167 = smul.addr %s6166, 4
          %s6168 = scalar_lea.vmem [#allocation2], %s6167
          %6169 = dma.done %s6165, 64
        $region56: #{create_base_forward.1} parent=51 // pred_fallthru
          _
      $region52: #{create_base_forward.1} parent=5 // pred_fallthru
        _
    $region6: #{create_base_forward.1} parent=1 // loop_footer
      %s19 = sadd.s32 1, %s15
    $region7: #{create_base_forward.1} parent=1 // loop_footer_branch
      %14 = sbr.rel target = $region3
    $region8: #{create_base_forward.1} parent=1 // loop_exit
      _
    %6170 = vsyncpa [#allocation3], 1
    %s6171 = scalar_lea.sflag [#allocation3], 1
    %6172 = vsyncpa %s6171, 1

</llo_original>
